<compile_context>
chip_gen: v7x
topology: tpu7x:2x2x1
jax: 0.10.0
libtpu: 0.0.40
codegen_flags: <defaults>
</compile_context>

<pallas_src>
import functools
import math

import jax
import jax.numpy as jnp
from jax.experimental import pallas as pl
from jax.experimental.pallas import tpu as pltpu


def _round_up(x, m):
    return (x + m - 1) // m * m


# -----------------------------------------------------------------------------
# Fused kernel: Linear proj + PE -> num_levels TemporalBlocks -> LayerNorm
# -----------------------------------------------------------------------------
def _fused_kernel(x_ref, wp_ref, bp_ref, pe_ref, *rest,
                  block_b, T, c_pad, c_out, k, dilations, has_down, pad_rows,
                  compute_dtype):
    num_levels = len(dilations)
    n_lvl = sum(6 if hd else 4 for hd in has_down)
    lvl_refs = rest[:n_lvl]
    g_ref, beta_ref, o_ref, buf_a, buf_b = rest[n_lvl:]

    M = block_b * T
    cdt = compute_dtype

    # Zero the causal-padding rows once per grid step; they are never written afterwards.
    # (Must be per-step: with a "parallel" grid each TensorCore owns its own scratch.)
    if pad_rows > 0:
        zpad = jnp.zeros((block_b, pad_rows, c_pad), jnp.float32)
        buf_a[:, :pad_rows, :] = zpad
        buf_b[:, :pad_rows, :] = zpad

    # ---- input projection + positional encoding --------------------------------
    x = x_ref[...].reshape(M, x_ref.shape[-1]).astype(cdt)
    h = jnp.dot(x, wp_ref[...], preferred_element_type=jnp.float32) + bp_ref[...]
    h = h.reshape(block_b, T, c_pad) + pe_ref[...]        # PE broadcast over batch
    buf_a[:, pad_rows:, :] = h                            # padded copy for dilated reads
    del h, x

    def causal_conv(src_ref, wf_ref, b_ref, d):
        # Fused-K causal conv: the k dilated taps are concatenated along lanes and
        # contracted against the (k*c_pad, c_pad) fused weight in a single deep MXU dot.
        # Reads below pad_rows hit the pre-zeroed pad region = causal left padding.
        parts = []
        for j in range(k):
            r0 = pad_rows - (k - 1 - j) * d
            parts.append(src_ref[:, r0:r0 + T, :].reshape(M, c_pad))
        lhs = parts[0] if k == 1 else jnp.concatenate(parts, axis=-1)
        return jnp.dot(lhs.astype(cdt), wf_ref[...],
                       preferred_element_type=jnp.float32) + b_ref[...]

    # ---- temporal blocks --------------------------------------------------------
    ridx = 0
    out = buf_a[:, pad_rows:, :].reshape(M, c_pad)        # only used if num_levels == 0
    for lvl in range(num_levels):
        d = dilations[lvl]
        w1, b1, w2, b2 = lvl_refs[ridx:ridx + 4]
        ridx += 4
        if has_down[lvl]:
            wd, bd = lvl_refs[ridx:ridx + 2]
            ridx += 2
        else:
            wd = bd = None

        out1 = jnp.maximum(causal_conv(buf_a, w1, b1, d), 0.0)
        # TODO(synk): dropout1/dropout2 are identity (inference semantics).
        buf_b[:, pad_rows:, :] = out1.reshape(block_b, T, c_pad)
        out2 = jnp.maximum(causal_conv(buf_b, w2, b2, d), 0.0)

        # Residual input re-read from buf_a right before use (keeps live ranges short).
        resin = buf_a[:, pad_rows:, :].reshape(M, c_pad)
        if wd is not None:
            res = jnp.dot(resin.astype(cdt), wd[...],
                          preferred_element_type=jnp.float32) + bd[...]
        else:
            res = resin
        out = jnp.maximum(out2 + res, 0.0)
        if lvl + 1 < num_levels:
            buf_a[:, pad_rows:, :] = out.reshape(block_b, T, c_pad)

    # ---- final LayerNorm, lane-dense --------------------------------------------
    # Padded lanes of `out` are exactly zero (zero-padded weight cols/biases/PE, ReLU(0)=0),
    # so full-width sums divided by c_out give the true mean / E[x^2]; gamma/beta are
    # zero-padded so padded output lanes store 0 and the store is a full 128-lane vst.
    inv_n = 1.0 / c_out
    s1 = jnp.sum(out, axis=-1, keepdims=True)
    s2 = jnp.sum(out * out, axis=-1, keepdims=True)
    mean = s1 * inv_n
    var = jnp.maximum(s2 * inv_n - mean * mean, 0.0)
    y = (out - mean) * jax.lax.rsqrt(var + 1e-5) * g_ref[...] + beta_ref[...]
    o_ref[...] = y.reshape(block_b, T, c_pad).astype(o_ref.dtype)


# -----------------------------------------------------------------------------
# One-time parameter preparation: pad channels to lane width, fuse conv taps, cast
# -----------------------------------------------------------------------------
def prepare_params(params, pe, kernel_size, *, compute_dtype=jnp.bfloat16):
    """Pad / pack / cast parameters once (outside the per-call path).

    Returns (arrays, static) where `arrays` is a flat tuple of device arrays to pass to
    `per_sensor_encoder_tcn_forward` and `static` are Python-level config kwargs for it.
    """
    din, proj_dim = params["proj_w"].shape
    c_out = params["ln_gamma"].shape[-1]
    num_levels = len(params["blocks"])
    dilations = tuple(2 ** l for l in range(num_levels))
    has_down = tuple(blk["wd"] is not None for blk in params["blocks"])
    k = kernel_size
    c_pad = _round_up(max(proj_dim, c_out), 128)          # lane-dense channel width
    pmax = (k - 1) * (max(dilations) if dilations else 0)
    pad_rows = _round_up(pmax, 8) if pmax > 0 else 0      # sublane-aligned activation offset
    T = pe.shape[0]

    def padto(a, shape):
        return jnp.pad(a, [(0, s - d) for d, s in zip(a.shape, shape)])

    def pack_conv(w):      # (k, cin, cout) -> (k*c_pad, c_pad), tap-major rows, compute dtype
        return padto(w, (k, c_pad, c_pad)).reshape(k * c_pad, c_pad).astype(compute_dtype)

    arrays = [padto(params["proj_w"], (din, c_pad)).astype(compute_dtype),
              padto(params["proj_b"], (1, c_pad)),
              padto(pe, (T, c_pad))]
    for blk in params["blocks"]:
        arrays += [pack_conv(blk["w1"]), padto(blk["b1"], (1, c_pad)),
                   pack_conv(blk["w2"]), padto(blk["b2"], (1, c_pad))]
        if blk["wd"] is not None:
            arrays += [padto(blk["wd"], (c_pad, c_pad)).astype(compute_dtype),
                       padto(blk["bd"], (1, c_pad))]
    arrays += [padto(params["ln_gamma"], (1, c_pad)),
               padto(params["ln_beta"], (1, c_pad))]

    static = dict(kernel_size=k, dilations=dilations, has_down=has_down,
                  c_pad=c_pad, c_out=c_out, pad_rows=pad_rows,
                  compute_dtype=compute_dtype)
    return tuple(arrays), static


# -----------------------------------------------------------------------------
# Wrapper: blocks the batch and launches the fused kernel
# -----------------------------------------------------------------------------
def per_sensor_encoder_tcn_forward(arrays, x, *, kernel_size, dilations, has_down,
                                   c_pad, c_out, pad_rows, compute_dtype, block_b=None):
    B, T, din = x.shape
    num_levels = len(dilations)
    k = kernel_size

    # Batch blocking: target >= ~512 rows per MXU dot, never exceed the batch.
    if block_b is None:
        block_b = max(1, min(B, (512 + T - 1) // T))
    block_b = max(1, min(block_b, B))
    b_padded = _round_up(B, block_b)
    xk = x if b_padded == B else jnp.pad(x, ((0, b_padded - B), (0, 0), (0, 0)))
    grid = (b_padded // block_b,)

    def const_spec(shape):
        nd = len(shape)
        return pl.BlockSpec(shape, lambda i, _nd=nd: (0,) * _nd)

    in_specs = [pl.BlockSpec((block_b, T, din), lambda i: (i, 0, 0))]
    in_specs += [const_spec(tuple(a.shape)) for a in arrays]

    kern = functools.partial(
        _fused_kernel, block_b=block_b, T=T, c_pad=c_pad, c_out=c_out, k=k,
        dilations=dilations, has_down=has_down, pad_rows=pad_rows,
        compute_dtype=compute_dtype)

    # Explicit VMEM budget (default scoped limits are 16/32 MiB on v5e / v6e+).
    const_bytes = sum(int(a.size) * a.dtype.itemsize for a in arrays)
    scratch_bytes = 2 * block_b * (pad_rows + T) * c_pad * 4
    io_bytes = block_b * T * (din + c_pad) * 4
    need = scratch_bytes + 2 * (const_bytes + io_bytes)
    vmem_limit = int(min(48 * 2 ** 20, max(32 * 2 ** 20, 2 * need)))

    # Advisory cost estimate so XLA schedules surrounding ops around the fused kernel.
    M = block_b * T
    flops_step = 2 * M * din * c_pad
    for lvl in range(num_levels):
        flops_step += 2 * (2 * M * k * c_pad * c_pad)
        if has_down[lvl]:
            flops_step += 2 * M * c_pad * c_pad
    cost = pl.CostEstimate(
        flops=int(flops_step * grid[0]),
        transcendentals=int(M * grid[0]),
        bytes_accessed=int(xk.size * 4 + b_padded * T * c_pad * 4 + const_bytes))

    out = pl.pallas_call(
        kern,
        out_shape=jax.ShapeDtypeStruct((b_padded, T, c_pad), jnp.float32),
        grid=grid,
        in_specs=in_specs,
        out_specs=pl.BlockSpec((block_b, T, c_pad), lambda i: (i, 0, 0)),
        scratch_shapes=[
            pltpu.VMEM((block_b, pad_rows + T, c_pad), jnp.float32),
            pltpu.VMEM((block_b, pad_rows + T, c_pad), jnp.float32),
        ],
        compiler_params=pltpu.CompilerParams(
            dimension_semantics=("parallel",),
            vmem_limit_bytes=vmem_limit),
        cost_estimate=cost,
    )(xk, *arrays)
    return out[:B, :, :c_out]


# -----------------------------------------------------------------------------
# Parameter construction (deterministic) and positional encoding table
# -----------------------------------------------------------------------------
def positional_encoding_table(T, d_model):
    position = jnp.arange(T, dtype=jnp.float32)[:, None]
    div_term = jnp.exp(jnp.arange(0, d_model, 2, dtype=jnp.float32)
                       * (-math.log(10000.0) / d_model))
    pe = jnp.zeros((T, d_model), jnp.float32)
    pe = pe.at[:, 0::2].set(jnp.sin(position * div_term))
    pe = pe.at[:, 1::2].set(jnp.cos(position * div_term))
    return pe


def init_params(key, input_dim, proj_dim, tcn_out_dim, num_levels, kernel_size):
    keys = jax.random.split(key, 4 + 6 * num_levels)
    params = {}
    params["proj_w"] = 0.1 * jax.random.normal(keys[0], (input_dim, proj_dim), jnp.float32)
    params["proj_b"] = 0.1 * jax.random.normal(keys[1], (1, proj_dim), jnp.float32)
    blocks = []
    cin = proj_dim
    kidx = 2
    for _ in range(num_levels):
        cout = tcn_out_dim
        blk = {
            "w1": 0.1 * jax.random.normal(keys[kidx + 0], (kernel_size, cin, cout), jnp.float32),
            "b1": 0.1 * jax.random.normal(keys[kidx + 1], (1, cout), jnp.float32),
            "w2": 0.1 * jax.random.normal(keys[kidx + 2], (kernel_size, cout, cout), jnp.float32),
            "b2": 0.1 * jax.random.normal(keys[kidx + 3], (1, cout), jnp.float32),
        }
        if cin != cout:
            blk["wd"] = 0.1 * jax.random.normal(keys[kidx + 4], (cin, cout), jnp.float32)
            blk["bd"] = 0.1 * jax.random.normal(keys[kidx + 5], (1, cout), jnp.float32)
        else:
            blk["wd"] = None
            blk["bd"] = None
        kidx += 6
        blocks.append(blk)
        cin = cout
    params["blocks"] = blocks
    params["ln_gamma"] = jnp.ones((1, tcn_out_dim), jnp.float32)
    params["ln_beta"] = jnp.zeros((1, tcn_out_dim), jnp.float32)
    return params


# -----------------------------------------------------------------------------
# Pure-JAX reference for sanity checking
# -----------------------------------------------------------------------------
def _ref_forward(params, x, pe, kernel_size):
    h = jnp.einsum("btd,dp->btp", x, params["proj_w"],
                   precision=jax.lax.Precision.HIGHEST) + params["proj_b"] + pe
    for lvl, blk in enumerate(params["blocks"]):
        d = 2 ** lvl
        p = (kernel_size - 1) * d
        cout = blk["w1"].shape[2]
        T = h.shape[1]

        def causal_conv(z, w, b):
            zp = jnp.pad(z, ((0, 0), (p, 0), (0, 0)))
            acc = jnp.zeros((z.shape[0], T, cout), jnp.float32) + b
            for j in range(kernel_size):
                acc = acc + jnp.einsum("btc,co->bto", zp[:, j * d:j * d + T, :], w[j],
                                       precision=jax.lax.Precision.HIGHEST)
            return acc

        out1 = jnp.maximum(causal_conv(h, blk["w1"], blk["b1"]), 0.0)
        out2 = jnp.maximum(causal_conv(out1, blk["w2"], blk["b2"]), 0.0)
        if blk["wd"] is not None:
            res = jnp.einsum("btc,co->bto", h, blk["wd"],
                             precision=jax.lax.Precision.HIGHEST) + blk["bd"]
        else:
            res = h
        h = jnp.maximum(out2 + res, 0.0)
    mean = jnp.mean(h, axis=-1, keepdims=True)
    var = jnp.mean((h - mean) ** 2, axis=-1, keepdims=True)
    return (h - mean) * jax.lax.rsqrt(var + 1e-5) * params["ln_gamma"] + params["ln_beta"]


if __name__ == "__main__":
    # Small, module-consistent shapes.
    B, T = 16, 8
    input_dim, proj_dim, tcn_out_dim = 4, 16, 32
    num_levels, kernel_size = 2, 3

    key = jax.random.PRNGKey(0)
    key_x, key_p = jax.random.split(key)
    x = jax.random.normal(key_x, (B, T, input_dim), jnp.float32)

    params = init_params(key_p, input_dim, proj_dim, tcn_out_dim, num_levels, kernel_size)
    pe = positional_encoding_table(T, proj_dim)
    ref = _ref_forward(params, x, pe, kernel_size)

    # f32 MXU path (tight agreement with the HIGHEST-precision reference); block_b=8 -> grid of 2
    # also exercises the multi-step "parallel" grid path.
    args32, st32 = prepare_params(params, pe, kernel_size, compute_dtype=jnp.float32)
    fwd32 = jax.jit(functools.partial(per_sensor_encoder_tcn_forward, block_b=8, **st32))
    out32 = jax.block_until_ready(fwd32(args32, x))
    assert out32.shape == (B, T, tcn_out_dim)
    assert bool(jnp.all(jnp.isfinite(out32)))
    assert bool(jnp.allclose(out32, ref, atol=1e-2, rtol=1e-2))

    # bf16 MXU path (default; the production configuration on v5e/v6e/v7x). f32 accumulation,
    # f32 elementwise; tolerance widened accordingly.
    args16, st16 = prepare_params(params, pe, kernel_size)   # compute_dtype=bfloat16
    fwd16 = jax.jit(functools.partial(per_sensor_encoder_tcn_forward, **st16))
    out16 = jax.block_until_ready(fwd16(args16, x))
    assert out16.shape == (B, T, tcn_out_dim)
    assert bool(jnp.all(jnp.isfinite(out16)))
    assert bool(jnp.allclose(out16, ref, atol=1e-1, rtol=1e-1))

    print("KERNEL_OK")
</pallas_src>

<mosaic_0001>
module attributes {stable_mosaic.version = 11 : i64} {
  func.func @_fused_kernel(%arg0: i32, %arg1: memref<8x8x4xf32, #tpu.memory_space<vmem>>, %arg2: memref<4x128xf32, #tpu.memory_space<vmem>>, %arg3: memref<1x128xf32, #tpu.memory_space<vmem>>, %arg4: memref<8x128xf32, #tpu.memory_space<vmem>>, %arg5: memref<384x128xf32, #tpu.memory_space<vmem>>, %arg6: memref<1x128xf32, #tpu.memory_space<vmem>>, %arg7: memref<384x128xf32, #tpu.memory_space<vmem>>, %arg8: memref<1x128xf32, #tpu.memory_space<vmem>>, %arg9: memref<128x128xf32, #tpu.memory_space<vmem>>, %arg10: memref<1x128xf32, #tpu.memory_space<vmem>>, %arg11: memref<384x128xf32, #tpu.memory_space<vmem>>, %arg12: memref<1x128xf32, #tpu.memory_space<vmem>>, %arg13: memref<384x128xf32, #tpu.memory_space<vmem>>, %arg14: memref<1x128xf32, #tpu.memory_space<vmem>>, %arg15: memref<1x128xf32, #tpu.memory_space<vmem>>, %arg16: memref<1x128xf32, #tpu.memory_space<vmem>>, %arg17: memref<8x8x128xf32, #tpu.memory_space<vmem>>, %arg18: memref<8x16x128xf32, #tpu.memory_space<vmem>>, %arg19: memref<8x16x128xf32, #tpu.memory_space<vmem>>) attributes {dimension_semantics = [#tpu.dimension_semantics<parallel>], iteration_bounds = array<i64: 2>, scalar_prefetch = 0 : i64, scratch_operands = 2 : i64, tpu.core_type = #tpu.core_type<tc>, window_params = [{transform_indices = @transform_0, window_bounds = array<i64: 8, 8, 4>}, {pipeline_mode = #tpu.pipeline_mode<synchronous>, transform_indices = @transform_1, window_bounds = array<i64: 4, 128>}, {pipeline_mode = #tpu.pipeline_mode<synchronous>, transform_indices = @transform_2, window_bounds = array<i64: 1, 128>}, {pipeline_mode = #tpu.pipeline_mode<synchronous>, transform_indices = @transform_3, window_bounds = array<i64: 8, 128>}, {pipeline_mode = #tpu.pipeline_mode<synchronous>, transform_indices = @transform_4, window_bounds = array<i64: 384, 128>}, {pipeline_mode = #tpu.pipeline_mode<synchronous>, transform_indices = @transform_5, window_bounds = array<i64: 1, 128>}, {pipeline_mode = #tpu.pipeline_mode<synchronous>, transform_indices = @transform_6, window_bounds = array<i64: 384, 128>}, {pipeline_mode = #tpu.pipeline_mode<synchronous>, transform_indices = @transform_7, window_bounds = array<i64: 1, 128>}, {pipeline_mode = #tpu.pipeline_mode<synchronous>, transform_indices = @transform_8, window_bounds = array<i64: 128, 128>}, {pipeline_mode = #tpu.pipeline_mode<synchronous>, transform_indices = @transform_9, window_bounds = array<i64: 1, 128>}, {pipeline_mode = #tpu.pipeline_mode<synchronous>, transform_indices = @transform_10, window_bounds = array<i64: 384, 128>}, {pipeline_mode = #tpu.pipeline_mode<synchronous>, transform_indices = @transform_11, window_bounds = array<i64: 1, 128>}, {pipeline_mode = #tpu.pipeline_mode<synchronous>, transform_indices = @transform_12, window_bounds = array<i64: 384, 128>}, {pipeline_mode = #tpu.pipeline_mode<synchronous>, transform_indices = @transform_13, window_bounds = array<i64: 1, 128>}, {pipeline_mode = #tpu.pipeline_mode<synchronous>, transform_indices = @transform_14, window_bounds = array<i64: 1, 128>}, {pipeline_mode = #tpu.pipeline_mode<synchronous>, transform_indices = @transform_15, window_bounds = array<i64: 1, 128>}, {transform_indices = @transform_16, window_bounds = array<i64: 8, 8, 128>}]} {
    %cst = arith.constant 0.000000e+00 : f32
    %0 = vector.broadcast %cst : f32 to vector<8x8x128xf32>
    %c0 = arith.constant 0 : index
    %c0_0 = arith.constant 0 : index
    %c0_1 = arith.constant 0 : index
    %1 = vector.load %arg18[%c0, %c0_0, %c0_1] : memref<8x16x128xf32, #tpu.memory_space<vmem>>, vector<8x8x128xf32>
    tpu.vector_store %arg18[%c0, %c0_0, %c0_1], %0 {strides = array<i32>} : memref<8x16x128xf32, #tpu.memory_space<vmem>>, vector<8x8x128xf32>,
    %c0_2 = arith.constant 0 : index
    %c0_3 = arith.constant 0 : index
    %c0_4 = arith.constant 0 : index
    %2 = vector.load %arg19[%c0_2, %c0_3, %c0_4] : memref<8x16x128xf32, #tpu.memory_space<vmem>>, vector<8x8x128xf32>
    tpu.vector_store %arg19[%c0_2, %c0_3, %c0_4], %0 {strides = array<i32>} : memref<8x16x128xf32, #tpu.memory_space<vmem>>, vector<8x8x128xf32>,
    %c0_5 = arith.constant 0 : index
    %c0_6 = arith.constant 0 : index
    %c0_7 = arith.constant 0 : index
    %3 = vector.load %arg1[%c0_5, %c0_6, %c0_7] : memref<8x8x4xf32, #tpu.memory_space<vmem>>, vector<8x8x4xf32>
    %4 = vector.shape_cast %3 : vector<8x8x4xf32> to vector<64x4xf32>
    %c0_8 = arith.constant 0 : index
    %c0_9 = arith.constant 0 : index
    %5 = vector.load %arg2[%c0_8, %c0_9] : memref<4x128xf32, #tpu.memory_space<vmem>>, vector<4x128xf32>
    %cst_10 = arith.constant dense<0.000000e+00> : vector<64x128xf32>
    %6 = tpu.matmul %4, %5, %cst_10 {dimension_numbers = #tpu.dot_dimension_numbers<[1], [0], [0], [1], [0, 0, 1, 1], [], []>} : vector<64x4xf32>, vector<4x128xf32>, vector<64x128xf32> -> vector<64x128xf32>
    %c0_11 = arith.constant 0 : index
    %c0_12 = arith.constant 0 : index
    %7 = vector.load %arg3[%c0_11, %c0_12] : memref<1x128xf32, #tpu.memory_space<vmem>>, vector<1x128xf32>
    %8 = vector.broadcast %7 : vector<1x128xf32> to vector<64x128xf32>
    %9 = arith.addf %6, %8 : vector<64x128xf32>
    %10 = vector.shape_cast %9 : vector<64x128xf32> to vector<8x8x128xf32>
    %c0_13 = arith.constant 0 : index
    %c0_14 = arith.constant 0 : index
    %11 = vector.load %arg4[%c0_13, %c0_14] : memref<8x128xf32, #tpu.memory_space<vmem>>, vector<8x128xf32>
    %12 = vector.shape_cast %11 : vector<8x128xf32> to vector<1x8x128xf32>
    %13 = vector.broadcast %12 : vector<1x8x128xf32> to vector<8x8x128xf32>
    %14 = arith.addf %10, %13 : vector<8x8x128xf32>
    %c0_15 = arith.constant 0 : index
    %c8 = arith.constant 8 : index
    %c0_16 = arith.constant 0 : index
    %15 = vector.load %arg18[%c0_15, %c8, %c0_16] : memref<8x16x128xf32, #tpu.memory_space<vmem>>, vector<8x8x128xf32>
    tpu.vector_store %arg18[%c0_15, %c8, %c0_16], %14 {strides = array<i32>} : memref<8x16x128xf32, #tpu.memory_space<vmem>>, vector<8x8x128xf32>,
    %c0_17 = arith.constant 0 : index
    %c6 = arith.constant 6 : index
    %c0_18 = arith.constant 0 : index
    %16 = vector.load %arg18[%c0_17, %c6, %c0_18] : memref<8x16x128xf32, #tpu.memory_space<vmem>>, vector<8x8x128xf32>
    %17 = vector.shape_cast %16 : vector<8x8x128xf32> to vector<64x128xf32>
    %c0_19 = arith.constant 0 : index
    %c7 = arith.constant 7 : index
    %c0_20 = arith.constant 0 : index
    %18 = vector.load %arg18[%c0_19, %c7, %c0_20] : memref<8x16x128xf32, #tpu.memory_space<vmem>>, vector<8x8x128xf32>
    %19 = vector.shape_cast %18 : vector<8x8x128xf32> to vector<64x128xf32>
    %c0_21 = arith.constant 0 : index
    %c8_22 = arith.constant 8 : index
    %c0_23 = arith.constant 0 : index
    %20 = vector.load %arg18[%c0_21, %c8_22, %c0_23] : memref<8x16x128xf32, #tpu.memory_space<vmem>>, vector<8x8x128xf32>
    %21 = vector.shape_cast %20 : vector<8x8x128xf32> to vector<64x128xf32>
    %22 = tpu.concatenate %17, %19, %21 in 1 : vector<64x128xf32>, vector<64x128xf32>, vector<64x128xf32> -> vector<64x384xf32>
    %c0_24 = arith.constant 0 : index
    %c0_25 = arith.constant 0 : index
    %23 = vector.load %arg5[%c0_24, %c0_25] : memref<384x128xf32, #tpu.memory_space<vmem>>, vector<384x128xf32>
    %cst_26 = arith.constant dense<0.000000e+00> : vector<64x128xf32>
    %24 = tpu.matmul %22, %23, %cst_26 {dimension_numbers = #tpu.dot_dimension_numbers<[1], [0], [0], [1], [0, 0, 1, 1], [], []>} : vector<64x384xf32>, vector<384x128xf32>, vector<64x128xf32> -> vector<64x128xf32>
    %c0_27 = arith.constant 0 : index
    %c0_28 = arith.constant 0 : index
    %25 = vector.load %arg6[%c0_27, %c0_28] : memref<1x128xf32, #tpu.memory_space<vmem>>, vector<1x128xf32>
    %26 = vector.broadcast %25 : vector<1x128xf32> to vector<64x128xf32>
    %27 = arith.addf %24, %26 : vector<64x128xf32>
    %cst_29 = arith.constant 0.000000e+00 : f32
    %28 = vector.broadcast %cst_29 : f32 to vector<64x128xf32>
    %29 = arith.maximumf %27, %28 : vector<64x128xf32>
    %30 = vector.shape_cast %29 : vector<64x128xf32> to vector<8x8x128xf32>
    %c0_30 = arith.constant 0 : index
    %c8_31 = arith.constant 8 : index
    %c0_32 = arith.constant 0 : index
    %31 = vector.load %arg19[%c0_30, %c8_31, %c0_32] : memref<8x16x128xf32, #tpu.memory_space<vmem>>, vector<8x8x128xf32>
    tpu.vector_store %arg19[%c0_30, %c8_31, %c0_32], %30 {strides = array<i32>} : memref<8x16x128xf32, #tpu.memory_space<vmem>>, vector<8x8x128xf32>,
    %c0_33 = arith.constant 0 : index
    %c6_34 = arith.constant 6 : index
    %c0_35 = arith.constant 0 : index
    %32 = vector.load %arg19[%c0_33, %c6_34, %c0_35] : memref<8x16x128xf32, #tpu.memory_space<vmem>>, vector<8x8x128xf32>
    %33 = vector.shape_cast %32 : vector<8x8x128xf32> to vector<64x128xf32>
    %c0_36 = arith.constant 0 : index
    %c7_37 = arith.constant 7 : index
    %c0_38 = arith.constant 0 : index
    %34 = vector.load %arg19[%c0_36, %c7_37, %c0_38] : memref<8x16x128xf32, #tpu.memory_space<vmem>>, vector<8x8x128xf32>
    %35 = vector.shape_cast %34 : vector<8x8x128xf32> to vector<64x128xf32>
    %c0_39 = arith.constant 0 : index
    %c8_40 = arith.constant 8 : index
    %c0_41 = arith.constant 0 : index
    %36 = vector.load %arg19[%c0_39, %c8_40, %c0_41] : memref<8x16x128xf32, #tpu.memory_space<vmem>>, vector<8x8x128xf32>
    %37 = vector.shape_cast %36 : vector<8x8x128xf32> to vector<64x128xf32>
    %38 = tpu.concatenate %33, %35, %37 in 1 : vector<64x128xf32>, vector<64x128xf32>, vector<64x128xf32> -> vector<64x384xf32>
    %c0_42 = arith.constant 0 : index
    %c0_43 = arith.constant 0 : index
    %39 = vector.load %arg7[%c0_42, %c0_43] : memref<384x128xf32, #tpu.memory_space<vmem>>, vector<384x128xf32>
    %cst_44 = arith.constant dense<0.000000e+00> : vector<64x128xf32>
    %40 = tpu.matmul %38, %39, %cst_44 {dimension_numbers = #tpu.dot_dimension_numbers<[1], [0], [0], [1], [0, 0, 1, 1], [], []>} : vector<64x384xf32>, vector<384x128xf32>, vector<64x128xf32> -> vector<64x128xf32>
    %c0_45 = arith.constant 0 : index
    %c0_46 = arith.constant 0 : index
    %41 = vector.load %arg8[%c0_45, %c0_46] : memref<1x128xf32, #tpu.memory_space<vmem>>, vector<1x128xf32>
    %42 = vector.broadcast %41 : vector<1x128xf32> to vector<64x128xf32>
    %43 = arith.addf %40, %42 : vector<64x128xf32>
    %cst_47 = arith.constant 0.000000e+00 : f32
    %44 = vector.broadcast %cst_47 : f32 to vector<64x128xf32>
    %45 = arith.maximumf %43, %44 : vector<64x128xf32>
    %c0_48 = arith.constant 0 : index
    %c8_49 = arith.constant 8 : index
    %c0_50 = arith.constant 0 : index
    %46 = vector.load %arg18[%c0_48, %c8_49, %c0_50] : memref<8x16x128xf32, #tpu.memory_space<vmem>>, vector<8x8x128xf32>
    %47 = vector.shape_cast %46 : vector<8x8x128xf32> to vector<64x128xf32>
    %c0_51 = arith.constant 0 : index
    %c0_52 = arith.constant 0 : index
    %48 = vector.load %arg9[%c0_51, %c0_52] : memref<128x128xf32, #tpu.memory_space<vmem>>, vector<128x128xf32>
    %cst_53 = arith.constant dense<0.000000e+00> : vector<64x128xf32>
    %49 = tpu.matmul %47, %48, %cst_53 {dimension_numbers = #tpu.dot_dimension_numbers<[1], [0], [0], [1], [0, 0, 1, 1], [], []>} : vector<64x128xf32>, vector<128x128xf32>, vector<64x128xf32> -> vector<64x128xf32>
    %c0_54 = arith.constant 0 : index
    %c0_55 = arith.constant 0 : index
    %50 = vector.load %arg10[%c0_54, %c0_55] : memref<1x128xf32, #tpu.memory_space<vmem>>, vector<1x128xf32>
    %51 = vector.broadcast %50 : vector<1x128xf32> to vector<64x128xf32>
    %52 = arith.addf %49, %51 : vector<64x128xf32>
    %53 = arith.addf %45, %52 : vector<64x128xf32>
    %cst_56 = arith.constant 0.000000e+00 : f32
    %54 = vector.broadcast %cst_56 : f32 to vector<64x128xf32>
    %55 = arith.maximumf %53, %54 : vector<64x128xf32>
    %56 = vector.shape_cast %55 : vector<64x128xf32> to vector<8x8x128xf32>
    %c0_57 = arith.constant 0 : index
    %c8_58 = arith.constant 8 : index
    %c0_59 = arith.constant 0 : index
    %57 = vector.load %arg18[%c0_57, %c8_58, %c0_59] : memref<8x16x128xf32, #tpu.memory_space<vmem>>, vector<8x8x128xf32>
    tpu.vector_store %arg18[%c0_57, %c8_58, %c0_59], %56 {strides = array<i32>} : memref<8x16x128xf32, #tpu.memory_space<vmem>>, vector<8x8x128xf32>,
    %c0_60 = arith.constant 0 : index
    %c4 = arith.constant 4 : index
    %c0_61 = arith.constant 0 : index
    %58 = vector.load %arg18[%c0_60, %c4, %c0_61] : memref<8x16x128xf32, #tpu.memory_space<vmem>>, vector<8x8x128xf32>
    %59 = vector.shape_cast %58 : vector<8x8x128xf32> to vector<64x128xf32>
    %c0_62 = arith.constant 0 : index
    %c6_63 = arith.constant 6 : index
    %c0_64 = arith.constant 0 : index
    %60 = vector.load %arg18[%c0_62, %c6_63, %c0_64] : memref<8x16x128xf32, #tpu.memory_space<vmem>>, vector<8x8x128xf32>
    %61 = vector.shape_cast %60 : vector<8x8x128xf32> to vector<64x128xf32>
    %c0_65 = arith.constant 0 : index
    %c8_66 = arith.constant 8 : index
    %c0_67 = arith.constant 0 : index
    %62 = vector.load %arg18[%c0_65, %c8_66, %c0_67] : memref<8x16x128xf32, #tpu.memory_space<vmem>>, vector<8x8x128xf32>
    %63 = vector.shape_cast %62 : vector<8x8x128xf32> to vector<64x128xf32>
    %64 = tpu.concatenate %59, %61, %63 in 1 : vector<64x128xf32>, vector<64x128xf32>, vector<64x128xf32> -> vector<64x384xf32>
    %c0_68 = arith.constant 0 : index
    %c0_69 = arith.constant 0 : index
    %65 = vector.load %arg11[%c0_68, %c0_69] : memref<384x128xf32, #tpu.memory_space<vmem>>, vector<384x128xf32>
    %cst_70 = arith.constant dense<0.000000e+00> : vector<64x128xf32>
    %66 = tpu.matmul %64, %65, %cst_70 {dimension_numbers = #tpu.dot_dimension_numbers<[1], [0], [0], [1], [0, 0, 1, 1], [], []>} : vector<64x384xf32>, vector<384x128xf32>, vector<64x128xf32> -> vector<64x128xf32>
    %c0_71 = arith.constant 0 : index
    %c0_72 = arith.constant 0 : index
    %67 = vector.load %arg12[%c0_71, %c0_72] : memref<1x128xf32, #tpu.memory_space<vmem>>, vector<1x128xf32>
    %68 = vector.broadcast %67 : vector<1x128xf32> to vector<64x128xf32>
    %69 = arith.addf %66, %68 : vector<64x128xf32>
    %cst_73 = arith.constant 0.000000e+00 : f32
    %70 = vector.broadcast %cst_73 : f32 to vector<64x128xf32>
    %71 = arith.maximumf %69, %70 : vector<64x128xf32>
    %72 = vector.shape_cast %71 : vector<64x128xf32> to vector<8x8x128xf32>
    %c0_74 = arith.constant 0 : index
    %c8_75 = arith.constant 8 : index
    %c0_76 = arith.constant 0 : index
    %73 = vector.load %arg19[%c0_74, %c8_75, %c0_76] : memref<8x16x128xf32, #tpu.memory_space<vmem>>, vector<8x8x128xf32>
    tpu.vector_store %arg19[%c0_74, %c8_75, %c0_76], %72 {strides = array<i32>} : memref<8x16x128xf32, #tpu.memory_space<vmem>>, vector<8x8x128xf32>,
    %c0_77 = arith.constant 0 : index
    %c4_78 = arith.constant 4 : index
    %c0_79 = arith.constant 0 : index
    %74 = vector.load %arg19[%c0_77, %c4_78, %c0_79] : memref<8x16x128xf32, #tpu.memory_space<vmem>>, vector<8x8x128xf32>
    %75 = vector.shape_cast %74 : vector<8x8x128xf32> to vector<64x128xf32>
    %c0_80 = arith.constant 0 : index
    %c6_81 = arith.constant 6 : index
    %c0_82 = arith.constant 0 : index
    %76 = vector.load %arg19[%c0_80, %c6_81, %c0_82] : memref<8x16x128xf32, #tpu.memory_space<vmem>>, vector<8x8x128xf32>
    %77 = vector.shape_cast %76 : vector<8x8x128xf32> to vector<64x128xf32>
    %c0_83 = arith.constant 0 : index
    %c8_84 = arith.constant 8 : index
    %c0_85 = arith.constant 0 : index
    %78 = vector.load %arg19[%c0_83, %c8_84, %c0_85] : memref<8x16x128xf32, #tpu.memory_space<vmem>>, vector<8x8x128xf32>
    %79 = vector.shape_cast %78 : vector<8x8x128xf32> to vector<64x128xf32>
    %80 = tpu.concatenate %75, %77, %79 in 1 : vector<64x128xf32>, vector<64x128xf32>, vector<64x128xf32> -> vector<64x384xf32>
    %c0_86 = arith.constant 0 : index
    %c0_87 = arith.constant 0 : index
    %81 = vector.load %arg13[%c0_86, %c0_87] : memref<384x128xf32, #tpu.memory_space<vmem>>, vector<384x128xf32>
    %cst_88 = arith.constant dense<0.000000e+00> : vector<64x128xf32>
    %82 = tpu.matmul %80, %81, %cst_88 {dimension_numbers = #tpu.dot_dimension_numbers<[1], [0], [0], [1], [0, 0, 1, 1], [], []>} : vector<64x384xf32>, vector<384x128xf32>, vector<64x128xf32> -> vector<64x128xf32>
    %c0_89 = arith.constant 0 : index
    %c0_90 = arith.constant 0 : index
    %83 = vector.load %arg14[%c0_89, %c0_90] : memref<1x128xf32, #tpu.memory_space<vmem>>, vector<1x128xf32>
    %84 = vector.broadcast %83 : vector<1x128xf32> to vector<64x128xf32>
    %85 = arith.addf %82, %84 : vector<64x128xf32>
    %cst_91 = arith.constant 0.000000e+00 : f32
    %86 = vector.broadcast %cst_91 : f32 to vector<64x128xf32>
    %87 = arith.maximumf %85, %86 : vector<64x128xf32>
    %c0_92 = arith.constant 0 : index
    %c8_93 = arith.constant 8 : index
    %c0_94 = arith.constant 0 : index
    %88 = vector.load %arg18[%c0_92, %c8_93, %c0_94] : memref<8x16x128xf32, #tpu.memory_space<vmem>>, vector<8x8x128xf32>
    %89 = vector.shape_cast %88 : vector<8x8x128xf32> to vector<64x128xf32>
    %90 = arith.addf %87, %89 : vector<64x128xf32>
    %cst_95 = arith.constant 0.000000e+00 : f32
    %91 = vector.broadcast %cst_95 : f32 to vector<64x128xf32>
    %92 = arith.maximumf %90, %91 : vector<64x128xf32>
    %cst_96 = arith.constant dense<0.000000e+00> : vector<64xf32>
    %93 = vector.multi_reduction <add>, %92, %cst_96 [1] : vector<64x128xf32> to vector<64xf32>
    %94 = vector.shape_cast %93 : vector<64xf32> to vector<64x1xf32>
    %95 = arith.mulf %92, %92 : vector<64x128xf32>
    %cst_97 = arith.constant dense<0.000000e+00> : vector<64xf32>
    %96 = vector.multi_reduction <add>, %95, %cst_97 [1] : vector<64x128xf32> to vector<64xf32>
    %97 = vector.shape_cast %96 : vector<64xf32> to vector<64x1xf32>
    %cst_98 = arith.constant 3.125000e-02 : f32
    %98 = vector.broadcast %cst_98 : f32 to vector<64x1xf32>
    %99 = arith.mulf %94, %98 : vector<64x1xf32>
    %cst_99 = arith.constant 3.125000e-02 : f32
    %100 = vector.broadcast %cst_99 : f32 to vector<64x1xf32>
    %101 = arith.mulf %97, %100 : vector<64x1xf32>
    %102 = arith.mulf %99, %99 : vector<64x1xf32>
    %103 = arith.subf %101, %102 : vector<64x1xf32>
    %cst_100 = arith.constant 0.000000e+00 : f32
    %104 = vector.broadcast %cst_100 : f32 to vector<64x1xf32>
    %105 = arith.maximumf %103, %104 : vector<64x1xf32>
    %106 = vector.broadcast %99 : vector<64x1xf32> to vector<64x128xf32>
    %107 = arith.subf %92, %106 : vector<64x128xf32>
    %cst_101 = arith.constant 9.99999974E-6 : f32
    %108 = vector.broadcast %cst_101 : f32 to vector<64x1xf32>
    %109 = arith.addf %105, %108 : vector<64x1xf32>
    %110 = math.rsqrt %109 : vector<64x1xf32>
    %111 = vector.broadcast %110 : vector<64x1xf32> to vector<64x128xf32>
    %112 = arith.mulf %107, %111 : vector<64x128xf32>
    %c0_102 = arith.constant 0 : index
    %c0_103 = arith.constant 0 : index
    %113 = vector.load %arg15[%c0_102, %c0_103] : memref<1x128xf32, #tpu.memory_space<vmem>>, vector<1x128xf32>
    %114 = vector.broadcast %113 : vector<1x128xf32> to vector<64x128xf32>
    %115 = arith.mulf %112, %114 : vector<64x128xf32>
    %c0_104 = arith.constant 0 : index
    %c0_105 = arith.constant 0 : index
    %116 = vector.load %arg16[%c0_104, %c0_105] : memref<1x128xf32, #tpu.memory_space<vmem>>, vector<1x128xf32>
    %117 = vector.broadcast %116 : vector<1x128xf32> to vector<64x128xf32>
    %118 = arith.addf %115, %117 : vector<64x128xf32>
    %119 = vector.shape_cast %118 : vector<64x128xf32> to vector<8x8x128xf32>
    %c0_106 = arith.constant 0 : index
    %c0_107 = arith.constant 0 : index
    %c0_108 = arith.constant 0 : index
    %120 = vector.load %arg17[%c0_106, %c0_107, %c0_108] : memref<8x8x128xf32, #tpu.memory_space<vmem>>, vector<8x8x128xf32>
    tpu.vector_store %arg17[%c0_106, %c0_107, %c0_108], %119 {strides = array<i32>} : memref<8x8x128xf32, #tpu.memory_space<vmem>>, vector<8x8x128xf32>,
    return
  }
  func.func @transform_0(%arg0: i32) -> (i32, i32, i32) {
    %c0_i32 = arith.constant 0 : i32
    %c0_i32_0 = arith.constant 0 : i32
    %c0_i32_1 = arith.constant 0 : i32
    return %arg0, %c0_i32, %c0_i32_0 : i32, i32, i32
  }
  func.func @transform_1(%arg0: i32) -> (i32, i32) {
    %c0_i32 = arith.constant 0 : i32
    %c0_i32_0 = arith.constant 0 : i32
    %c0_i32_1 = arith.constant 0 : i32
    return %c0_i32, %c0_i32_0 : i32, i32
  }
  func.func @transform_2(%arg0: i32) -> (i32, i32) {
    %c0_i32 = arith.constant 0 : i32
    %c0_i32_0 = arith.constant 0 : i32
    %c0_i32_1 = arith.constant 0 : i32
    return %c0_i32, %c0_i32_0 : i32, i32
  }
  func.func @transform_3(%arg0: i32) -> (i32, i32) {
    %c0_i32 = arith.constant 0 : i32
    %c0_i32_0 = arith.constant 0 : i32
    %c0_i32_1 = arith.constant 0 : i32
    return %c0_i32, %c0_i32_0 : i32, i32
  }
  func.func @transform_4(%arg0: i32) -> (i32, i32) {
    %c0_i32 = arith.constant 0 : i32
    %c0_i32_0 = arith.constant 0 : i32
    %c0_i32_1 = arith.constant 0 : i32
    return %c0_i32, %c0_i32_0 : i32, i32
  }
  func.func @transform_5(%arg0: i32) -> (i32, i32) {
    %c0_i32 = arith.constant 0 : i32
    %c0_i32_0 = arith.constant 0 : i32
    %c0_i32_1 = arith.constant 0 : i32
    return %c0_i32, %c0_i32_0 : i32, i32
  }
  func.func @transform_6(%arg0: i32) -> (i32, i32) {
    %c0_i32 = arith.constant 0 : i32
    %c0_i32_0 = arith.constant 0 : i32
    %c0_i32_1 = arith.constant 0 : i32
    return %c0_i32, %c0_i32_0 : i32, i32
  }
  func.func @transform_7(%arg0: i32) -> (i32, i32) {
    %c0_i32 = arith.constant 0 : i32
    %c0_i32_0 = arith.constant 0 : i32
    %c0_i32_1 = arith.constant 0 : i32
    return %c0_i32, %c0_i32_0 : i32, i32
  }
  func.func @transform_8(%arg0: i32) -> (i32, i32) {
    %c0_i32 = arith.constant 0 : i32
    %c0_i32_0 = arith.constant 0 : i32
    %c0_i32_1 = arith.constant 0 : i32
    return %c0_i32, %c0_i32_0 : i32, i32
  }
  func.func @transform_9(%arg0: i32) -> (i32, i32) {
    %c0_i32 = arith.constant 0 : i32
    %c0_i32_0 = arith.constant 0 : i32
    %c0_i32_1 = arith.constant 0 : i32
    return %c0_i32, %c0_i32_0 : i32, i32
  }
  func.func @transform_10(%arg0: i32) -> (i32, i32) {
    %c0_i32 = arith.constant 0 : i32
    %c0_i32_0 = arith.constant 0 : i32
    %c0_i32_1 = arith.constant 0 : i32
    return %c0_i32, %c0_i32_0 : i32, i32
  }
  func.func @transform_11(%arg0: i32) -> (i32, i32) {
    %c0_i32 = arith.constant 0 : i32
    %c0_i32_0 = arith.constant 0 : i32
    %c0_i32_1 = arith.constant 0 : i32
    return %c0_i32, %c0_i32_0 : i32, i32
  }
  func.func @transform_12(%arg0: i32) -> (i32, i32) {
    %c0_i32 = arith.constant 0 : i32
    %c0_i32_0 = arith.constant 0 : i32
    %c0_i32_1 = arith.constant 0 : i32
    return %c0_i32, %c0_i32_0 : i32, i32
  }
  func.func @transform_13(%arg0: i32) -> (i32, i32) {
    %c0_i32 = arith.constant 0 : i32
    %c0_i32_0 = arith.constant 0 : i32
    %c0_i32_1 = arith.constant 0 : i32
    return %c0_i32, %c0_i32_0 : i32, i32
  }
  func.func @transform_14(%arg0: i32) -> (i32, i32) {
    %c0_i32 = arith.constant 0 : i32
    %c0_i32_0 = arith.constant 0 : i32
    %c0_i32_1 = arith.constant 0 : i32
    return %c0_i32, %c0_i32_0 : i32, i32
  }
  func.func @transform_15(%arg0: i32) -> (i32, i32) {
    %c0_i32 = arith.constant 0 : i32
    %c0_i32_0 = arith.constant 0 : i32
    %c0_i32_1 = arith.constant 0 : i32
    return %c0_i32, %c0_i32_0 : i32, i32
  }
  func.func @transform_16(%arg0: i32) -> (i32, i32, i32) {
    %c0_i32 = arith.constant 0 : i32
    %c0_i32_0 = arith.constant 0 : i32
    %c0_i32_1 = arith.constant 0 : i32
    return %arg0, %c0_i32, %c0_i32_0 : i32, i32, i32
  }
}

</mosaic_0001>

<llo_original>
// kernel: per_sensor_encoder_tcn_forward.1
$region0: #{per_sensor_encoder_tcn_forward.1}
  #allocation0 [shape = 'u32[]', space=smem, size = 0x4, offset = 0x4, fixed_abs, tag = 'smem constant byte address 0x4 - core index']
  #allocation1 [shape = 'u32[144,128]{1,0:T(1,128)}', space=vmem, size = 0x12000, scoped, tag = 'internal scratch']
  #allocation2 [shape = 'f32[8,16,128]{2,1,0:T(8,128)}', space=vmem, size = 0x10000, scoped, tag = 'scratch operand']
  #allocation3 [shape = 'f32[8,16,128]{2,1,0:T(8,128)}', space=vmem, size = 0x10000, scoped, tag = 'scratch operand']
  %s0 = inlined_call_operand.vmem [shape: f32[16,8,4], index: 0, kind: input, shape index: {}]
  %s1 = inlined_call_operand.vmem [shape: f32[4,128], index: 1, kind: input, shape index: {}]
  %s2 = inlined_call_operand.vmem [shape: f32[1,128], index: 2, kind: input, shape index: {}]
  %s3 = inlined_call_operand.vmem [shape: f32[8,128], index: 3, kind: input, shape index: {}]
  %s4 = inlined_call_operand.hbm [shape: f32[384,128], index: 4, kind: input, shape index: {}]
  %s5 = inlined_call_operand.vmem [shape: f32[1,128], index: 5, kind: input, shape index: {}]
  %s6 = inlined_call_operand.hbm [shape: f32[384,128], index: 6, kind: input, shape index: {}]
  %s7 = inlined_call_operand.vmem [shape: f32[1,128], index: 7, kind: input, shape index: {}]
  %s8 = inlined_call_operand.vmem [shape: f32[128,128], index: 8, kind: input, shape index: {}]
  %s9 = inlined_call_operand.vmem [shape: f32[1,128], index: 9, kind: input, shape index: {}]
  %s10 = inlined_call_operand.hbm [shape: f32[384,128], index: 10, kind: input, shape index: {}]
  %s11 = inlined_call_operand.vmem [shape: f32[1,128], index: 11, kind: input, shape index: {}]
  %s12 = inlined_call_operand.hbm [shape: f32[384,128], index: 12, kind: input, shape index: {}]
  %s13 = inlined_call_operand.vmem [shape: f32[1,128], index: 13, kind: input, shape index: {}]
  %s14 = inlined_call_operand.vmem [shape: f32[1,128], index: 14, kind: input, shape index: {}]
  %s15 = inlined_call_operand.vmem [shape: f32[1,128], index: 15, kind: input, shape index: {}]
  %s16 = inlined_call_operand.hbm [shape: f32[16,8,128], index: 16, kind: output, shape index: {}]
  %s17 = sld [smem:[#allocation0]]
  $region113: #{per_sensor_encoder_tcn_forward.1} parent=0
    _
  %s19 = ssub.s32 1, %s17
  %s20 = scalar_select 0, %s19, %s17
  $region1: #{per_sensor_encoder_tcn_forward.1} parent=0
    #allocation4 [shape = 'u8[196608]{0}', space=vmem, size = 0x30000, scoped, tag = 'input window, operand 4, single buffered']
    #allocation5 [shape = 's32[2]{0}', space=sflag, size = 0x8, scoped, tag = 'scoped memory for per_sensor_encoder_tcn_forward.1']
    #allocation6 [shape = 's32[2]{0}', space=sflag, size = 0x8, scoped, tag = 'scoped memory for per_sensor_encoder_tcn_forward.1']
    #allocation7 [shape = 'u8[196608]{0}', space=vmem, size = 0x30000, scoped, tag = 'input window, operand 6, single buffered']
    #allocation8 [shape = 's32[1]{0}', space=sflag, size = 0x4, scoped, tag = 'scoped memory for per_sensor_encoder_tcn_forward.1']
    #allocation9 [shape = 'u8[196608]{0}', space=vmem, size = 0x30000, scoped, tag = 'input window, operand 10, single buffered']
    #allocation10 [shape = 'u8[196608]{0}', space=vmem, size = 0x30000, scoped, tag = 'input window, operand 12, single buffered']
    #allocation11 [shape = 's32[1]{0}', space=sflag, size = 0x4, scoped, tag = 'scoped memory for per_sensor_encoder_tcn_forward.1']
    #allocation12 [shape = 'u8[65536]{0}', space=vmem, size = 0x10000, scoped, tag = 'output window, operand 0']
    %21 = vsyncpa [#allocation5], 0
    %22 = vsyncpa [#allocation8], 0
    %23 = vsyncpa [#allocation11], 0
    %24 = vsyncpa [#allocation6], 0
    %s25 = scalar_lea.sflag [#allocation6], 1
    %26 = vsyncpa %s25, 0
    loop: start=0, step=1, limit=4
    $region2: #{per_sensor_encoder_tcn_forward.1} parent=1 // loop_pre_header
      _
    $region3: #{per_sensor_encoder_tcn_forward.1} parent=1 // loop_header
      %s28 = sphi 0, %s32
      %p29 = scmp.ge.s32.totalorder %s28, 4
      %s38 = sphi 0, %s40
      %s41 = sphi 0, %s38
      %s42 = sphi 0, %s41
      %s58 = sphi 0, %s42
      %s62 = sphi 0, %s62
      %s64 = sphi 0, %s62
      %s65 = sphi 0, %s64
      %s79 = sphi 0, %s65
      %s83 = sphi 0, %s83
      %s85 = sphi 0, %s83
      %s86 = sphi 0, %s85
      %s100 = sphi 0, %s86
      %s104 = sphi 0, %s104
      %s106 = sphi 0, %s104
      %s107 = sphi 0, %s106
      %s121 = sphi 0, %s107
      %s125 = sphi 0, %s125
      %s127 = sphi 0, %s125
      %s128 = sphi 0, %s127
      %s142 = sphi 0, %s128
      %s146 = sphi 0, %s146
      %s148 = sphi 0, %s146
      %s149 = sphi 0, %s148
      %s163 = sphi 0, %s149
      %s167 = sphi 0, %s167
      %s169 = sphi 0, %s167
      %s170 = sphi 0, %s169
      %s184 = sphi 0, %s170
      %s188 = sphi 0, %s188
      %s190 = sphi 0, %s188
      %s191 = sphi 0, %s190
      %s205 = sphi 0, %s191
      %s209 = sphi 0, %s209
      %s211 = sphi 0, %s209
      %s212 = sphi 0, %s211
      %s226 = sphi 0, %s212
      %s230 = sphi 0, %s230
      %s232 = sphi 0, %s230
      %s233 = sphi 0, %s232
      %s247 = sphi 0, %s233
      %s251 = sphi 0, %s251
      %s253 = sphi 0, %s251
      %s254 = sphi 0, %s253
      %s268 = sphi 0, %s254
      %s272 = sphi 0, %s272
      %s274 = sphi 0, %s272
      %s275 = sphi 0, %s274
      %s289 = sphi 0, %s275
      %s293 = sphi 0, %s293
      %s295 = sphi 0, %s293
      %s296 = sphi 0, %s295
      %s310 = sphi 0, %s296
      %s314 = sphi 0, %s314
      %s316 = sphi 0, %s314
      %s317 = sphi 0, %s316
      %s331 = sphi 0, %s317
      %s335 = sphi 0, %s335
      %s337 = sphi 0, %s335
      %s338 = sphi 0, %s337
      %s352 = sphi 0, %s338
      %s356 = sphi 0, %s356
      %s358 = sphi 0, %s356
      %s359 = sphi 0, %s358
      %s373 = sphi 0, %s359
      %s379 = sphi 0, %s381
      %s382 = sphi 0, %s379
      %s383 = sphi 0, %s382
      %s399 = sphi 0, %s383
    $region4: #{per_sensor_encoder_tcn_forward.1} parent=1 // loop_header_branch
      %31 = sbr.rel (%p29) target = $region8
    $region5: #{per_sensor_encoder_tcn_forward.1} parent=1 // loop_body
      %s33 = ssub.s32 %s28, 1
      %s34 = ssub.s32 %s28, 2
      %s35 = sadd.s32 %s28, 1
      %s36 = ssub.s32 %s28, %s35
      %p37 = scmp.eq.s32.totalorder %s36, 0
      %s39 = sadd.s32 %s38, 1
      %s40 = scalar_select %p37, %s38, %s39
      %p43 = pneg %p37
      %p44 = scmp.eq.s32.totalorder %s28, 1
      %p45 = por %p43, %p44
      %p46 = scmp.ne.s32.totalorder %s38, %s41
      %p47 = scmp.eq.s32.totalorder %s28, 0
      %p48 = por %p46, %p47
      %p49 = scmp.ne.s32.totalorder %s38, %s41
      %p50 = scmp.eq.s32.totalorder %s33, 1
      %p51 = por %p49, %p50
      %p52 = scmp.ne.s32.totalorder %s41, %s42
      %p53 = scmp.eq.s32.totalorder %s33, 0
      %p54 = por %p52, %p53
      %p55 = scmp.ne.s32.totalorder %s41, %s42
      %p56 = scmp.eq.s32.totalorder %s34, 1
      %p57 = por %p55, %p56
      %p59 = scmp.ne.s32.totalorder %s42, %s58
      %p60 = scmp.eq.s32.totalorder %s34, 0
      %p61 = por %p59, %p60
      %s63 = sadd.s32 %s62, 1
      %p66 = scmp.eq.s32.totalorder %s28, 1
      %p67 = scmp.ne.s32.totalorder %s62, %s64
      %p68 = scmp.eq.s32.totalorder %s28, 0
      %p69 = por %p67, %p68
      %p70 = scmp.ne.s32.totalorder %s62, %s64
      %p71 = scmp.eq.s32.totalorder %s33, 1
      %p72 = por %p70, %p71
      %p73 = scmp.ne.s32.totalorder %s64, %s65
      %p74 = scmp.eq.s32.totalorder %s33, 0
      %p75 = por %p73, %p74
      %p76 = scmp.ne.s32.totalorder %s64, %s65
      %p77 = scmp.eq.s32.totalorder %s34, 1
      %p78 = por %p76, %p77
      %p80 = scmp.ne.s32.totalorder %s65, %s79
      %p81 = scmp.eq.s32.totalorder %s34, 0
      %p82 = por %p80, %p81
      %s84 = sadd.s32 %s83, 1
      %p87 = scmp.eq.s32.totalorder %s28, 1
      %p88 = scmp.ne.s32.totalorder %s83, %s85
      %p89 = scmp.eq.s32.totalorder %s28, 0
      %p90 = por %p88, %p89
      %p91 = scmp.ne.s32.totalorder %s83, %s85
      %p92 = scmp.eq.s32.totalorder %s33, 1
      %p93 = por %p91, %p92
      %p94 = scmp.ne.s32.totalorder %s85, %s86
      %p95 = scmp.eq.s32.totalorder %s33, 0
      %p96 = por %p94, %p95
      %p97 = scmp.ne.s32.totalorder %s85, %s86
      %p98 = scmp.eq.s32.totalorder %s34, 1
      %p99 = por %p97, %p98
      %p101 = scmp.ne.s32.totalorder %s86, %s100
      %p102 = scmp.eq.s32.totalorder %s34, 0
      %p103 = por %p101, %p102
      %s105 = sadd.s32 %s104, 1
      %p108 = scmp.eq.s32.totalorder %s28, 1
      %p109 = scmp.ne.s32.totalorder %s104, %s106
      %p110 = scmp.eq.s32.totalorder %s28, 0
      %p111 = por %p109, %p110
      %p112 = scmp.ne.s32.totalorder %s104, %s106
      %p113 = scmp.eq.s32.totalorder %s33, 1
      %p114 = por %p112, %p113
      %p115 = scmp.ne.s32.totalorder %s106, %s107
      %p116 = scmp.eq.s32.totalorder %s33, 0
      %p117 = por %p115, %p116
      %p118 = scmp.ne.s32.totalorder %s106, %s107
      %p119 = scmp.eq.s32.totalorder %s34, 1
      %p120 = por %p118, %p119
      %p122 = scmp.ne.s32.totalorder %s107, %s121
      %p123 = scmp.eq.s32.totalorder %s34, 0
      %p124 = por %p122, %p123
      %s126 = sadd.s32 %s125, 1
      %p129 = scmp.eq.s32.totalorder %s28, 1
      %p130 = scmp.ne.s32.totalorder %s125, %s127
      %p131 = scmp.eq.s32.totalorder %s28, 0
      %p132 = por %p130, %p131
      %p133 = scmp.ne.s32.totalorder %s125, %s127
      %p134 = scmp.eq.s32.totalorder %s33, 1
      %p135 = por %p133, %p134
      %p136 = scmp.ne.s32.totalorder %s127, %s128
      %p137 = scmp.eq.s32.totalorder %s33, 0
      %p138 = por %p136, %p137
      %p139 = scmp.ne.s32.totalorder %s127, %s128
      %p140 = scmp.eq.s32.totalorder %s34, 1
      %p141 = por %p139, %p140
      %p143 = scmp.ne.s32.totalorder %s128, %s142
      %p144 = scmp.eq.s32.totalorder %s34, 0
      %p145 = por %p143, %p144
      %s147 = sadd.s32 %s146, 1
      %p150 = scmp.eq.s32.totalorder %s28, 1
      %p151 = scmp.ne.s32.totalorder %s146, %s148
      %p152 = scmp.eq.s32.totalorder %s28, 0
      %p153 = por %p151, %p152
      %p154 = scmp.ne.s32.totalorder %s146, %s148
      %p155 = scmp.eq.s32.totalorder %s33, 1
      %p156 = por %p154, %p155
      %p157 = scmp.ne.s32.totalorder %s148, %s149
      %p158 = scmp.eq.s32.totalorder %s33, 0
      %p159 = por %p157, %p158
      %p160 = scmp.ne.s32.totalorder %s148, %s149
      %p161 = scmp.eq.s32.totalorder %s34, 1
      %p162 = por %p160, %p161
      %p164 = scmp.ne.s32.totalorder %s149, %s163
      %p165 = scmp.eq.s32.totalorder %s34, 0
      %p166 = por %p164, %p165
      %s168 = sadd.s32 %s167, 1
      %p171 = scmp.eq.s32.totalorder %s28, 1
      %p172 = scmp.ne.s32.totalorder %s167, %s169
      %p173 = scmp.eq.s32.totalorder %s28, 0
      %p174 = por %p172, %p173
      %p175 = scmp.ne.s32.totalorder %s167, %s169
      %p176 = scmp.eq.s32.totalorder %s33, 1
      %p177 = por %p175, %p176
      %p178 = scmp.ne.s32.totalorder %s169, %s170
      %p179 = scmp.eq.s32.totalorder %s33, 0
      %p180 = por %p178, %p179
      %p181 = scmp.ne.s32.totalorder %s169, %s170
      %p182 = scmp.eq.s32.totalorder %s34, 1
      %p183 = por %p181, %p182
      %p185 = scmp.ne.s32.totalorder %s170, %s184
      %p186 = scmp.eq.s32.totalorder %s34, 0
      %p187 = por %p185, %p186
      %s189 = sadd.s32 %s188, 1
      %p192 = scmp.eq.s32.totalorder %s28, 1
      %p193 = scmp.ne.s32.totalorder %s188, %s190
      %p194 = scmp.eq.s32.totalorder %s28, 0
      %p195 = por %p193, %p194
      %p196 = scmp.ne.s32.totalorder %s188, %s190
      %p197 = scmp.eq.s32.totalorder %s33, 1
      %p198 = por %p196, %p197
      %p199 = scmp.ne.s32.totalorder %s190, %s191
      %p200 = scmp.eq.s32.totalorder %s33, 0
      %p201 = por %p199, %p200
      %p202 = scmp.ne.s32.totalorder %s190, %s191
      %p203 = scmp.eq.s32.totalorder %s34, 1
      %p204 = por %p202, %p203
      %p206 = scmp.ne.s32.totalorder %s191, %s205
      %p207 = scmp.eq.s32.totalorder %s34, 0
      %p208 = por %p206, %p207
      %s210 = sadd.s32 %s209, 1
      %p213 = scmp.eq.s32.totalorder %s28, 1
      %p214 = scmp.ne.s32.totalorder %s209, %s211
      %p215 = scmp.eq.s32.totalorder %s28, 0
      %p216 = por %p214, %p215
      %p217 = scmp.ne.s32.totalorder %s209, %s211
      %p218 = scmp.eq.s32.totalorder %s33, 1
      %p219 = por %p217, %p218
      %p220 = scmp.ne.s32.totalorder %s211, %s212
      %p221 = scmp.eq.s32.totalorder %s33, 0
      %p222 = por %p220, %p221
      %p223 = scmp.ne.s32.totalorder %s211, %s212
      %p224 = scmp.eq.s32.totalorder %s34, 1
      %p225 = por %p223, %p224
      %p227 = scmp.ne.s32.totalorder %s212, %s226
      %p228 = scmp.eq.s32.totalorder %s34, 0
      %p229 = por %p227, %p228
      %s231 = sadd.s32 %s230, 1
      %p234 = scmp.eq.s32.totalorder %s28, 1
      %p235 = scmp.ne.s32.totalorder %s230, %s232
      %p236 = scmp.eq.s32.totalorder %s28, 0
      %p237 = por %p235, %p236
      %p238 = scmp.ne.s32.totalorder %s230, %s232
      %p239 = scmp.eq.s32.totalorder %s33, 1
      %p240 = por %p238, %p239
      %p241 = scmp.ne.s32.totalorder %s232, %s233
      %p242 = scmp.eq.s32.totalorder %s33, 0
      %p243 = por %p241, %p242
      %p244 = scmp.ne.s32.totalorder %s232, %s233
      %p245 = scmp.eq.s32.totalorder %s34, 1
      %p246 = por %p244, %p245
      %p248 = scmp.ne.s32.totalorder %s233, %s247
      %p249 = scmp.eq.s32.totalorder %s34, 0
      %p250 = por %p248, %p249
      %s252 = sadd.s32 %s251, 1
      %p255 = scmp.eq.s32.totalorder %s28, 1
      %p256 = scmp.ne.s32.totalorder %s251, %s253
      %p257 = scmp.eq.s32.totalorder %s28, 0
      %p258 = por %p256, %p257
      %p259 = scmp.ne.s32.totalorder %s251, %s253
      %p260 = scmp.eq.s32.totalorder %s33, 1
      %p261 = por %p259, %p260
      %p262 = scmp.ne.s32.totalorder %s253, %s254
      %p263 = scmp.eq.s32.totalorder %s33, 0
      %p264 = por %p262, %p263
      %p265 = scmp.ne.s32.totalorder %s253, %s254
      %p266 = scmp.eq.s32.totalorder %s34, 1
      %p267 = por %p265, %p266
      %p269 = scmp.ne.s32.totalorder %s254, %s268
      %p270 = scmp.eq.s32.totalorder %s34, 0
      %p271 = por %p269, %p270
      %s273 = sadd.s32 %s272, 1
      %p276 = scmp.eq.s32.totalorder %s28, 1
      %p277 = scmp.ne.s32.totalorder %s272, %s274
      %p278 = scmp.eq.s32.totalorder %s28, 0
      %p279 = por %p277, %p278
      %p280 = scmp.ne.s32.totalorder %s272, %s274
      %p281 = scmp.eq.s32.totalorder %s33, 1
      %p282 = por %p280, %p281
      %p283 = scmp.ne.s32.totalorder %s274, %s275
      %p284 = scmp.eq.s32.totalorder %s33, 0
      %p285 = por %p283, %p284
      %p286 = scmp.ne.s32.totalorder %s274, %s275
      %p287 = scmp.eq.s32.totalorder %s34, 1
      %p288 = por %p286, %p287
      %p290 = scmp.ne.s32.totalorder %s275, %s289
      %p291 = scmp.eq.s32.totalorder %s34, 0
      %p292 = por %p290, %p291
      %s294 = sadd.s32 %s293, 1
      %p297 = scmp.eq.s32.totalorder %s28, 1
      %p298 = scmp.ne.s32.totalorder %s293, %s295
      %p299 = scmp.eq.s32.totalorder %s28, 0
      %p300 = por %p298, %p299
      %p301 = scmp.ne.s32.totalorder %s293, %s295
      %p302 = scmp.eq.s32.totalorder %s33, 1
      %p303 = por %p301, %p302
      %p304 = scmp.ne.s32.totalorder %s295, %s296
      %p305 = scmp.eq.s32.totalorder %s33, 0
      %p306 = por %p304, %p305
      %p307 = scmp.ne.s32.totalorder %s295, %s296
      %p308 = scmp.eq.s32.totalorder %s34, 1
      %p309 = por %p307, %p308
      %p311 = scmp.ne.s32.totalorder %s296, %s310
      %p312 = scmp.eq.s32.totalorder %s34, 0
      %p313 = por %p311, %p312
      %s315 = sadd.s32 %s314, 1
      %p318 = scmp.eq.s32.totalorder %s28, 1
      %p319 = scmp.ne.s32.totalorder %s314, %s316
      %p320 = scmp.eq.s32.totalorder %s28, 0
      %p321 = por %p319, %p320
      %p322 = scmp.ne.s32.totalorder %s314, %s316
      %p323 = scmp.eq.s32.totalorder %s33, 1
      %p324 = por %p322, %p323
      %p325 = scmp.ne.s32.totalorder %s316, %s317
      %p326 = scmp.eq.s32.totalorder %s33, 0
      %p327 = por %p325, %p326
      %p328 = scmp.ne.s32.totalorder %s316, %s317
      %p329 = scmp.eq.s32.totalorder %s34, 1
      %p330 = por %p328, %p329
      %p332 = scmp.ne.s32.totalorder %s317, %s331
      %p333 = scmp.eq.s32.totalorder %s34, 0
      %p334 = por %p332, %p333
      %s336 = sadd.s32 %s335, 1
      %p339 = scmp.eq.s32.totalorder %s28, 1
      %p340 = scmp.ne.s32.totalorder %s335, %s337
      %p341 = scmp.eq.s32.totalorder %s28, 0
      %p342 = por %p340, %p341
      %p343 = scmp.ne.s32.totalorder %s335, %s337
      %p344 = scmp.eq.s32.totalorder %s33, 1
      %p345 = por %p343, %p344
      %p346 = scmp.ne.s32.totalorder %s337, %s338
      %p347 = scmp.eq.s32.totalorder %s33, 0
      %p348 = por %p346, %p347
      %p349 = scmp.ne.s32.totalorder %s337, %s338
      %p350 = scmp.eq.s32.totalorder %s34, 1
      %p351 = por %p349, %p350
      %p353 = scmp.ne.s32.totalorder %s338, %s352
      %p354 = scmp.eq.s32.totalorder %s34, 0
      %p355 = por %p353, %p354
      %s357 = sadd.s32 %s356, 1
      %p360 = scmp.eq.s32.totalorder %s28, 1
      %p361 = scmp.ne.s32.totalorder %s356, %s358
      %p362 = scmp.eq.s32.totalorder %s28, 0
      %p363 = por %p361, %p362
      %p364 = scmp.ne.s32.totalorder %s356, %s358
      %p365 = scmp.eq.s32.totalorder %s33, 1
      %p366 = por %p364, %p365
      %p367 = scmp.ne.s32.totalorder %s358, %s359
      %p368 = scmp.eq.s32.totalorder %s33, 0
      %p369 = por %p367, %p368
      %p370 = scmp.ne.s32.totalorder %s358, %s359
      %p371 = scmp.eq.s32.totalorder %s34, 1
      %p372 = por %p370, %p371
      %p374 = scmp.ne.s32.totalorder %s359, %s373
      %p375 = scmp.eq.s32.totalorder %s34, 0
      %p376 = por %p374, %p375
      %s377 = ssub.s32 %s28, %s35
      %p378 = scmp.eq.s32.totalorder %s377, 0
      %s380 = sadd.s32 %s379, 1
      %s381 = scalar_select %p378, %s379, %s380
      %p384 = pneg %p378
      %p385 = scmp.eq.s32.totalorder %s28, 1
      %p386 = por %p384, %p385
      %p387 = scmp.ne.s32.totalorder %s379, %s382
      %p388 = scmp.eq.s32.totalorder %s28, 0
      %p389 = por %p387, %p388
      %p390 = scmp.ne.s32.totalorder %s379, %s382
      %p391 = scmp.eq.s32.totalorder %s33, 1
      %p392 = por %p390, %p391
      %p393 = scmp.ne.s32.totalorder %s382, %s383
      %p394 = scmp.eq.s32.totalorder %s33, 0
      %p395 = por %p393, %p394
      %p396 = scmp.ne.s32.totalorder %s382, %s383
      %p397 = scmp.eq.s32.totalorder %s34, 1
      %p398 = por %p396, %p397
      %p400 = scmp.ne.s32.totalorder %s383, %s399
      %p401 = scmp.eq.s32.totalorder %s34, 0
      %p402 = por %p400, %p401
      %p403 = scmp.le.s32.totalorder 1, %s28
      %p404 = scmp.lt.s32.totalorder %s28, 3
      %p405 = pnand %p403, %p404
      %p406 = pneg %p405
      // Predicated region
      $region9: #{per_sensor_encoder_tcn_forward.1} parent=5 // pred_check
        _
      $region10: #{per_sensor_encoder_tcn_forward.1} parent=5 // pred_check_branch
        %408 = sbr.rel (%p405) target = $region12
      $region11: #{per_sensor_encoder_tcn_forward.1} parent=5 // pred_region
        %s409 = ssub.s32 %s28, 1
        // Predicated region
        $region13: #{per_sensor_encoder_tcn_forward.1} parent=11 // pred_check
          %p410 = pneg %p75
        $region14: #{per_sensor_encoder_tcn_forward.1} parent=11 // pred_check_branch
          %412 = sbr.rel (%p410) target = $region16
        $region15: #{per_sensor_encoder_tcn_forward.1} parent=11 // pred_region
          _
        $region16: #{per_sensor_encoder_tcn_forward.1} parent=11 // pred_fallthru
          _
        // Predicated region
        $region17: #{per_sensor_encoder_tcn_forward.1} parent=11 // pred_check
          %p413 = pneg %p96
        $region18: #{per_sensor_encoder_tcn_forward.1} parent=11 // pred_check_branch
          %415 = sbr.rel (%p413) target = $region20
        $region19: #{per_sensor_encoder_tcn_forward.1} parent=11 // pred_region
          _
        $region20: #{per_sensor_encoder_tcn_forward.1} parent=11 // pred_fallthru
          _
        // Predicated region
        $region21: #{per_sensor_encoder_tcn_forward.1} parent=11 // pred_check
          %p416 = pneg %p117
        $region22: #{per_sensor_encoder_tcn_forward.1} parent=11 // pred_check_branch
          %418 = sbr.rel (%p416) target = $region24
        $region23: #{per_sensor_encoder_tcn_forward.1} parent=11 // pred_region
          _
        $region24: #{per_sensor_encoder_tcn_forward.1} parent=11 // pred_fallthru
          _
        // Predicated region
        $region25: #{per_sensor_encoder_tcn_forward.1} parent=11 // pred_check
          %p419 = pneg %p138
        $region26: #{per_sensor_encoder_tcn_forward.1} parent=11 // pred_check_branch
          %421 = sbr.rel (%p419) target = $region28
        $region27: #{per_sensor_encoder_tcn_forward.1} parent=11 // pred_region
          %s423 = ssub.s32 6144, 6144
          %424 = vsyncadd [#allocation5], %s423
          %s425 = sshll.u32 [#allocation4], 4
          %s426 = int_to_ptr.vmem [resolvable:$true] %s425
          %431 = dma.hbm_to_vmem [thread:$0]  %s4, 6144, %s426, [#allocation5], 128, 128, 8
        $region28: #{per_sensor_encoder_tcn_forward.1} parent=11 // pred_fallthru
          _
        // Predicated region
        $region29: #{per_sensor_encoder_tcn_forward.1} parent=11 // pred_check
          %p432 = pneg %p159
        $region30: #{per_sensor_encoder_tcn_forward.1} parent=11 // pred_check_branch
          %434 = sbr.rel (%p432) target = $region32
        $region31: #{per_sensor_encoder_tcn_forward.1} parent=11 // pred_region
          _
        $region32: #{per_sensor_encoder_tcn_forward.1} parent=11 // pred_fallthru
          _
        // Predicated region
        $region33: #{per_sensor_encoder_tcn_forward.1} parent=11 // pred_check
          %p435 = pneg %p180
        $region34: #{per_sensor_encoder_tcn_forward.1} parent=11 // pred_check_branch
          %437 = sbr.rel (%p435) target = $region36
        $region35: #{per_sensor_encoder_tcn_forward.1} parent=11 // pred_region
          %s439 = ssub.s32 6144, 6144
          %440 = vsyncadd [#allocation8], %s439
          %s441 = sshll.u32 [#allocation7], 4
          %s442 = int_to_ptr.vmem [resolvable:$true] %s441
          %447 = dma.hbm_to_vmem [thread:$0]  %s6, 6144, %s442, [#allocation8], 128, 128, 8
        $region36: #{per_sensor_encoder_tcn_forward.1} parent=11 // pred_fallthru
          _
        // Predicated region
        $region37: #{per_sensor_encoder_tcn_forward.1} parent=11 // pred_check
          %p448 = pneg %p201
        $region38: #{per_sensor_encoder_tcn_forward.1} parent=11 // pred_check_branch
          %450 = sbr.rel (%p448) target = $region40
        $region39: #{per_sensor_encoder_tcn_forward.1} parent=11 // pred_region
          _
        $region40: #{per_sensor_encoder_tcn_forward.1} parent=11 // pred_fallthru
          _
        // Predicated region
        $region41: #{per_sensor_encoder_tcn_forward.1} parent=11 // pred_check
          %p451 = pneg %p222
        $region42: #{per_sensor_encoder_tcn_forward.1} parent=11 // pred_check_branch
          %453 = sbr.rel (%p451) target = $region44
        $region43: #{per_sensor_encoder_tcn_forward.1} parent=11 // pred_region
          _
        $region44: #{per_sensor_encoder_tcn_forward.1} parent=11 // pred_fallthru
          _
        // Predicated region
        $region45: #{per_sensor_encoder_tcn_forward.1} parent=11 // pred_check
          %p454 = pneg %p243
        $region46: #{per_sensor_encoder_tcn_forward.1} parent=11 // pred_check_branch
          %456 = sbr.rel (%p454) target = $region48
        $region47: #{per_sensor_encoder_tcn_forward.1} parent=11 // pred_region
          _
        $region48: #{per_sensor_encoder_tcn_forward.1} parent=11 // pred_fallthru
          _
        // Predicated region
        $region49: #{per_sensor_encoder_tcn_forward.1} parent=11 // pred_check
          %p457 = pneg %p264
        $region50: #{per_sensor_encoder_tcn_forward.1} parent=11 // pred_check_branch
          %459 = sbr.rel (%p457) target = $region52
        $region51: #{per_sensor_encoder_tcn_forward.1} parent=11 // pred_region
          %s461 = ssub.s32 6144, 6144
          %462 = vsyncadd [#allocation8], %s461
          %s463 = sshll.u32 [#allocation9], 4
          %s464 = int_to_ptr.vmem [resolvable:$true] %s463
          %469 = dma.hbm_to_vmem [thread:$0]  %s10, 6144, %s464, [#allocation8], 128, 128, 8
        $region52: #{per_sensor_encoder_tcn_forward.1} parent=11 // pred_fallthru
          _
        // Predicated region
        $region53: #{per_sensor_encoder_tcn_forward.1} parent=11 // pred_check
          %p470 = pneg %p285
        $region54: #{per_sensor_encoder_tcn_forward.1} parent=11 // pred_check_branch
          %472 = sbr.rel (%p470) target = $region56
        $region55: #{per_sensor_encoder_tcn_forward.1} parent=11 // pred_region
          _
        $region56: #{per_sensor_encoder_tcn_forward.1} parent=11 // pred_fallthru
          _
        // Predicated region
        $region57: #{per_sensor_encoder_tcn_forward.1} parent=11 // pred_check
          %p473 = pneg %p306
        $region58: #{per_sensor_encoder_tcn_forward.1} parent=11 // pred_check_branch
          %475 = sbr.rel (%p473) target = $region60
        $region59: #{per_sensor_encoder_tcn_forward.1} parent=11 // pred_region
          %s477 = ssub.s32 6144, 6144
          %478 = vsyncadd [#allocation11], %s477
          %s479 = sshll.u32 [#allocation10], 4
          %s480 = int_to_ptr.vmem [resolvable:$true] %s479
          %485 = dma.hbm_to_vmem [thread:$0]  %s12, 6144, %s480, [#allocation11], 128, 128, 8
        $region60: #{per_sensor_encoder_tcn_forward.1} parent=11 // pred_fallthru
          _
        // Predicated region
        $region61: #{per_sensor_encoder_tcn_forward.1} parent=11 // pred_check
          %p486 = pneg %p327
        $region62: #{per_sensor_encoder_tcn_forward.1} parent=11 // pred_check_branch
          %488 = sbr.rel (%p486) target = $region64
        $region63: #{per_sensor_encoder_tcn_forward.1} parent=11 // pred_region
          _
        $region64: #{per_sensor_encoder_tcn_forward.1} parent=11 // pred_fallthru
          _
        // Predicated region
        $region65: #{per_sensor_encoder_tcn_forward.1} parent=11 // pred_check
          %p489 = pneg %p348
        $region66: #{per_sensor_encoder_tcn_forward.1} parent=11 // pred_check_branch
          %491 = sbr.rel (%p489) target = $region68
        $region67: #{per_sensor_encoder_tcn_forward.1} parent=11 // pred_region
          _
        $region68: #{per_sensor_encoder_tcn_forward.1} parent=11 // pred_fallthru
          _
        // Predicated region
        $region69: #{per_sensor_encoder_tcn_forward.1} parent=11 // pred_check
          %p492 = pneg %p369
        $region70: #{per_sensor_encoder_tcn_forward.1} parent=11 // pred_check_branch
          %494 = sbr.rel (%p492) target = $region72
        $region71: #{per_sensor_encoder_tcn_forward.1} parent=11 // pred_region
          _
        $region72: #{per_sensor_encoder_tcn_forward.1} parent=11 // pred_fallthru
          _
      $region12: #{per_sensor_encoder_tcn_forward.1} parent=5 // pred_fallthru
        _
      %p495 = scmp.lt.s32.totalorder %s28, 2
      // Predicated region
      $region73: #{per_sensor_encoder_tcn_forward.1} parent=5 // pred_check
        %p496 = pneg %p495
      $region74: #{per_sensor_encoder_tcn_forward.1} parent=5 // pred_check_branch
        %498 = sbr.rel (%p496) target = $region76
      $region75: #{per_sensor_encoder_tcn_forward.1} parent=5 // pred_region
        // Predicated region
        $region77: #{per_sensor_encoder_tcn_forward.1} parent=75 // pred_check
          %p499 = pneg %p48
        $region78: #{per_sensor_encoder_tcn_forward.1} parent=75 // pred_check_branch
          %501 = sbr.rel (%p499) target = $region80
        $region79: #{per_sensor_encoder_tcn_forward.1} parent=75 // pred_region
          %s502 = smul.u32 8, %s28
          %p503 = scmp.lt.s32.totalorder %s502, 15
          %s504 = scalar_select %p503, %s502, 15
          %s505 = smul.addr %s504, 8
          %s506 = scalar_lea.vmem %s0, %s505
          %s507 = smul.u32 8, %s28
        $region80: #{per_sensor_encoder_tcn_forward.1} parent=75 // pred_fallthru
          _
      $region76: #{per_sensor_encoder_tcn_forward.1} parent=5 // pred_fallthru
        _
      %p508 = scmp.le.s32.totalorder 1, %s28
      %p509 = scmp.lt.s32.totalorder %s28, 3
      %p510 = pnand %p508, %p509
      %p511 = pneg %p510
      // Predicated region
      $region81: #{per_sensor_encoder_tcn_forward.1} parent=5 // pred_check
        _
      $region82: #{per_sensor_encoder_tcn_forward.1} parent=5 // pred_check_branch
        %513 = sbr.rel (%p510) target = $region84
      $region83: #{per_sensor_encoder_tcn_forward.1} parent=5 // pred_region
        %s514 = ssub.s32 %s28, 1
        // Predicated region
        $region85: #{per_sensor_encoder_tcn_forward.1} parent=83 // pred_check
          %p515 = pneg %p138
        $region86: #{per_sensor_encoder_tcn_forward.1} parent=83 // pred_check_branch
          %517 = sbr.rel (%p515) target = $region88
        $region87: #{per_sensor_encoder_tcn_forward.1} parent=83 // pred_region
          %518 = dma.done [#allocation5], 6144
        $region88: #{per_sensor_encoder_tcn_forward.1} parent=83 // pred_fallthru
          _
        // Predicated region
        $region89: #{per_sensor_encoder_tcn_forward.1} parent=83 // pred_check
          %p519 = pneg %p180
        $region90: #{per_sensor_encoder_tcn_forward.1} parent=83 // pred_check_branch
          %521 = sbr.rel (%p519) target = $region92
        $region91: #{per_sensor_encoder_tcn_forward.1} parent=83 // pred_region
          %522 = dma.done [#allocation8], 6144
        $region92: #{per_sensor_encoder_tcn_forward.1} parent=83 // pred_fallthru
          _
        // Predicated region
        $region93: #{per_sensor_encoder_tcn_forward.1} parent=83 // pred_check
          %p523 = pneg %p264
        $region94: #{per_sensor_encoder_tcn_forward.1} parent=83 // pred_check_branch
          %525 = sbr.rel (%p523) target = $region96
        $region95: #{per_sensor_encoder_tcn_forward.1} parent=83 // pred_region
          %526 = dma.done [#allocation8], 6144
        $region96: #{per_sensor_encoder_tcn_forward.1} parent=83 // pred_fallthru
          _
        // Predicated region
        $region97: #{per_sensor_encoder_tcn_forward.1} parent=83 // pred_check
          %p527 = pneg %p306
        $region98: #{per_sensor_encoder_tcn_forward.1} parent=83 // pred_check_branch
          %529 = sbr.rel (%p527) target = $region100
        $region99: #{per_sensor_encoder_tcn_forward.1} parent=83 // pred_region
          %530 = dma.done [#allocation11], 6144
        $region100: #{per_sensor_encoder_tcn_forward.1} parent=83 // pred_fallthru
          _
        %s531 = smul.u32 8, %s33
        %p532 = scmp.lt.s32.totalorder %s531, 15
        %s533 = scalar_select %p532, %s531, 15
        %s534 = smul.addr %s533, 8
        %s535 = scalar_lea.vmem %s0, %s534
        %p536 = pneg %p54
        %p537 = pneg %p51
        %p538 = pneg %p75
        %p539 = pneg %p72
        %p540 = pneg %p96
        %p541 = pneg %p93
        %p542 = pneg %p117
        %p543 = pneg %p114
        %p544 = pneg %p138
        %p545 = pneg %p135
        %p546 = pneg %p159
        %p547 = pneg %p156
        %p548 = pneg %p180
        %p549 = pneg %p177
        %p550 = pneg %p201
        %p551 = pneg %p198
        %p552 = pneg %p222
        %p553 = pneg %p219
        %p554 = pneg %p243
        %p555 = pneg %p240
        %p556 = pneg %p264
        %p557 = pneg %p261
        %p558 = pneg %p285
        %p559 = pneg %p282
        %p560 = pneg %p306
        %p561 = pneg %p303
        %p562 = pneg %p327
        %p563 = pneg %p324
        %p564 = pneg %p348
        %p565 = pneg %p345
        %p566 = pneg %p369
        %p567 = pneg %p366
        %p568 = pneg %p395
        %p569 = pneg %p392
        %s570 = sand.u32 %s382, 1
        %s571 = scalar_lea.sflag [#allocation6], %s570
        %s572 = sand.u32 %s382, 1
        %s573 = smul.addr %s572, 64
        %s574 = scalar_lea.vmem [#allocation12], %s573
        %s575 = smul.u32 8, %s33
        %p576 = scmp.lt.s32.totalorder %s575, 15
        %s577 = scalar_select %p576, %s575, 15
        %s578 = smul.addr %s577, 8
        %s579 = scalar_lea.vmem %s0, %s578
        %s580 = smul.u32 8, %s33
        %s581 = smul.u32 8, %s33
        %582 = vst [vmem:[#allocation2] sm:$0xff] 0.0
        %583 = vst [vmem:[#allocation2 + $0x10] sm:$0xff] 0.0
        %584 = vst [vmem:[#allocation2 + $0x20] sm:$0xff] 0.0
        %585 = vst [vmem:[#allocation2 + $0x30] sm:$0xff] 0.0
        %586 = vst [vmem:[#allocation2 + $0x40] sm:$0xff] 0.0
        %587 = vst [vmem:[#allocation2 + $0x50] sm:$0xff] 0.0
        %588 = vst [vmem:[#allocation2 + $0x60] sm:$0xff] 0.0
        %589 = vst [vmem:[#allocation2 + $0x70] sm:$0xff] 0.0
        %590 = vst [vmem:[#allocation3] sm:$0xff] 0.0
        %591 = vst [vmem:[#allocation3 + $0x10] sm:$0xff] 0.0
        %592 = vst [vmem:[#allocation3 + $0x20] sm:$0xff] 0.0
        %593 = vst [vmem:[#allocation3 + $0x30] sm:$0xff] 0.0
        %594 = vst [vmem:[#allocation3 + $0x40] sm:$0xff] 0.0
        %595 = vst [vmem:[#allocation3 + $0x50] sm:$0xff] 0.0
        %596 = vst [vmem:[#allocation3 + $0x60] sm:$0xff] 0.0
        %597 = vst [vmem:[#allocation3 + $0x70] sm:$0xff] 0.0
        %v598 = vld [vmem:[%s579] sm:$0xff]
        %v599 = vld [vmem:[%s579 + $0x8] sm:$0xff]
        %v600 = vld [vmem:[%s579 + $0x10] sm:$0xff]
        %v601 = vld [vmem:[%s579 + $0x18] sm:$0xff]
        %v602 = vld [vmem:[%s579 + $0x20] sm:$0xff]
        %v603 = vld [vmem:[%s579 + $0x28] sm:$0xff]
        %v604 = vld [vmem:[%s579 + $0x30] sm:$0xff]
        %v605 = vld [vmem:[%s579 + $0x38] sm:$0xff]
        %v606 = vld [vmem:[%s1] sm:$0xf]
        %v607 = vld [vmem:[%s2] sm:$0x1]
        %v609 = vlaneseq
        %v610 = vshrl.u32 %v609, 7
        %v611 = vsub.s32 0, %v610
        %v612 = vrot.slane %v607, %v611
        %vm614 = vcmask 31744
        %v616 = vsel %vm614, %v598, 0
        %v619 = vsel %vm614, %v599, 0
        %v622 = vsel %vm614, %v600, 0
        %v625 = vsel %vm614, %v601, 0
        %v628 = vsel %vm614, %v602, 0
        %v631 = vsel %vm614, %v603, 0
        %v634 = vsel %vm614, %v604, 0
        %v637 = vsel %vm614, %v605, 0
        %vm639 = vcmask 1043456
        %v641 = vsel %vm639, %v606, 0
        %643 = vmatprep.subr.mxu0 0.0
        %644 = vmatpush1.msra.mxu0 %v641
        %645 = vmatprep.subr.mxu0 0.0
        %646 = vmatpush1.msra.mxu0 0.0
        %647 = vmatprep.subr.mxu0 0.0
        %648 = vmatpush1.msra.mxu0 0.0
        %649 = vmatprep.subr.mxu0 0.0
        %650 = vmatpush1.msra.mxu0 0.0
        %651 = vmatprep.subr.mxu0 0.0
        %652 = vmatpush1.msra.mxu0 0.0
        %653 = vmatprep.subr.mxu0 0.0
        %654 = vmatpush1.msra.mxu0 0.0
        %655 = vmatprep.subr.mxu0 0.0
        %656 = vmatpush1.msra.mxu0 0.0
        %657 = vmatprep.subr.mxu0 0.0
        %658 = vmatpush1.msra.mxu0 0.0
        %659 = vmatprep.subr.mxu0 0.0
        %660 = vmatpush1.msra.mxu0 0.0
        %661 = vmatprep.subr.mxu0 0.0
        %662 = vmatpush1.msra.mxu0 0.0
        %663 = vmatprep.subr.mxu0 0.0
        %664 = vmatpush1.msra.mxu0 0.0
        %665 = vmatprep.subr.mxu0 0.0
        %666 = vmatpush1.msra.mxu0 0.0
        %667 = vmatprep.subr.mxu0 0.0
        %668 = vmatpush1.msra.mxu0 0.0
        %669 = vmatprep.subr.mxu0 0.0
        %670 = vmatpush1.msra.mxu0 0.0
        %671 = vmatprep.subr.mxu0 0.0
        %672 = vmatpush1.msra.mxu0 0.0
        %673 = vmatprep.subr.mxu0 0.0
        %674 = vmatpush1.msra.mxu0 0.0
        %675 = vmatprep.subr.mxu0 0.0
        %676 = vmatpush1.msra.mxu0 0.0
        %677 = vmatprep.subr.mxu0 0.0
        %678 = vmatpush1.msra.mxu0 0.0
        %679 = vmatprep.subr.mxu0 0.0
        %680 = vmatpush1.msra.mxu0 0.0
        %681 = vmatprep.subr.mxu0 0.0
        %682 = vmatpush1.msra.mxu0 0.0
        %683 = vmatprep.subr.mxu0 0.0
        %684 = vmatpush1.msra.mxu0 0.0
        %685 = vmatprep.subr.mxu0 0.0
        %686 = vmatpush1.msra.mxu0 0.0
        %687 = vmatprep.subr.mxu0 0.0
        %688 = vmatpush1.msra.mxu0 0.0
        %689 = vmatprep.subr.mxu0 0.0
        %690 = vmatpush1.msra.mxu0 0.0
        %691 = vmatprep.subr.mxu0 0.0
        %692 = vmatpush1.msra.mxu0 0.0
        %693 = vmatprep.subr.mxu0 0.0
        %694 = vmatpush1.msra.mxu0 0.0
        %695 = vmatprep.subr.mxu0 0.0
        %696 = vmatpush1.msra.mxu0 0.0
        %697 = vmatprep.subr.mxu0 0.0
        %698 = vmatpush1.msra.mxu0 0.0
        %699 = vmatprep.subr.mxu0 0.0
        %700 = vmatpush1.msra.mxu0 0.0
        %701 = vmatprep.subr.mxu0 0.0
        %702 = vmatpush1.msra.mxu0 0.0
        %703 = vmatprep.subr.mxu0 0.0
        %704 = vmatpush1.msra.mxu0 0.0
        %705 = vmatprep.subr.mxu0 0.0
        %706 = vmatpush1.msra.mxu0 0.0
        %707 = vmatprep.mubr.f32.mxu0 0.0
        %708 = vmatmul.mubr.f32.gmra.mrb[0].mxu0 %v616
        %v709 = vpop.f32.mrb[0].mxu0
        %v710 = vadd.f32 %v612, %v709
        %v711 = vpop.f32.mrb[0].mxu0
        %712 = vmatprep.mubr.f32.mxu0 0.0
        %713 = vmatmul.mubr.f32.gmra.mrb[0].mxu0 %v619
        %v714 = vpop.f32.mrb[0].mxu0
        %v715 = vadd.f32 %v612, %v714
        %v716 = vpop.f32.mrb[0].mxu0
        %717 = vmatprep.mubr.f32.mxu0 0.0
        %718 = vmatmul.mubr.f32.gmra.mrb[0].mxu0 %v622
        %v719 = vpop.f32.mrb[0].mxu0
        %v720 = vadd.f32 %v612, %v719
        %v721 = vpop.f32.mrb[0].mxu0
        %722 = vmatprep.mubr.f32.mxu0 0.0
        %723 = vmatmul.mubr.f32.gmra.mrb[0].mxu0 %v625
        %v724 = vpop.f32.mrb[0].mxu0
        %v725 = vadd.f32 %v612, %v724
        %v726 = vpop.f32.mrb[0].mxu0
        %727 = vmatprep.mubr.f32.mxu0 0.0
        %728 = vmatmul.mubr.f32.gmra.mrb[0].mxu0 %v628
        %v729 = vpop.f32.mrb[0].mxu0
        %v730 = vadd.f32 %v612, %v729
        %v731 = vpop.f32.mrb[0].mxu0
        %732 = vmatprep.mubr.f32.mxu0 0.0
        %733 = vmatmul.mubr.f32.gmra.mrb[0].mxu0 %v631
        %v734 = vpop.f32.mrb[0].mxu0
        %v735 = vadd.f32 %v612, %v734
        %v736 = vpop.f32.mrb[0].mxu0
        %737 = vmatprep.mubr.f32.mxu0 0.0
        %738 = vmatmul.mubr.f32.gmra.mrb[0].mxu0 %v634
        %v739 = vpop.f32.mrb[0].mxu0
        %v740 = vadd.f32 %v612, %v739
        %v741 = vpop.f32.mrb[0].mxu0
        %742 = vmatprep.mubr.f32.mxu0 0.0
        %743 = vmatmul.mubr.f32.gmra.mrb[0].mxu0 %v637
        %v744 = vpop.f32.mrb[0].mxu0
        %v745 = vadd.f32 %v612, %v744
        %v746 = vpop.f32.mrb[0].mxu0
        %747 = vdwg.mxu0
        %v748 = vld [vmem:[%s3] sm:$0xff]
        %v749 = vadd.f32 %v710, %v748
        %v750 = vadd.f32 %v715, %v748
        %v751 = vadd.f32 %v720, %v748
        %v752 = vadd.f32 %v725, %v748
        %v753 = vadd.f32 %v730, %v748
        %v754 = vadd.f32 %v735, %v748
        %v755 = vadd.f32 %v740, %v748
        %v756 = vadd.f32 %v745, %v748
        %757 = vst [vmem:[#allocation2 + $0x8] sm:$0xff] %v749
        %758 = vst [vmem:[#allocation2 + $0x18] sm:$0xff] %v750
        %759 = vst [vmem:[#allocation2 + $0x28] sm:$0xff] %v751
        %760 = vst [vmem:[#allocation2 + $0x38] sm:$0xff] %v752
        %761 = vst [vmem:[#allocation2 + $0x48] sm:$0xff] %v753
        %762 = vst [vmem:[#allocation2 + $0x58] sm:$0xff] %v754
        %763 = vst [vmem:[#allocation2 + $0x68] sm:$0xff] %v755
        %764 = vst [vmem:[#allocation2 + $0x78] sm:$0xff] %v756
        %v765 = vld [vmem:[#allocation2 + $0x6] sm:$0xff]
        %v766 = vld [vmem:[#allocation2 + $0x16] sm:$0xff]
        %v767 = vld [vmem:[#allocation2 + $0x26] sm:$0xff]
        %v768 = vld [vmem:[#allocation2 + $0x36] sm:$0xff]
        %v769 = vld [vmem:[#allocation2 + $0x46] sm:$0xff]
        %v770 = vld [vmem:[#allocation2 + $0x56] sm:$0xff]
        %v771 = vld [vmem:[#allocation2 + $0x66] sm:$0xff]
        %v772 = vld [vmem:[#allocation2 + $0x76] sm:$0xff]
        %v773 = vld [vmem:[#allocation2 + $0x7] sm:$0xff]
        %v774 = vld [vmem:[#allocation2 + $0x17] sm:$0xff]
        %v775 = vld [vmem:[#allocation2 + $0x27] sm:$0xff]
        %v776 = vld [vmem:[#allocation2 + $0x37] sm:$0xff]
        %v777 = vld [vmem:[#allocation2 + $0x47] sm:$0xff]
        %v778 = vld [vmem:[#allocation2 + $0x57] sm:$0xff]
        %v779 = vld [vmem:[#allocation2 + $0x67] sm:$0xff]
        %v780 = vld [vmem:[#allocation2 + $0x77] sm:$0xff]
        %v781 = vld [vmem:[#allocation2 + $0x8] sm:$0xff]
        %v782 = vld [vmem:[#allocation2 + $0x18] sm:$0xff]
        %v783 = vld [vmem:[#allocation2 + $0x28] sm:$0xff]
        %v784 = vld [vmem:[#allocation2 + $0x38] sm:$0xff]
        %v785 = vld [vmem:[#allocation2 + $0x48] sm:$0xff]
        %v786 = vld [vmem:[#allocation2 + $0x58] sm:$0xff]
        %v787 = vld [vmem:[#allocation2 + $0x68] sm:$0xff]
        %v788 = vld [vmem:[#allocation2 + $0x78] sm:$0xff]
        %v789 = vld [vmem:[#allocation4] sm:$0xff]
        %v790 = vld [vmem:[#allocation4 + $0x8] sm:$0xff]
        %v791 = vld [vmem:[#allocation4 + $0x10] sm:$0xff]
        %v792 = vld [vmem:[#allocation4 + $0x18] sm:$0xff]
        %v793 = vld [vmem:[#allocation4 + $0x20] sm:$0xff]
        %v794 = vld [vmem:[#allocation4 + $0x28] sm:$0xff]
        %v795 = vld [vmem:[#allocation4 + $0x30] sm:$0xff]
        %v796 = vld [vmem:[#allocation4 + $0x38] sm:$0xff]
        %v797 = vld [vmem:[#allocation4 + $0x40] sm:$0xff]
        %v798 = vld [vmem:[#allocation4 + $0x48] sm:$0xff]
        %v799 = vld [vmem:[#allocation4 + $0x50] sm:$0xff]
        %v800 = vld [vmem:[#allocation4 + $0x58] sm:$0xff]
        %v801 = vld [vmem:[#allocation4 + $0x60] sm:$0xff]
        %v802 = vld [vmem:[#allocation4 + $0x68] sm:$0xff]
        %v803 = vld [vmem:[#allocation4 + $0x70] sm:$0xff]
        %v804 = vld [vmem:[#allocation4 + $0x78] sm:$0xff]
        %v805 = vld [vmem:[#allocation4 + $0x80] sm:$0xff]
        %v806 = vld [vmem:[#allocation4 + $0x88] sm:$0xff]
        %v807 = vld [vmem:[#allocation4 + $0x90] sm:$0xff]
        %v808 = vld [vmem:[#allocation4 + $0x98] sm:$0xff]
        %v809 = vld [vmem:[#allocation4 + $0xa0] sm:$0xff]
        %v810 = vld [vmem:[#allocation4 + $0xa8] sm:$0xff]
        %v811 = vld [vmem:[#allocation4 + $0xb0] sm:$0xff]
        %v812 = vld [vmem:[#allocation4 + $0xb8] sm:$0xff]
        %v813 = vld [vmem:[#allocation4 + $0xc0] sm:$0xff]
        %v814 = vld [vmem:[#allocation4 + $0xc8] sm:$0xff]
        %v815 = vld [vmem:[#allocation4 + $0xd0] sm:$0xff]
        %v816 = vld [vmem:[#allocation4 + $0xd8] sm:$0xff]
        %v817 = vld [vmem:[#allocation4 + $0xe0] sm:$0xff]
        %v818 = vld [vmem:[#allocation4 + $0xe8] sm:$0xff]
        %v819 = vld [vmem:[#allocation4 + $0xf0] sm:$0xff]
        %v820 = vld [vmem:[#allocation4 + $0xf8] sm:$0xff]
        %v821 = vld [vmem:[#allocation4 + $0x100] sm:$0xff]
        %v822 = vld [vmem:[#allocation4 + $0x108] sm:$0xff]
        %v823 = vld [vmem:[#allocation4 + $0x110] sm:$0xff]
        %v824 = vld [vmem:[#allocation4 + $0x118] sm:$0xff]
        %v825 = vld [vmem:[#allocation4 + $0x120] sm:$0xff]
        %v826 = vld [vmem:[#allocation4 + $0x128] sm:$0xff]
        %v827 = vld [vmem:[#allocation4 + $0x130] sm:$0xff]
        %v828 = vld [vmem:[#allocation4 + $0x138] sm:$0xff]
        %v829 = vld [vmem:[#allocation4 + $0x140] sm:$0xff]
        %v830 = vld [vmem:[#allocation4 + $0x148] sm:$0xff]
        %v831 = vld [vmem:[#allocation4 + $0x150] sm:$0xff]
        %v832 = vld [vmem:[#allocation4 + $0x158] sm:$0xff]
        %v833 = vld [vmem:[#allocation4 + $0x160] sm:$0xff]
        %v834 = vld [vmem:[#allocation4 + $0x168] sm:$0xff]
        %v835 = vld [vmem:[#allocation4 + $0x170] sm:$0xff]
        %v836 = vld [vmem:[#allocation4 + $0x178] sm:$0xff]
        %v837 = vld [vmem:[%s5] sm:$0x1]
        %v839 = vlaneseq
        %v840 = vshrl.u32 %v839, 7
        %v841 = vsub.s32 0, %v840
        %v842 = vrot.slane %v837, %v841
        %844 = vmatprep.subr.mxu0 0.0
        %845 = vmatpush1.msra.mxu0 %v789
        %846 = vmatprep.subr.mxu0 0.0
        %847 = vmatpush1.msra.mxu0 %v790
        %848 = vmatprep.subr.mxu0 0.0
        %849 = vmatpush1.msra.mxu0 %v791
        %850 = vmatprep.subr.mxu0 0.0
        %851 = vmatpush1.msra.mxu0 %v792
        %852 = vmatprep.subr.mxu0 0.0
        %853 = vmatpush1.msra.mxu0 %v793
        %854 = vmatprep.subr.mxu0 0.0
        %855 = vmatpush1.msra.mxu0 %v794
        %856 = vmatprep.subr.mxu0 0.0
        %857 = vmatpush1.msra.mxu0 %v795
        %858 = vmatprep.subr.mxu0 0.0
        %859 = vmatpush1.msra.mxu0 %v796
        %860 = vmatprep.subr.mxu0 0.0
        %861 = vmatpush1.msra.mxu0 %v797
        %862 = vmatprep.subr.mxu0 0.0
        %863 = vmatpush1.msra.mxu0 %v798
        %864 = vmatprep.subr.mxu0 0.0
        %865 = vmatpush1.msra.mxu0 %v799
        %866 = vmatprep.subr.mxu0 0.0
        %867 = vmatpush1.msra.mxu0 %v800
        %868 = vmatprep.subr.mxu0 0.0
        %869 = vmatpush1.msra.mxu0 %v801
        %870 = vmatprep.subr.mxu0 0.0
        %871 = vmatpush1.msra.mxu0 %v802
        %872 = vmatprep.subr.mxu0 0.0
        %873 = vmatpush1.msra.mxu0 %v803
        %874 = vmatprep.subr.mxu0 0.0
        %875 = vmatpush1.msra.mxu0 %v804
        %876 = vmatprep.subr.mxu0 0.0
        %877 = vmatpush1.msra.mxu0 %v805
        %878 = vmatprep.subr.mxu0 0.0
        %879 = vmatpush1.msra.mxu0 %v806
        %880 = vmatprep.subr.mxu0 0.0
        %881 = vmatpush1.msra.mxu0 %v807
        %882 = vmatprep.subr.mxu0 0.0
        %883 = vmatpush1.msra.mxu0 %v808
        %884 = vmatprep.subr.mxu0 0.0
        %885 = vmatpush1.msra.mxu0 %v809
        %886 = vmatprep.subr.mxu0 0.0
        %887 = vmatpush1.msra.mxu0 %v810
        %888 = vmatprep.subr.mxu0 0.0
        %889 = vmatpush1.msra.mxu0 %v811
        %890 = vmatprep.subr.mxu0 0.0
        %891 = vmatpush1.msra.mxu0 %v812
        %892 = vmatprep.subr.mxu0 0.0
        %893 = vmatpush1.msra.mxu0 %v813
        %894 = vmatprep.subr.mxu0 0.0
        %895 = vmatpush1.msra.mxu0 %v814
        %896 = vmatprep.subr.mxu0 0.0
        %897 = vmatpush1.msra.mxu0 %v815
        %898 = vmatprep.subr.mxu0 0.0
        %899 = vmatpush1.msra.mxu0 %v816
        %900 = vmatprep.subr.mxu0 0.0
        %901 = vmatpush1.msra.mxu0 %v817
        %902 = vmatprep.subr.mxu0 0.0
        %903 = vmatpush1.msra.mxu0 %v818
        %904 = vmatprep.subr.mxu0 0.0
        %905 = vmatpush1.msra.mxu0 %v819
        %906 = vmatprep.subr.mxu0 0.0
        %907 = vmatpush1.msra.mxu0 %v820
        %908 = vmatprep.mubr.f32.mxu0 %v773
        %909 = vmatmul.mubr.f32.gmra.mrb[0].mxu0 %v765
        %v910 = vpop.f32.mrb[0].mxu0
        %v911 = vadd.f32 %v842, %v910
        %v912 = vpop.f32.mrb[0].mxu0
        %913 = vmatprep.mubr.f32.mxu0 %v774
        %914 = vmatmul.mubr.f32.gmra.mrb[0].mxu0 %v766
        %v915 = vpop.f32.mrb[0].mxu0
        %v916 = vadd.f32 %v842, %v915
        %v917 = vpop.f32.mrb[0].mxu0
        %918 = vmatprep.mubr.f32.mxu0 %v775
        %919 = vmatmul.mubr.f32.gmra.mrb[0].mxu0 %v767
        %v920 = vpop.f32.mrb[0].mxu0
        %v921 = vadd.f32 %v842, %v920
        %v922 = vpop.f32.mrb[0].mxu0
        %923 = vmatprep.mubr.f32.mxu0 %v776
        %924 = vmatmul.mubr.f32.gmra.mrb[0].mxu0 %v768
        %v925 = vpop.f32.mrb[0].mxu0
        %v926 = vadd.f32 %v842, %v925
        %v927 = vpop.f32.mrb[0].mxu0
        %928 = vmatprep.mubr.f32.mxu0 %v777
        %929 = vmatmul.mubr.f32.gmra.mrb[0].mxu0 %v769
        %v930 = vpop.f32.mrb[0].mxu0
        %v931 = vadd.f32 %v842, %v930
        %v932 = vpop.f32.mrb[0].mxu0
        %933 = vmatprep.mubr.f32.mxu0 %v778
        %934 = vmatmul.mubr.f32.gmra.mrb[0].mxu0 %v770
        %v935 = vpop.f32.mrb[0].mxu0
        %v936 = vadd.f32 %v842, %v935
        %v937 = vpop.f32.mrb[0].mxu0
        %938 = vmatprep.mubr.f32.mxu0 %v779
        %939 = vmatmul.mubr.f32.gmra.mrb[0].mxu0 %v771
        %v940 = vpop.f32.mrb[0].mxu0
        %v941 = vadd.f32 %v842, %v940
        %v942 = vpop.f32.mrb[0].mxu0
        %943 = vmatprep.mubr.f32.mxu0 %v780
        %944 = vmatmul.mubr.f32.gmra.mrb[0].mxu0 %v772
        %v945 = vpop.f32.mrb[0].mxu0
        %v946 = vadd.f32 %v842, %v945
        %v947 = vpop.f32.mrb[0].mxu0
        %948 = vdwg.mxu0
        %949 = vmatprep.subr.mxu0 0.0
        %950 = vmatpush1.msra.mxu0 %v821
        %951 = vmatprep.subr.mxu0 0.0
        %952 = vmatpush1.msra.mxu0 %v822
        %953 = vmatprep.subr.mxu0 0.0
        %954 = vmatpush1.msra.mxu0 %v823
        %955 = vmatprep.subr.mxu0 0.0
        %956 = vmatpush1.msra.mxu0 %v824
        %957 = vmatprep.subr.mxu0 0.0
        %958 = vmatpush1.msra.mxu0 %v825
        %959 = vmatprep.subr.mxu0 0.0
        %960 = vmatpush1.msra.mxu0 %v826
        %961 = vmatprep.subr.mxu0 0.0
        %962 = vmatpush1.msra.mxu0 %v827
        %963 = vmatprep.subr.mxu0 0.0
        %964 = vmatpush1.msra.mxu0 %v828
        %965 = vmatprep.subr.mxu0 0.0
        %966 = vmatpush1.msra.mxu0 %v829
        %967 = vmatprep.subr.mxu0 0.0
        %968 = vmatpush1.msra.mxu0 %v830
        %969 = vmatprep.subr.mxu0 0.0
        %970 = vmatpush1.msra.mxu0 %v831
        %971 = vmatprep.subr.mxu0 0.0
        %972 = vmatpush1.msra.mxu0 %v832
        %973 = vmatprep.subr.mxu0 0.0
        %974 = vmatpush1.msra.mxu0 %v833
        %975 = vmatprep.subr.mxu0 0.0
        %976 = vmatpush1.msra.mxu0 %v834
        %977 = vmatprep.subr.mxu0 0.0
        %978 = vmatpush1.msra.mxu0 %v835
        %979 = vmatprep.subr.mxu0 0.0
        %980 = vmatpush1.msra.mxu0 %v836
        %981 = vmatprep.subr.mxu0 0.0
        %982 = vmatpush1.msra.mxu0 0.0
        %983 = vmatprep.subr.mxu0 0.0
        %984 = vmatpush1.msra.mxu0 0.0
        %985 = vmatprep.subr.mxu0 0.0
        %986 = vmatpush1.msra.mxu0 0.0
        %987 = vmatprep.subr.mxu0 0.0
        %988 = vmatpush1.msra.mxu0 0.0
        %989 = vmatprep.subr.mxu0 0.0
        %990 = vmatpush1.msra.mxu0 0.0
        %991 = vmatprep.subr.mxu0 0.0
        %992 = vmatpush1.msra.mxu0 0.0
        %993 = vmatprep.subr.mxu0 0.0
        %994 = vmatpush1.msra.mxu0 0.0
        %995 = vmatprep.subr.mxu0 0.0
        %996 = vmatpush1.msra.mxu0 0.0
        %997 = vmatprep.subr.mxu0 0.0
        %998 = vmatpush1.msra.mxu0 0.0
        %999 = vmatprep.subr.mxu0 0.0
        %1000 = vmatpush1.msra.mxu0 0.0
        %1001 = vmatprep.subr.mxu0 0.0
        %1002 = vmatpush1.msra.mxu0 0.0
        %1003 = vmatprep.subr.mxu0 0.0
        %1004 = vmatpush1.msra.mxu0 0.0
        %1005 = vmatprep.subr.mxu0 0.0
        %1006 = vmatpush1.msra.mxu0 0.0
        %1007 = vmatprep.subr.mxu0 0.0
        %1008 = vmatpush1.msra.mxu0 0.0
        %1009 = vmatprep.subr.mxu0 0.0
        %1010 = vmatpush1.msra.mxu0 0.0
        %1011 = vmatprep.subr.mxu0 0.0
        %1012 = vmatpush1.msra.mxu0 0.0
        %1013 = vmatprep.mubr.f32.mxu0 0.0
        %1014 = vmatmul.mubr.f32.gmra.mrb[0].mxu0 %v781
        %v1015 = vpop.f32.mrb[0].mxu0
        %v1016 = vadd.f32 %v911, %v1015
        %v1017 = vpop.f32.mrb[0].mxu0
        %1018 = vmatprep.mubr.f32.mxu0 0.0
        %1019 = vmatmul.mubr.f32.gmra.mrb[0].mxu0 %v782
        %v1020 = vpop.f32.mrb[0].mxu0
        %v1021 = vadd.f32 %v916, %v1020
        %v1022 = vpop.f32.mrb[0].mxu0
        %1023 = vmatprep.mubr.f32.mxu0 0.0
        %1024 = vmatmul.mubr.f32.gmra.mrb[0].mxu0 %v783
        %v1025 = vpop.f32.mrb[0].mxu0
        %v1026 = vadd.f32 %v921, %v1025
        %v1027 = vpop.f32.mrb[0].mxu0
        %1028 = vmatprep.mubr.f32.mxu0 0.0
        %1029 = vmatmul.mubr.f32.gmra.mrb[0].mxu0 %v784
        %v1030 = vpop.f32.mrb[0].mxu0
        %v1031 = vadd.f32 %v926, %v1030
        %v1032 = vpop.f32.mrb[0].mxu0
        %1033 = vmatprep.mubr.f32.mxu0 0.0
        %1034 = vmatmul.mubr.f32.gmra.mrb[0].mxu0 %v785
        %v1035 = vpop.f32.mrb[0].mxu0
        %v1036 = vadd.f32 %v931, %v1035
        %v1037 = vpop.f32.mrb[0].mxu0
        %1038 = vmatprep.mubr.f32.mxu0 0.0
        %1039 = vmatmul.mubr.f32.gmra.mrb[0].mxu0 %v786
        %v1040 = vpop.f32.mrb[0].mxu0
        %v1041 = vadd.f32 %v936, %v1040
        %v1042 = vpop.f32.mrb[0].mxu0
        %1043 = vmatprep.mubr.f32.mxu0 0.0
        %1044 = vmatmul.mubr.f32.gmra.mrb[0].mxu0 %v787
        %v1045 = vpop.f32.mrb[0].mxu0
        %v1046 = vadd.f32 %v941, %v1045
        %v1047 = vpop.f32.mrb[0].mxu0
        %1048 = vmatprep.mubr.f32.mxu0 0.0
        %1049 = vmatmul.mubr.f32.gmra.mrb[0].mxu0 %v788
        %v1050 = vpop.f32.mrb[0].mxu0
        %v1051 = vadd.f32 %v946, %v1050
        %v1052 = vpop.f32.mrb[0].mxu0
        %1053 = vdwg.mxu0
        %v1054 = vmax.f32 %v1016, 0.0
        %v1055 = vmax.f32 %v1021, 0.0
        %v1056 = vmax.f32 %v1026, 0.0
        %v1057 = vmax.f32 %v1031, 0.0
        %v1058 = vmax.f32 %v1036, 0.0
        %v1059 = vmax.f32 %v1041, 0.0
        %v1060 = vmax.f32 %v1046, 0.0
        %v1061 = vmax.f32 %v1051, 0.0
        %1062 = vst [vmem:[#allocation3 + $0x8] sm:$0xff] %v1054
        %1063 = vst [vmem:[#allocation3 + $0x18] sm:$0xff] %v1055
        %1064 = vst [vmem:[#allocation3 + $0x28] sm:$0xff] %v1056
        %1065 = vst [vmem:[#allocation3 + $0x38] sm:$0xff] %v1057
        %1066 = vst [vmem:[#allocation3 + $0x48] sm:$0xff] %v1058
        %1067 = vst [vmem:[#allocation3 + $0x58] sm:$0xff] %v1059
        %1068 = vst [vmem:[#allocation3 + $0x68] sm:$0xff] %v1060
        %1069 = vst [vmem:[#allocation3 + $0x78] sm:$0xff] %v1061
        %v1070 = vld [vmem:[#allocation3 + $0x6] sm:$0xff]
        %v1071 = vld [vmem:[#allocation3 + $0x16] sm:$0xff]
        %v1072 = vld [vmem:[#allocation3 + $0x26] sm:$0xff]
        %v1073 = vld [vmem:[#allocation3 + $0x36] sm:$0xff]
        %v1074 = vld [vmem:[#allocation3 + $0x46] sm:$0xff]
        %v1075 = vld [vmem:[#allocation3 + $0x56] sm:$0xff]
        %v1076 = vld [vmem:[#allocation3 + $0x66] sm:$0xff]
        %v1077 = vld [vmem:[#allocation3 + $0x76] sm:$0xff]
        %v1078 = vld [vmem:[#allocation3 + $0x7] sm:$0xff]
        %v1079 = vld [vmem:[#allocation3 + $0x17] sm:$0xff]
        %v1080 = vld [vmem:[#allocation3 + $0x27] sm:$0xff]
        %v1081 = vld [vmem:[#allocation3 + $0x37] sm:$0xff]
        %v1082 = vld [vmem:[#allocation3 + $0x47] sm:$0xff]
        %v1083 = vld [vmem:[#allocation3 + $0x57] sm:$0xff]
        %v1084 = vld [vmem:[#allocation3 + $0x67] sm:$0xff]
        %v1085 = vld [vmem:[#allocation3 + $0x77] sm:$0xff]
        %v1086 = vld [vmem:[#allocation3 + $0x8] sm:$0xff]
        %v1087 = vld [vmem:[#allocation3 + $0x18] sm:$0xff]
        %v1088 = vld [vmem:[#allocation3 + $0x28] sm:$0xff]
        %v1089 = vld [vmem:[#allocation3 + $0x38] sm:$0xff]
        %v1090 = vld [vmem:[#allocation3 + $0x48] sm:$0xff]
        %v1091 = vld [vmem:[#allocation3 + $0x58] sm:$0xff]
        %v1092 = vld [vmem:[#allocation3 + $0x68] sm:$0xff]
        %v1093 = vld [vmem:[#allocation3 + $0x78] sm:$0xff]
        %v1094 = vld [vmem:[#allocation7] sm:$0xff]
        %v1095 = vld [vmem:[#allocation7 + $0x8] sm:$0xff]
        %v1096 = vld [vmem:[#allocation7 + $0x10] sm:$0xff]
        %v1097 = vld [vmem:[#allocation7 + $0x18] sm:$0xff]
        %v1098 = vld [vmem:[#allocation7 + $0x20] sm:$0xff]
        %v1099 = vld [vmem:[#allocation7 + $0x28] sm:$0xff]
        %v1100 = vld [vmem:[#allocation7 + $0x30] sm:$0xff]
        %v1101 = vld [vmem:[#allocation7 + $0x38] sm:$0xff]
        %v1102 = vld [vmem:[#allocation7 + $0x40] sm:$0xff]
        %v1103 = vld [vmem:[#allocation7 + $0x48] sm:$0xff]
        %v1104 = vld [vmem:[#allocation7 + $0x50] sm:$0xff]
        %v1105 = vld [vmem:[#allocation7 + $0x58] sm:$0xff]
        %v1106 = vld [vmem:[#allocation7 + $0x60] sm:$0xff]
        %v1107 = vld [vmem:[#allocation7 + $0x68] sm:$0xff]
        %v1108 = vld [vmem:[#allocation7 + $0x70] sm:$0xff]
        %v1109 = vld [vmem:[#allocation7 + $0x78] sm:$0xff]
        %v1110 = vld [vmem:[#allocation7 + $0x80] sm:$0xff]
        %v1111 = vld [vmem:[#allocation7 + $0x88] sm:$0xff]
        %v1112 = vld [vmem:[#allocation7 + $0x90] sm:$0xff]
        %v1113 = vld [vmem:[#allocation7 + $0x98] sm:$0xff]
        %v1114 = vld [vmem:[#allocation7 + $0xa0] sm:$0xff]
        %v1115 = vld [vmem:[#allocation7 + $0xa8] sm:$0xff]
        %v1116 = vld [vmem:[#allocation7 + $0xb0] sm:$0xff]
        %v1117 = vld [vmem:[#allocation7 + $0xb8] sm:$0xff]
        %v1118 = vld [vmem:[#allocation7 + $0xc0] sm:$0xff]
        %v1119 = vld [vmem:[#allocation7 + $0xc8] sm:$0xff]
        %v1120 = vld [vmem:[#allocation7 + $0xd0] sm:$0xff]
        %v1121 = vld [vmem:[#allocation7 + $0xd8] sm:$0xff]
        %v1122 = vld [vmem:[#allocation7 + $0xe0] sm:$0xff]
        %v1123 = vld [vmem:[#allocation7 + $0xe8] sm:$0xff]
        %v1124 = vld [vmem:[#allocation7 + $0xf0] sm:$0xff]
        %v1125 = vld [vmem:[#allocation7 + $0xf8] sm:$0xff]
        %v1126 = vld [vmem:[#allocation7 + $0x100] sm:$0xff]
        %v1127 = vld [vmem:[#allocation7 + $0x108] sm:$0xff]
        %v1128 = vld [vmem:[#allocation7 + $0x110] sm:$0xff]
        %v1129 = vld [vmem:[#allocation7 + $0x118] sm:$0xff]
        %v1130 = vld [vmem:[#allocation7 + $0x120] sm:$0xff]
        %v1131 = vld [vmem:[#allocation7 + $0x128] sm:$0xff]
        %v1132 = vld [vmem:[#allocation7 + $0x130] sm:$0xff]
        %v1133 = vld [vmem:[#allocation7 + $0x138] sm:$0xff]
        %v1134 = vld [vmem:[#allocation7 + $0x140] sm:$0xff]
        %v1135 = vld [vmem:[#allocation7 + $0x148] sm:$0xff]
        %v1136 = vld [vmem:[#allocation7 + $0x150] sm:$0xff]
        %v1137 = vld [vmem:[#allocation7 + $0x158] sm:$0xff]
        %v1138 = vld [vmem:[#allocation7 + $0x160] sm:$0xff]
        %v1139 = vld [vmem:[#allocation7 + $0x168] sm:$0xff]
        %v1140 = vld [vmem:[#allocation7 + $0x170] sm:$0xff]
        %v1141 = vld [vmem:[#allocation7 + $0x178] sm:$0xff]
        %v1142 = vld [vmem:[%s7] sm:$0x1]
        %v1144 = vlaneseq
        %v1145 = vshrl.u32 %v1144, 7
        %v1146 = vsub.s32 0, %v1145
        %v1147 = vrot.slane %v1142, %v1146
        %1149 = vmatprep.subr.mxu0 0.0
        %1150 = vmatpush1.msra.mxu0 %v1094
        %1151 = vmatprep.subr.mxu0 0.0
        %1152 = vmatpush1.msra.mxu0 %v1095
        %1153 = vmatprep.subr.mxu0 0.0
        %1154 = vmatpush1.msra.mxu0 %v1096
        %1155 = vmatprep.subr.mxu0 0.0
        %1156 = vmatpush1.msra.mxu0 %v1097
        %1157 = vmatprep.subr.mxu0 0.0
        %1158 = vmatpush1.msra.mxu0 %v1098
        %1159 = vmatprep.subr.mxu0 0.0
        %1160 = vmatpush1.msra.mxu0 %v1099
        %1161 = vmatprep.subr.mxu0 0.0
        %1162 = vmatpush1.msra.mxu0 %v1100
        %1163 = vmatprep.subr.mxu0 0.0
        %1164 = vmatpush1.msra.mxu0 %v1101
        %1165 = vmatprep.subr.mxu0 0.0
        %1166 = vmatpush1.msra.mxu0 %v1102
        %1167 = vmatprep.subr.mxu0 0.0
        %1168 = vmatpush1.msra.mxu0 %v1103
        %1169 = vmatprep.subr.mxu0 0.0
        %1170 = vmatpush1.msra.mxu0 %v1104
        %1171 = vmatprep.subr.mxu0 0.0
        %1172 = vmatpush1.msra.mxu0 %v1105
        %1173 = vmatprep.subr.mxu0 0.0
        %1174 = vmatpush1.msra.mxu0 %v1106
        %1175 = vmatprep.subr.mxu0 0.0
        %1176 = vmatpush1.msra.mxu0 %v1107
        %1177 = vmatprep.subr.mxu0 0.0
        %1178 = vmatpush1.msra.mxu0 %v1108
        %1179 = vmatprep.subr.mxu0 0.0
        %1180 = vmatpush1.msra.mxu0 %v1109
        %1181 = vmatprep.subr.mxu0 0.0
        %1182 = vmatpush1.msra.mxu0 %v1110
        %1183 = vmatprep.subr.mxu0 0.0
        %1184 = vmatpush1.msra.mxu0 %v1111
        %1185 = vmatprep.subr.mxu0 0.0
        %1186 = vmatpush1.msra.mxu0 %v1112
        %1187 = vmatprep.subr.mxu0 0.0
        %1188 = vmatpush1.msra.mxu0 %v1113
        %1189 = vmatprep.subr.mxu0 0.0
        %1190 = vmatpush1.msra.mxu0 %v1114
        %1191 = vmatprep.subr.mxu0 0.0
        %1192 = vmatpush1.msra.mxu0 %v1115
        %1193 = vmatprep.subr.mxu0 0.0
        %1194 = vmatpush1.msra.mxu0 %v1116
        %1195 = vmatprep.subr.mxu0 0.0
        %1196 = vmatpush1.msra.mxu0 %v1117
        %1197 = vmatprep.subr.mxu0 0.0
        %1198 = vmatpush1.msra.mxu0 %v1118
        %1199 = vmatprep.subr.mxu0 0.0
        %1200 = vmatpush1.msra.mxu0 %v1119
        %1201 = vmatprep.subr.mxu0 0.0
        %1202 = vmatpush1.msra.mxu0 %v1120
        %1203 = vmatprep.subr.mxu0 0.0
        %1204 = vmatpush1.msra.mxu0 %v1121
        %1205 = vmatprep.subr.mxu0 0.0
        %1206 = vmatpush1.msra.mxu0 %v1122
        %1207 = vmatprep.subr.mxu0 0.0
        %1208 = vmatpush1.msra.mxu0 %v1123
        %1209 = vmatprep.subr.mxu0 0.0
        %1210 = vmatpush1.msra.mxu0 %v1124
        %1211 = vmatprep.subr.mxu0 0.0
        %1212 = vmatpush1.msra.mxu0 %v1125
        %1213 = vmatprep.mubr.f32.mxu0 %v1078
        %1214 = vmatmul.mubr.f32.gmra.mrb[0].mxu0 %v1070
        %v1215 = vpop.f32.mrb[0].mxu0
        %v1216 = vadd.f32 %v1147, %v1215
        %v1217 = vpop.f32.mrb[0].mxu0
        %1218 = vmatprep.mubr.f32.mxu0 %v1079
        %1219 = vmatmul.mubr.f32.gmra.mrb[0].mxu0 %v1071
        %v1220 = vpop.f32.mrb[0].mxu0
        %v1221 = vadd.f32 %v1147, %v1220
        %v1222 = vpop.f32.mrb[0].mxu0
        %1223 = vmatprep.mubr.f32.mxu0 %v1080
        %1224 = vmatmul.mubr.f32.gmra.mrb[0].mxu0 %v1072
        %v1225 = vpop.f32.mrb[0].mxu0
        %v1226 = vadd.f32 %v1147, %v1225
        %v1227 = vpop.f32.mrb[0].mxu0
        %1228 = vmatprep.mubr.f32.mxu0 %v1081
        %1229 = vmatmul.mubr.f32.gmra.mrb[0].mxu0 %v1073
        %v1230 = vpop.f32.mrb[0].mxu0
        %v1231 = vadd.f32 %v1147, %v1230
        %v1232 = vpop.f32.mrb[0].mxu0
        %1233 = vmatprep.mubr.f32.mxu0 %v1082
        %1234 = vmatmul.mubr.f32.gmra.mrb[0].mxu0 %v1074
        %v1235 = vpop.f32.mrb[0].mxu0
        %v1236 = vadd.f32 %v1147, %v1235
        %v1237 = vpop.f32.mrb[0].mxu0
        %1238 = vmatprep.mubr.f32.mxu0 %v1083
        %1239 = vmatmul.mubr.f32.gmra.mrb[0].mxu0 %v1075
        %v1240 = vpop.f32.mrb[0].mxu0
        %v1241 = vadd.f32 %v1147, %v1240
        %v1242 = vpop.f32.mrb[0].mxu0
        %1243 = vmatprep.mubr.f32.mxu0 %v1084
        %1244 = vmatmul.mubr.f32.gmra.mrb[0].mxu0 %v1076
        %v1245 = vpop.f32.mrb[0].mxu0
        %v1246 = vadd.f32 %v1147, %v1245
        %v1247 = vpop.f32.mrb[0].mxu0
        %1248 = vmatprep.mubr.f32.mxu0 %v1085
        %1249 = vmatmul.mubr.f32.gmra.mrb[0].mxu0 %v1077
        %v1250 = vpop.f32.mrb[0].mxu0
        %v1251 = vadd.f32 %v1147, %v1250
        %v1252 = vpop.f32.mrb[0].mxu0
        %1253 = vdwg.mxu0
        %1254 = vmatprep.subr.mxu0 0.0
        %1255 = vmatpush1.msra.mxu0 %v1126
        %1256 = vmatprep.subr.mxu0 0.0
        %1257 = vmatpush1.msra.mxu0 %v1127
        %1258 = vmatprep.subr.mxu0 0.0
        %1259 = vmatpush1.msra.mxu0 %v1128
        %1260 = vmatprep.subr.mxu0 0.0
        %1261 = vmatpush1.msra.mxu0 %v1129
        %1262 = vmatprep.subr.mxu0 0.0
        %1263 = vmatpush1.msra.mxu0 %v1130
        %1264 = vmatprep.subr.mxu0 0.0
        %1265 = vmatpush1.msra.mxu0 %v1131
        %1266 = vmatprep.subr.mxu0 0.0
        %1267 = vmatpush1.msra.mxu0 %v1132
        %1268 = vmatprep.subr.mxu0 0.0
        %1269 = vmatpush1.msra.mxu0 %v1133
        %1270 = vmatprep.subr.mxu0 0.0
        %1271 = vmatpush1.msra.mxu0 %v1134
        %1272 = vmatprep.subr.mxu0 0.0
        %1273 = vmatpush1.msra.mxu0 %v1135
        %1274 = vmatprep.subr.mxu0 0.0
        %1275 = vmatpush1.msra.mxu0 %v1136
        %1276 = vmatprep.subr.mxu0 0.0
        %1277 = vmatpush1.msra.mxu0 %v1137
        %1278 = vmatprep.subr.mxu0 0.0
        %1279 = vmatpush1.msra.mxu0 %v1138
        %1280 = vmatprep.subr.mxu0 0.0
        %1281 = vmatpush1.msra.mxu0 %v1139
        %1282 = vmatprep.subr.mxu0 0.0
        %1283 = vmatpush1.msra.mxu0 %v1140
        %1284 = vmatprep.subr.mxu0 0.0
        %1285 = vmatpush1.msra.mxu0 %v1141
        %1286 = vmatprep.subr.mxu0 0.0
        %1287 = vmatpush1.msra.mxu0 0.0
        %1288 = vmatprep.subr.mxu0 0.0
        %1289 = vmatpush1.msra.mxu0 0.0
        %1290 = vmatprep.subr.mxu0 0.0
        %1291 = vmatpush1.msra.mxu0 0.0
        %1292 = vmatprep.subr.mxu0 0.0
        %1293 = vmatpush1.msra.mxu0 0.0
        %1294 = vmatprep.subr.mxu0 0.0
        %1295 = vmatpush1.msra.mxu0 0.0
        %1296 = vmatprep.subr.mxu0 0.0
        %1297 = vmatpush1.msra.mxu0 0.0
        %1298 = vmatprep.subr.mxu0 0.0
        %1299 = vmatpush1.msra.mxu0 0.0
        %1300 = vmatprep.subr.mxu0 0.0
        %1301 = vmatpush1.msra.mxu0 0.0
        %1302 = vmatprep.subr.mxu0 0.0
        %1303 = vmatpush1.msra.mxu0 0.0
        %1304 = vmatprep.subr.mxu0 0.0
        %1305 = vmatpush1.msra.mxu0 0.0
        %1306 = vmatprep.subr.mxu0 0.0
        %1307 = vmatpush1.msra.mxu0 0.0
        %1308 = vmatprep.subr.mxu0 0.0
        %1309 = vmatpush1.msra.mxu0 0.0
        %1310 = vmatprep.subr.mxu0 0.0
        %1311 = vmatpush1.msra.mxu0 0.0
        %1312 = vmatprep.subr.mxu0 0.0
        %1313 = vmatpush1.msra.mxu0 0.0
        %1314 = vmatprep.subr.mxu0 0.0
        %1315 = vmatpush1.msra.mxu0 0.0
        %1316 = vmatprep.subr.mxu0 0.0
        %1317 = vmatpush1.msra.mxu0 0.0
        %1318 = vmatprep.mubr.f32.mxu0 0.0
        %1319 = vmatmul.mubr.f32.gmra.mrb[0].mxu0 %v1086
        %v1320 = vpop.f32.mrb[0].mxu0
        %v1321 = vadd.f32 %v1216, %v1320
        %v1322 = vpop.f32.mrb[0].mxu0
        %1323 = vmatprep.mubr.f32.mxu0 0.0
        %1324 = vmatmul.mubr.f32.gmra.mrb[0].mxu0 %v1087
        %v1325 = vpop.f32.mrb[0].mxu0
        %v1326 = vadd.f32 %v1221, %v1325
        %v1327 = vpop.f32.mrb[0].mxu0
        %1328 = vmatprep.mubr.f32.mxu0 0.0
        %1329 = vmatmul.mubr.f32.gmra.mrb[0].mxu0 %v1088
        %v1330 = vpop.f32.mrb[0].mxu0
        %v1331 = vadd.f32 %v1226, %v1330
        %v1332 = vpop.f32.mrb[0].mxu0
        %1333 = vmatprep.mubr.f32.mxu0 0.0
        %1334 = vmatmul.mubr.f32.gmra.mrb[0].mxu0 %v1089
        %v1335 = vpop.f32.mrb[0].mxu0
        %v1336 = vadd.f32 %v1231, %v1335
        %v1337 = vpop.f32.mrb[0].mxu0
        %1338 = vmatprep.mubr.f32.mxu0 0.0
        %1339 = vmatmul.mubr.f32.gmra.mrb[0].mxu0 %v1090
        %v1340 = vpop.f32.mrb[0].mxu0
        %v1341 = vadd.f32 %v1236, %v1340
        %v1342 = vpop.f32.mrb[0].mxu0
        %1343 = vmatprep.mubr.f32.mxu0 0.0
        %1344 = vmatmul.mubr.f32.gmra.mrb[0].mxu0 %v1091
        %v1345 = vpop.f32.mrb[0].mxu0
        %v1346 = vadd.f32 %v1241, %v1345
        %v1347 = vpop.f32.mrb[0].mxu0
        %1348 = vmatprep.mubr.f32.mxu0 0.0
        %1349 = vmatmul.mubr.f32.gmra.mrb[0].mxu0 %v1092
        %v1350 = vpop.f32.mrb[0].mxu0
        %v1351 = vadd.f32 %v1246, %v1350
        %v1352 = vpop.f32.mrb[0].mxu0
        %1353 = vmatprep.mubr.f32.mxu0 0.0
        %1354 = vmatmul.mubr.f32.gmra.mrb[0].mxu0 %v1093
        %v1355 = vpop.f32.mrb[0].mxu0
        %v1356 = vadd.f32 %v1251, %v1355
        %v1357 = vpop.f32.mrb[0].mxu0
        %1358 = vdwg.mxu0
        %v1359 = vmax.f32 %v1321, 0.0
        %v1360 = vmax.f32 %v1326, 0.0
        %v1361 = vmax.f32 %v1331, 0.0
        %v1362 = vmax.f32 %v1336, 0.0
        %v1363 = vmax.f32 %v1341, 0.0
        %v1364 = vmax.f32 %v1346, 0.0
        %v1365 = vmax.f32 %v1351, 0.0
        %v1366 = vmax.f32 %v1356, 0.0
        %v1367 = vld [vmem:[#allocation2 + $0x8] sm:$0xff]
        %v1368 = vld [vmem:[#allocation2 + $0x18] sm:$0xff]
        %v1369 = vld [vmem:[#allocation2 + $0x28] sm:$0xff]
        %v1370 = vld [vmem:[#allocation2 + $0x38] sm:$0xff]
        %v1371 = vld [vmem:[#allocation2 + $0x48] sm:$0xff]
        %v1372 = vld [vmem:[#allocation2 + $0x58] sm:$0xff]
        %v1373 = vld [vmem:[#allocation2 + $0x68] sm:$0xff]
        %v1374 = vld [vmem:[#allocation2 + $0x78] sm:$0xff]
        %v1375 = vld [vmem:[%s8] sm:$0xff]
        %v1376 = vld [vmem:[%s8 + $0x8] sm:$0xff]
        %v1377 = vld [vmem:[%s8 + $0x10] sm:$0xff]
        %v1378 = vld [vmem:[%s8 + $0x18] sm:$0xff]
        %v1379 = vld [vmem:[%s8 + $0x20] sm:$0xff]
        %v1380 = vld [vmem:[%s8 + $0x28] sm:$0xff]
        %v1381 = vld [vmem:[%s8 + $0x30] sm:$0xff]
        %v1382 = vld [vmem:[%s8 + $0x38] sm:$0xff]
        %v1383 = vld [vmem:[%s8 + $0x40] sm:$0xff]
        %v1384 = vld [vmem:[%s8 + $0x48] sm:$0xff]
        %v1385 = vld [vmem:[%s8 + $0x50] sm:$0xff]
        %v1386 = vld [vmem:[%s8 + $0x58] sm:$0xff]
        %v1387 = vld [vmem:[%s8 + $0x60] sm:$0xff]
        %v1388 = vld [vmem:[%s8 + $0x68] sm:$0xff]
        %v1389 = vld [vmem:[%s8 + $0x70] sm:$0xff]
        %v1390 = vld [vmem:[%s8 + $0x78] sm:$0xff]
        %v1391 = vld [vmem:[%s9] sm:$0x1]
        %v1393 = vlaneseq
        %v1394 = vshrl.u32 %v1393, 7
        %v1395 = vsub.s32 0, %v1394
        %v1396 = vrot.slane %v1391, %v1395
        %1398 = vmatprep.subr.mxu0 0.0
        %1399 = vmatpush1.msra.mxu0 %v1375
        %1400 = vmatprep.subr.mxu0 0.0
        %1401 = vmatpush1.msra.mxu0 %v1376
        %1402 = vmatprep.subr.mxu0 0.0
        %1403 = vmatpush1.msra.mxu0 %v1377
        %1404 = vmatprep.subr.mxu0 0.0
        %1405 = vmatpush1.msra.mxu0 %v1378
        %1406 = vmatprep.subr.mxu0 0.0
        %1407 = vmatpush1.msra.mxu0 %v1379
        %1408 = vmatprep.subr.mxu0 0.0
        %1409 = vmatpush1.msra.mxu0 %v1380
        %1410 = vmatprep.subr.mxu0 0.0
        %1411 = vmatpush1.msra.mxu0 %v1381
        %1412 = vmatprep.subr.mxu0 0.0
        %1413 = vmatpush1.msra.mxu0 %v1382
        %1414 = vmatprep.subr.mxu0 0.0
        %1415 = vmatpush1.msra.mxu0 %v1383
        %1416 = vmatprep.subr.mxu0 0.0
        %1417 = vmatpush1.msra.mxu0 %v1384
        %1418 = vmatprep.subr.mxu0 0.0
        %1419 = vmatpush1.msra.mxu0 %v1385
        %1420 = vmatprep.subr.mxu0 0.0
        %1421 = vmatpush1.msra.mxu0 %v1386
        %1422 = vmatprep.subr.mxu0 0.0
        %1423 = vmatpush1.msra.mxu0 %v1387
        %1424 = vmatprep.subr.mxu0 0.0
        %1425 = vmatpush1.msra.mxu0 %v1388
        %1426 = vmatprep.subr.mxu0 0.0
        %1427 = vmatpush1.msra.mxu0 %v1389
        %1428 = vmatprep.subr.mxu0 0.0
        %1429 = vmatpush1.msra.mxu0 %v1390
        %1430 = vmatprep.subr.mxu0 0.0
        %1431 = vmatpush1.msra.mxu0 0.0
        %1432 = vmatprep.subr.mxu0 0.0
        %1433 = vmatpush1.msra.mxu0 0.0
        %1434 = vmatprep.subr.mxu0 0.0
        %1435 = vmatpush1.msra.mxu0 0.0
        %1436 = vmatprep.subr.mxu0 0.0
        %1437 = vmatpush1.msra.mxu0 0.0
        %1438 = vmatprep.subr.mxu0 0.0
        %1439 = vmatpush1.msra.mxu0 0.0
        %1440 = vmatprep.subr.mxu0 0.0
        %1441 = vmatpush1.msra.mxu0 0.0
        %1442 = vmatprep.subr.mxu0 0.0
        %1443 = vmatpush1.msra.mxu0 0.0
        %1444 = vmatprep.subr.mxu0 0.0
        %1445 = vmatpush1.msra.mxu0 0.0
        %1446 = vmatprep.subr.mxu0 0.0
        %1447 = vmatpush1.msra.mxu0 0.0
        %1448 = vmatprep.subr.mxu0 0.0
        %1449 = vmatpush1.msra.mxu0 0.0
        %1450 = vmatprep.subr.mxu0 0.0
        %1451 = vmatpush1.msra.mxu0 0.0
        %1452 = vmatprep.subr.mxu0 0.0
        %1453 = vmatpush1.msra.mxu0 0.0
        %1454 = vmatprep.subr.mxu0 0.0
        %1455 = vmatpush1.msra.mxu0 0.0
        %1456 = vmatprep.subr.mxu0 0.0
        %1457 = vmatpush1.msra.mxu0 0.0
        %1458 = vmatprep.subr.mxu0 0.0
        %1459 = vmatpush1.msra.mxu0 0.0
        %1460 = vmatprep.subr.mxu0 0.0
        %1461 = vmatpush1.msra.mxu0 0.0
        %1462 = vmatprep.mubr.f32.mxu0 0.0
        %1463 = vmatmul.mubr.f32.gmra.mrb[0].mxu0 %v1367
        %v1464 = vpop.f32.mrb[0].mxu0
        %v1465 = vadd.f32 %v1396, %v1464
        %v1466 = vpop.f32.mrb[0].mxu0
        %1467 = vmatprep.mubr.f32.mxu0 0.0
        %1468 = vmatmul.mubr.f32.gmra.mrb[0].mxu0 %v1368
        %v1469 = vpop.f32.mrb[0].mxu0
        %v1470 = vadd.f32 %v1396, %v1469
        %v1471 = vpop.f32.mrb[0].mxu0
        %1472 = vmatprep.mubr.f32.mxu0 0.0
        %1473 = vmatmul.mubr.f32.gmra.mrb[0].mxu0 %v1369
        %v1474 = vpop.f32.mrb[0].mxu0
        %v1475 = vadd.f32 %v1396, %v1474
        %v1476 = vpop.f32.mrb[0].mxu0
        %1477 = vmatprep.mubr.f32.mxu0 0.0
        %1478 = vmatmul.mubr.f32.gmra.mrb[0].mxu0 %v1370
        %v1479 = vpop.f32.mrb[0].mxu0
        %v1480 = vadd.f32 %v1396, %v1479
        %v1481 = vpop.f32.mrb[0].mxu0
        %1482 = vmatprep.mubr.f32.mxu0 0.0
        %1483 = vmatmul.mubr.f32.gmra.mrb[0].mxu0 %v1371
        %v1484 = vpop.f32.mrb[0].mxu0
        %v1485 = vadd.f32 %v1396, %v1484
        %v1486 = vpop.f32.mrb[0].mxu0
        %1487 = vmatprep.mubr.f32.mxu0 0.0
        %1488 = vmatmul.mubr.f32.gmra.mrb[0].mxu0 %v1372
        %v1489 = vpop.f32.mrb[0].mxu0
        %v1490 = vadd.f32 %v1396, %v1489
        %v1491 = vpop.f32.mrb[0].mxu0
        %1492 = vmatprep.mubr.f32.mxu0 0.0
        %1493 = vmatmul.mubr.f32.gmra.mrb[0].mxu0 %v1373
        %v1494 = vpop.f32.mrb[0].mxu0
        %v1495 = vadd.f32 %v1396, %v1494
        %v1496 = vpop.f32.mrb[0].mxu0
        %1497 = vmatprep.mubr.f32.mxu0 0.0
        %1498 = vmatmul.mubr.f32.gmra.mrb[0].mxu0 %v1374
        %v1499 = vpop.f32.mrb[0].mxu0
        %v1500 = vadd.f32 %v1396, %v1499
        %v1501 = vpop.f32.mrb[0].mxu0
        %1502 = vdwg.mxu0
        %v1503 = vadd.f32 %v1359, %v1465
        %v1504 = vadd.f32 %v1360, %v1470
        %v1505 = vadd.f32 %v1361, %v1475
        %v1506 = vadd.f32 %v1362, %v1480
        %v1507 = vadd.f32 %v1363, %v1485
        %v1508 = vadd.f32 %v1364, %v1490
        %v1509 = vadd.f32 %v1365, %v1495
        %v1510 = vadd.f32 %v1366, %v1500
        %v1511 = vmax.f32 %v1503, 0.0
        %v1512 = vmax.f32 %v1504, 0.0
        %v1513 = vmax.f32 %v1505, 0.0
        %v1514 = vmax.f32 %v1506, 0.0
        %v1515 = vmax.f32 %v1507, 0.0
        %v1516 = vmax.f32 %v1508, 0.0
        %v1517 = vmax.f32 %v1509, 0.0
        %v1518 = vmax.f32 %v1510, 0.0
        %1519 = vst [vmem:[#allocation2 + $0x8] sm:$0xff] %v1511
        %1520 = vst [vmem:[#allocation2 + $0x18] sm:$0xff] %v1512
        %1521 = vst [vmem:[#allocation2 + $0x28] sm:$0xff] %v1513
        %1522 = vst [vmem:[#allocation2 + $0x38] sm:$0xff] %v1514
        %1523 = vst [vmem:[#allocation2 + $0x48] sm:$0xff] %v1515
        %1524 = vst [vmem:[#allocation2 + $0x58] sm:$0xff] %v1516
        %1525 = vst [vmem:[#allocation2 + $0x68] sm:$0xff] %v1517
        %1526 = vst [vmem:[#allocation2 + $0x78] sm:$0xff] %v1518
        %v1527 = vld [vmem:[#allocation2 + $0x4] sm:$0xff]
        %v1528 = vld [vmem:[#allocation2 + $0x14] sm:$0xff]
        %v1529 = vld [vmem:[#allocation2 + $0x24] sm:$0xff]
        %v1530 = vld [vmem:[#allocation2 + $0x34] sm:$0xff]
        %v1531 = vld [vmem:[#allocation2 + $0x44] sm:$0xff]
        %v1532 = vld [vmem:[#allocation2 + $0x54] sm:$0xff]
        %v1533 = vld [vmem:[#allocation2 + $0x64] sm:$0xff]
        %v1534 = vld [vmem:[#allocation2 + $0x74] sm:$0xff]
        %v1535 = vld [vmem:[#allocation2 + $0x6] sm:$0xff]
        %v1536 = vld [vmem:[#allocation2 + $0x16] sm:$0xff]
        %v1537 = vld [vmem:[#allocation2 + $0x26] sm:$0xff]
        %v1538 = vld [vmem:[#allocation2 + $0x36] sm:$0xff]
        %v1539 = vld [vmem:[#allocation2 + $0x46] sm:$0xff]
        %v1540 = vld [vmem:[#allocation2 + $0x56] sm:$0xff]
        %v1541 = vld [vmem:[#allocation2 + $0x66] sm:$0xff]
        %v1542 = vld [vmem:[#allocation2 + $0x76] sm:$0xff]
        %v1543 = vld [vmem:[#allocation2 + $0x8] sm:$0xff]
        %v1544 = vld [vmem:[#allocation2 + $0x18] sm:$0xff]
        %v1545 = vld [vmem:[#allocation2 + $0x28] sm:$0xff]
        %v1546 = vld [vmem:[#allocation2 + $0x38] sm:$0xff]
        %v1547 = vld [vmem:[#allocation2 + $0x48] sm:$0xff]
        %v1548 = vld [vmem:[#allocation2 + $0x58] sm:$0xff]
        %v1549 = vld [vmem:[#allocation2 + $0x68] sm:$0xff]
        %v1550 = vld [vmem:[#allocation2 + $0x78] sm:$0xff]
        %v1551 = vld [vmem:[#allocation9] sm:$0xff]
        %v1552 = vld [vmem:[#allocation9 + $0x8] sm:$0xff]
        %v1553 = vld [vmem:[#allocation9 + $0x10] sm:$0xff]
        %v1554 = vld [vmem:[#allocation9 + $0x18] sm:$0xff]
        %v1555 = vld [vmem:[#allocation9 + $0x20] sm:$0xff]
        %v1556 = vld [vmem:[#allocation9 + $0x28] sm:$0xff]
        %v1557 = vld [vmem:[#allocation9 + $0x30] sm:$0xff]
        %v1558 = vld [vmem:[#allocation9 + $0x38] sm:$0xff]
        %v1559 = vld [vmem:[#allocation9 + $0x40] sm:$0xff]
        %v1560 = vld [vmem:[#allocation9 + $0x48] sm:$0xff]
        %v1561 = vld [vmem:[#allocation9 + $0x50] sm:$0xff]
        %v1562 = vld [vmem:[#allocation9 + $0x58] sm:$0xff]
        %v1563 = vld [vmem:[#allocation9 + $0x60] sm:$0xff]
        %v1564 = vld [vmem:[#allocation9 + $0x68] sm:$0xff]
        %v1565 = vld [vmem:[#allocation9 + $0x70] sm:$0xff]
        %v1566 = vld [vmem:[#allocation9 + $0x78] sm:$0xff]
        %v1567 = vld [vmem:[#allocation9 + $0x80] sm:$0xff]
        %v1568 = vld [vmem:[#allocation9 + $0x88] sm:$0xff]
        %v1569 = vld [vmem:[#allocation9 + $0x90] sm:$0xff]
        %v1570 = vld [vmem:[#allocation9 + $0x98] sm:$0xff]
        %v1571 = vld [vmem:[#allocation9 + $0xa0] sm:$0xff]
        %v1572 = vld [vmem:[#allocation9 + $0xa8] sm:$0xff]
        %v1573 = vld [vmem:[#allocation9 + $0xb0] sm:$0xff]
        %v1574 = vld [vmem:[#allocation9 + $0xb8] sm:$0xff]
        %v1575 = vld [vmem:[#allocation9 + $0xc0] sm:$0xff]
        %v1576 = vld [vmem:[#allocation9 + $0xc8] sm:$0xff]
        %v1577 = vld [vmem:[#allocation9 + $0xd0] sm:$0xff]
        %v1578 = vld [vmem:[#allocation9 + $0xd8] sm:$0xff]
        %v1579 = vld [vmem:[#allocation9 + $0xe0] sm:$0xff]
        %v1580 = vld [vmem:[#allocation9 + $0xe8] sm:$0xff]
        %v1581 = vld [vmem:[#allocation9 + $0xf0] sm:$0xff]
        %v1582 = vld [vmem:[#allocation9 + $0xf8] sm:$0xff]
        %v1583 = vld [vmem:[#allocation9 + $0x100] sm:$0xff]
        %v1584 = vld [vmem:[#allocation9 + $0x108] sm:$0xff]
        %v1585 = vld [vmem:[#allocation9 + $0x110] sm:$0xff]
        %v1586 = vld [vmem:[#allocation9 + $0x118] sm:$0xff]
        %v1587 = vld [vmem:[#allocation9 + $0x120] sm:$0xff]
        %v1588 = vld [vmem:[#allocation9 + $0x128] sm:$0xff]
        %v1589 = vld [vmem:[#allocation9 + $0x130] sm:$0xff]
        %v1590 = vld [vmem:[#allocation9 + $0x138] sm:$0xff]
        %v1591 = vld [vmem:[#allocation9 + $0x140] sm:$0xff]
        %v1592 = vld [vmem:[#allocation9 + $0x148] sm:$0xff]
        %v1593 = vld [vmem:[#allocation9 + $0x150] sm:$0xff]
        %v1594 = vld [vmem:[#allocation9 + $0x158] sm:$0xff]
        %v1595 = vld [vmem:[#allocation9 + $0x160] sm:$0xff]
        %v1596 = vld [vmem:[#allocation9 + $0x168] sm:$0xff]
        %v1597 = vld [vmem:[#allocation9 + $0x170] sm:$0xff]
        %v1598 = vld [vmem:[#allocation9 + $0x178] sm:$0xff]
        %v1599 = vld [vmem:[%s11] sm:$0x1]
        %v1601 = vlaneseq
        %v1602 = vshrl.u32 %v1601, 7
        %v1603 = vsub.s32 0, %v1602
        %v1604 = vrot.slane %v1599, %v1603
        %1606 = vmatprep.subr.mxu0 0.0
        %1607 = vmatpush1.msra.mxu0 %v1551
        %1608 = vmatprep.subr.mxu0 0.0
        %1609 = vmatpush1.msra.mxu0 %v1552
        %1610 = vmatprep.subr.mxu0 0.0
        %1611 = vmatpush1.msra.mxu0 %v1553
        %1612 = vmatprep.subr.mxu0 0.0
        %1613 = vmatpush1.msra.mxu0 %v1554
        %1614 = vmatprep.subr.mxu0 0.0
        %1615 = vmatpush1.msra.mxu0 %v1555
        %1616 = vmatprep.subr.mxu0 0.0
        %1617 = vmatpush1.msra.mxu0 %v1556
        %1618 = vmatprep.subr.mxu0 0.0
        %1619 = vmatpush1.msra.mxu0 %v1557
        %1620 = vmatprep.subr.mxu0 0.0
        %1621 = vmatpush1.msra.mxu0 %v1558
        %1622 = vmatprep.subr.mxu0 0.0
        %1623 = vmatpush1.msra.mxu0 %v1559
        %1624 = vmatprep.subr.mxu0 0.0
        %1625 = vmatpush1.msra.mxu0 %v1560
        %1626 = vmatprep.subr.mxu0 0.0
        %1627 = vmatpush1.msra.mxu0 %v1561
        %1628 = vmatprep.subr.mxu0 0.0
        %1629 = vmatpush1.msra.mxu0 %v1562
        %1630 = vmatprep.subr.mxu0 0.0
        %1631 = vmatpush1.msra.mxu0 %v1563
        %1632 = vmatprep.subr.mxu0 0.0
        %1633 = vmatpush1.msra.mxu0 %v1564
        %1634 = vmatprep.subr.mxu0 0.0
        %1635 = vmatpush1.msra.mxu0 %v1565
        %1636 = vmatprep.subr.mxu0 0.0
        %1637 = vmatpush1.msra.mxu0 %v1566
        %1638 = vmatprep.subr.mxu0 0.0
        %1639 = vmatpush1.msra.mxu0 %v1567
        %1640 = vmatprep.subr.mxu0 0.0
        %1641 = vmatpush1.msra.mxu0 %v1568
        %1642 = vmatprep.subr.mxu0 0.0
        %1643 = vmatpush1.msra.mxu0 %v1569
        %1644 = vmatprep.subr.mxu0 0.0
        %1645 = vmatpush1.msra.mxu0 %v1570
        %1646 = vmatprep.subr.mxu0 0.0
        %1647 = vmatpush1.msra.mxu0 %v1571
        %1648 = vmatprep.subr.mxu0 0.0
        %1649 = vmatpush1.msra.mxu0 %v1572
        %1650 = vmatprep.subr.mxu0 0.0
        %1651 = vmatpush1.msra.mxu0 %v1573
        %1652 = vmatprep.subr.mxu0 0.0
        %1653 = vmatpush1.msra.mxu0 %v1574
        %1654 = vmatprep.subr.mxu0 0.0
        %1655 = vmatpush1.msra.mxu0 %v1575
        %1656 = vmatprep.subr.mxu0 0.0
        %1657 = vmatpush1.msra.mxu0 %v1576
        %1658 = vmatprep.subr.mxu0 0.0
        %1659 = vmatpush1.msra.mxu0 %v1577
        %1660 = vmatprep.subr.mxu0 0.0
        %1661 = vmatpush1.msra.mxu0 %v1578
        %1662 = vmatprep.subr.mxu0 0.0
        %1663 = vmatpush1.msra.mxu0 %v1579
        %1664 = vmatprep.subr.mxu0 0.0
        %1665 = vmatpush1.msra.mxu0 %v1580
        %1666 = vmatprep.subr.mxu0 0.0
        %1667 = vmatpush1.msra.mxu0 %v1581
        %1668 = vmatprep.subr.mxu0 0.0
        %1669 = vmatpush1.msra.mxu0 %v1582
        %1670 = vmatprep.mubr.f32.mxu0 %v1535
        %1671 = vmatmul.mubr.f32.gmra.mrb[0].mxu0 %v1527
        %v1672 = vpop.f32.mrb[0].mxu0
        %v1673 = vadd.f32 %v1604, %v1672
        %v1674 = vpop.f32.mrb[0].mxu0
        %1675 = vmatprep.mubr.f32.mxu0 %v1536
        %1676 = vmatmul.mubr.f32.gmra.mrb[0].mxu0 %v1528
        %v1677 = vpop.f32.mrb[0].mxu0
        %v1678 = vadd.f32 %v1604, %v1677
        %v1679 = vpop.f32.mrb[0].mxu0
        %1680 = vmatprep.mubr.f32.mxu0 %v1537
        %1681 = vmatmul.mubr.f32.gmra.mrb[0].mxu0 %v1529
        %v1682 = vpop.f32.mrb[0].mxu0
        %v1683 = vadd.f32 %v1604, %v1682
        %v1684 = vpop.f32.mrb[0].mxu0
        %1685 = vmatprep.mubr.f32.mxu0 %v1538
        %1686 = vmatmul.mubr.f32.gmra.mrb[0].mxu0 %v1530
        %v1687 = vpop.f32.mrb[0].mxu0
        %v1688 = vadd.f32 %v1604, %v1687
        %v1689 = vpop.f32.mrb[0].mxu0
        %1690 = vmatprep.mubr.f32.mxu0 %v1539
        %1691 = vmatmul.mubr.f32.gmra.mrb[0].mxu0 %v1531
        %v1692 = vpop.f32.mrb[0].mxu0
        %v1693 = vadd.f32 %v1604, %v1692
        %v1694 = vpop.f32.mrb[0].mxu0
        %1695 = vmatprep.mubr.f32.mxu0 %v1540
        %1696 = vmatmul.mubr.f32.gmra.mrb[0].mxu0 %v1532
        %v1697 = vpop.f32.mrb[0].mxu0
        %v1698 = vadd.f32 %v1604, %v1697
        %v1699 = vpop.f32.mrb[0].mxu0
        %1700 = vmatprep.mubr.f32.mxu0 %v1541
        %1701 = vmatmul.mubr.f32.gmra.mrb[0].mxu0 %v1533
        %v1702 = vpop.f32.mrb[0].mxu0
        %v1703 = vadd.f32 %v1604, %v1702
        %v1704 = vpop.f32.mrb[0].mxu0
        %1705 = vmatprep.mubr.f32.mxu0 %v1542
        %1706 = vmatmul.mubr.f32.gmra.mrb[0].mxu0 %v1534
        %v1707 = vpop.f32.mrb[0].mxu0
        %v1708 = vadd.f32 %v1604, %v1707
        %v1709 = vpop.f32.mrb[0].mxu0
        %1710 = vdwg.mxu0
        %1711 = vmatprep.subr.mxu0 0.0
        %1712 = vmatpush1.msra.mxu0 %v1583
        %1713 = vmatprep.subr.mxu0 0.0
        %1714 = vmatpush1.msra.mxu0 %v1584
        %1715 = vmatprep.subr.mxu0 0.0
        %1716 = vmatpush1.msra.mxu0 %v1585
        %1717 = vmatprep.subr.mxu0 0.0
        %1718 = vmatpush1.msra.mxu0 %v1586
        %1719 = vmatprep.subr.mxu0 0.0
        %1720 = vmatpush1.msra.mxu0 %v1587
        %1721 = vmatprep.subr.mxu0 0.0
        %1722 = vmatpush1.msra.mxu0 %v1588
        %1723 = vmatprep.subr.mxu0 0.0
        %1724 = vmatpush1.msra.mxu0 %v1589
        %1725 = vmatprep.subr.mxu0 0.0
        %1726 = vmatpush1.msra.mxu0 %v1590
        %1727 = vmatprep.subr.mxu0 0.0
        %1728 = vmatpush1.msra.mxu0 %v1591
        %1729 = vmatprep.subr.mxu0 0.0
        %1730 = vmatpush1.msra.mxu0 %v1592
        %1731 = vmatprep.subr.mxu0 0.0
        %1732 = vmatpush1.msra.mxu0 %v1593
        %1733 = vmatprep.subr.mxu0 0.0
        %1734 = vmatpush1.msra.mxu0 %v1594
        %1735 = vmatprep.subr.mxu0 0.0
        %1736 = vmatpush1.msra.mxu0 %v1595
        %1737 = vmatprep.subr.mxu0 0.0
        %1738 = vmatpush1.msra.mxu0 %v1596
        %1739 = vmatprep.subr.mxu0 0.0
        %1740 = vmatpush1.msra.mxu0 %v1597
        %1741 = vmatprep.subr.mxu0 0.0
        %1742 = vmatpush1.msra.mxu0 %v1598
        %1743 = vmatprep.subr.mxu0 0.0
        %1744 = vmatpush1.msra.mxu0 0.0
        %1745 = vmatprep.subr.mxu0 0.0
        %1746 = vmatpush1.msra.mxu0 0.0
        %1747 = vmatprep.subr.mxu0 0.0
        %1748 = vmatpush1.msra.mxu0 0.0
        %1749 = vmatprep.subr.mxu0 0.0
        %1750 = vmatpush1.msra.mxu0 0.0
        %1751 = vmatprep.subr.mxu0 0.0
        %1752 = vmatpush1.msra.mxu0 0.0
        %1753 = vmatprep.subr.mxu0 0.0
        %1754 = vmatpush1.msra.mxu0 0.0
        %1755 = vmatprep.subr.mxu0 0.0
        %1756 = vmatpush1.msra.mxu0 0.0
        %1757 = vmatprep.subr.mxu0 0.0
        %1758 = vmatpush1.msra.mxu0 0.0
        %1759 = vmatprep.subr.mxu0 0.0
        %1760 = vmatpush1.msra.mxu0 0.0
        %1761 = vmatprep.subr.mxu0 0.0
        %1762 = vmatpush1.msra.mxu0 0.0
        %1763 = vmatprep.subr.mxu0 0.0
        %1764 = vmatpush1.msra.mxu0 0.0
        %1765 = vmatprep.subr.mxu0 0.0
        %1766 = vmatpush1.msra.mxu0 0.0
        %1767 = vmatprep.subr.mxu0 0.0
        %1768 = vmatpush1.msra.mxu0 0.0
        %1769 = vmatprep.subr.mxu0 0.0
        %1770 = vmatpush1.msra.mxu0 0.0
        %1771 = vmatprep.subr.mxu0 0.0
        %1772 = vmatpush1.msra.mxu0 0.0
        %1773 = vmatprep.subr.mxu0 0.0
        %1774 = vmatpush1.msra.mxu0 0.0
        %1775 = vmatprep.mubr.f32.mxu0 0.0
        %1776 = vmatmul.mubr.f32.gmra.mrb[0].mxu0 %v1543
        %v1777 = vpop.f32.mrb[0].mxu0
        %v1778 = vadd.f32 %v1673, %v1777
        %v1779 = vpop.f32.mrb[0].mxu0
        %1780 = vmatprep.mubr.f32.mxu0 0.0
        %1781 = vmatmul.mubr.f32.gmra.mrb[0].mxu0 %v1544
        %v1782 = vpop.f32.mrb[0].mxu0
        %v1783 = vadd.f32 %v1678, %v1782
        %v1784 = vpop.f32.mrb[0].mxu0
        %1785 = vmatprep.mubr.f32.mxu0 0.0
        %1786 = vmatmul.mubr.f32.gmra.mrb[0].mxu0 %v1545
        %v1787 = vpop.f32.mrb[0].mxu0
        %v1788 = vadd.f32 %v1683, %v1787
        %v1789 = vpop.f32.mrb[0].mxu0
        %1790 = vmatprep.mubr.f32.mxu0 0.0
        %1791 = vmatmul.mubr.f32.gmra.mrb[0].mxu0 %v1546
        %v1792 = vpop.f32.mrb[0].mxu0
        %v1793 = vadd.f32 %v1688, %v1792
        %v1794 = vpop.f32.mrb[0].mxu0
        %1795 = vmatprep.mubr.f32.mxu0 0.0
        %1796 = vmatmul.mubr.f32.gmra.mrb[0].mxu0 %v1547
        %v1797 = vpop.f32.mrb[0].mxu0
        %v1798 = vadd.f32 %v1693, %v1797
        %v1799 = vpop.f32.mrb[0].mxu0
        %1800 = vmatprep.mubr.f32.mxu0 0.0
        %1801 = vmatmul.mubr.f32.gmra.mrb[0].mxu0 %v1548
        %v1802 = vpop.f32.mrb[0].mxu0
        %v1803 = vadd.f32 %v1698, %v1802
        %v1804 = vpop.f32.mrb[0].mxu0
        %1805 = vmatprep.mubr.f32.mxu0 0.0
        %1806 = vmatmul.mubr.f32.gmra.mrb[0].mxu0 %v1549
        %v1807 = vpop.f32.mrb[0].mxu0
        %v1808 = vadd.f32 %v1703, %v1807
        %v1809 = vpop.f32.mrb[0].mxu0
        %1810 = vmatprep.mubr.f32.mxu0 0.0
        %1811 = vmatmul.mubr.f32.gmra.mrb[0].mxu0 %v1550
        %v1812 = vpop.f32.mrb[0].mxu0
        %v1813 = vadd.f32 %v1708, %v1812
        %v1814 = vpop.f32.mrb[0].mxu0
        %1815 = vdwg.mxu0
        %v1816 = vmax.f32 %v1778, 0.0
        %v1817 = vmax.f32 %v1783, 0.0
        %v1818 = vmax.f32 %v1788, 0.0
        %v1819 = vmax.f32 %v1793, 0.0
        %v1820 = vmax.f32 %v1798, 0.0
        %v1821 = vmax.f32 %v1803, 0.0
        %v1822 = vmax.f32 %v1808, 0.0
        %v1823 = vmax.f32 %v1813, 0.0
        %1824 = vst [vmem:[#allocation3 + $0x8] sm:$0xff] %v1816
        %1825 = vst [vmem:[#allocation3 + $0x18] sm:$0xff] %v1817
        %1826 = vst [vmem:[#allocation3 + $0x28] sm:$0xff] %v1818
        %1827 = vst [vmem:[#allocation3 + $0x38] sm:$0xff] %v1819
        %1828 = vst [vmem:[#allocation3 + $0x48] sm:$0xff] %v1820
        %1829 = vst [vmem:[#allocation3 + $0x58] sm:$0xff] %v1821
        %1830 = vst [vmem:[#allocation3 + $0x68] sm:$0xff] %v1822
        %1831 = vst [vmem:[#allocation3 + $0x78] sm:$0xff] %v1823
        %v1832 = vld [vmem:[#allocation3 + $0x4] sm:$0xff]
        %v1833 = vld [vmem:[#allocation3 + $0x14] sm:$0xff]
        %v1834 = vld [vmem:[#allocation3 + $0x24] sm:$0xff]
        %v1835 = vld [vmem:[#allocation3 + $0x34] sm:$0xff]
        %v1836 = vld [vmem:[#allocation3 + $0x44] sm:$0xff]
        %v1837 = vld [vmem:[#allocation3 + $0x54] sm:$0xff]
        %v1838 = vld [vmem:[#allocation3 + $0x64] sm:$0xff]
        %v1839 = vld [vmem:[#allocation3 + $0x74] sm:$0xff]
        %v1840 = vld [vmem:[#allocation3 + $0x6] sm:$0xff]
        %v1841 = vld [vmem:[#allocation3 + $0x16] sm:$0xff]
        %v1842 = vld [vmem:[#allocation3 + $0x26] sm:$0xff]
        %v1843 = vld [vmem:[#allocation3 + $0x36] sm:$0xff]
        %v1844 = vld [vmem:[#allocation3 + $0x46] sm:$0xff]
        %v1845 = vld [vmem:[#allocation3 + $0x56] sm:$0xff]
        %v1846 = vld [vmem:[#allocation3 + $0x66] sm:$0xff]
        %v1847 = vld [vmem:[#allocation3 + $0x76] sm:$0xff]
        %v1848 = vld [vmem:[#allocation3 + $0x8] sm:$0xff]
        %v1849 = vld [vmem:[#allocation3 + $0x18] sm:$0xff]
        %v1850 = vld [vmem:[#allocation3 + $0x28] sm:$0xff]
        %v1851 = vld [vmem:[#allocation3 + $0x38] sm:$0xff]
        %v1852 = vld [vmem:[#allocation3 + $0x48] sm:$0xff]
        %v1853 = vld [vmem:[#allocation3 + $0x58] sm:$0xff]
        %v1854 = vld [vmem:[#allocation3 + $0x68] sm:$0xff]
        %v1855 = vld [vmem:[#allocation3 + $0x78] sm:$0xff]
        %v1856 = vld [vmem:[#allocation10] sm:$0xff]
        %v1857 = vld [vmem:[#allocation10 + $0x8] sm:$0xff]
        %v1858 = vld [vmem:[#allocation10 + $0x10] sm:$0xff]
        %v1859 = vld [vmem:[#allocation10 + $0x18] sm:$0xff]
        %v1860 = vld [vmem:[#allocation10 + $0x20] sm:$0xff]
        %v1861 = vld [vmem:[#allocation10 + $0x28] sm:$0xff]
        %v1862 = vld [vmem:[#allocation10 + $0x30] sm:$0xff]
        %v1863 = vld [vmem:[#allocation10 + $0x38] sm:$0xff]
        %v1864 = vld [vmem:[#allocation10 + $0x40] sm:$0xff]
        %v1865 = vld [vmem:[#allocation10 + $0x48] sm:$0xff]
        %v1866 = vld [vmem:[#allocation10 + $0x50] sm:$0xff]
        %v1867 = vld [vmem:[#allocation10 + $0x58] sm:$0xff]
        %v1868 = vld [vmem:[#allocation10 + $0x60] sm:$0xff]
        %v1869 = vld [vmem:[#allocation10 + $0x68] sm:$0xff]
        %v1870 = vld [vmem:[#allocation10 + $0x70] sm:$0xff]
        %v1871 = vld [vmem:[#allocation10 + $0x78] sm:$0xff]
        %v1872 = vld [vmem:[#allocation10 + $0x80] sm:$0xff]
        %v1873 = vld [vmem:[#allocation10 + $0x88] sm:$0xff]
        %v1874 = vld [vmem:[#allocation10 + $0x90] sm:$0xff]
        %v1875 = vld [vmem:[#allocation10 + $0x98] sm:$0xff]
        %v1876 = vld [vmem:[#allocation10 + $0xa0] sm:$0xff]
        %v1877 = vld [vmem:[#allocation10 + $0xa8] sm:$0xff]
        %v1878 = vld [vmem:[#allocation10 + $0xb0] sm:$0xff]
        %v1879 = vld [vmem:[#allocation10 + $0xb8] sm:$0xff]
        %v1880 = vld [vmem:[#allocation10 + $0xc0] sm:$0xff]
        %v1881 = vld [vmem:[#allocation10 + $0xc8] sm:$0xff]
        %v1882 = vld [vmem:[#allocation10 + $0xd0] sm:$0xff]
        %v1883 = vld [vmem:[#allocation10 + $0xd8] sm:$0xff]
        %v1884 = vld [vmem:[#allocation10 + $0xe0] sm:$0xff]
        %v1885 = vld [vmem:[#allocation10 + $0xe8] sm:$0xff]
        %v1886 = vld [vmem:[#allocation10 + $0xf0] sm:$0xff]
        %v1887 = vld [vmem:[#allocation10 + $0xf8] sm:$0xff]
        %v1888 = vld [vmem:[#allocation10 + $0x100] sm:$0xff]
        %v1889 = vld [vmem:[#allocation10 + $0x108] sm:$0xff]
        %v1890 = vld [vmem:[#allocation10 + $0x110] sm:$0xff]
        %v1891 = vld [vmem:[#allocation10 + $0x118] sm:$0xff]
        %v1892 = vld [vmem:[#allocation10 + $0x120] sm:$0xff]
        %v1893 = vld [vmem:[#allocation10 + $0x128] sm:$0xff]
        %v1894 = vld [vmem:[#allocation10 + $0x130] sm:$0xff]
        %v1895 = vld [vmem:[#allocation10 + $0x138] sm:$0xff]
        %v1896 = vld [vmem:[#allocation10 + $0x140] sm:$0xff]
        %v1897 = vld [vmem:[#allocation10 + $0x148] sm:$0xff]
        %v1898 = vld [vmem:[#allocation10 + $0x150] sm:$0xff]
        %v1899 = vld [vmem:[#allocation10 + $0x158] sm:$0xff]
        %v1900 = vld [vmem:[#allocation10 + $0x160] sm:$0xff]
        %v1901 = vld [vmem:[#allocation10 + $0x168] sm:$0xff]
        %v1902 = vld [vmem:[#allocation10 + $0x170] sm:$0xff]
        %v1903 = vld [vmem:[#allocation10 + $0x178] sm:$0xff]
        %v1904 = vld [vmem:[%s13] sm:$0x1]
        %v1906 = vlaneseq
        %v1907 = vshrl.u32 %v1906, 7
        %v1908 = vsub.s32 0, %v1907
        %v1909 = vrot.slane %v1904, %v1908
        %1911 = vmatprep.subr.mxu0 0.0
        %1912 = vmatpush1.msra.mxu0 %v1856
        %1913 = vmatprep.subr.mxu0 0.0
        %1914 = vmatpush1.msra.mxu0 %v1857
        %1915 = vmatprep.subr.mxu0 0.0
        %1916 = vmatpush1.msra.mxu0 %v1858
        %1917 = vmatprep.subr.mxu0 0.0
        %1918 = vmatpush1.msra.mxu0 %v1859
        %1919 = vmatprep.subr.mxu0 0.0
        %1920 = vmatpush1.msra.mxu0 %v1860
        %1921 = vmatprep.subr.mxu0 0.0
        %1922 = vmatpush1.msra.mxu0 %v1861
        %1923 = vmatprep.subr.mxu0 0.0
        %1924 = vmatpush1.msra.mxu0 %v1862
        %1925 = vmatprep.subr.mxu0 0.0
        %1926 = vmatpush1.msra.mxu0 %v1863
        %1927 = vmatprep.subr.mxu0 0.0
        %1928 = vmatpush1.msra.mxu0 %v1864
        %1929 = vmatprep.subr.mxu0 0.0
        %1930 = vmatpush1.msra.mxu0 %v1865
        %1931 = vmatprep.subr.mxu0 0.0
        %1932 = vmatpush1.msra.mxu0 %v1866
        %1933 = vmatprep.subr.mxu0 0.0
        %1934 = vmatpush1.msra.mxu0 %v1867
        %1935 = vmatprep.subr.mxu0 0.0
        %1936 = vmatpush1.msra.mxu0 %v1868
        %1937 = vmatprep.subr.mxu0 0.0
        %1938 = vmatpush1.msra.mxu0 %v1869
        %1939 = vmatprep.subr.mxu0 0.0
        %1940 = vmatpush1.msra.mxu0 %v1870
        %1941 = vmatprep.subr.mxu0 0.0
        %1942 = vmatpush1.msra.mxu0 %v1871
        %1943 = vmatprep.subr.mxu0 0.0
        %1944 = vmatpush1.msra.mxu0 %v1872
        %1945 = vmatprep.subr.mxu0 0.0
        %1946 = vmatpush1.msra.mxu0 %v1873
        %1947 = vmatprep.subr.mxu0 0.0
        %1948 = vmatpush1.msra.mxu0 %v1874
        %1949 = vmatprep.subr.mxu0 0.0
        %1950 = vmatpush1.msra.mxu0 %v1875
        %1951 = vmatprep.subr.mxu0 0.0
        %1952 = vmatpush1.msra.mxu0 %v1876
        %1953 = vmatprep.subr.mxu0 0.0
        %1954 = vmatpush1.msra.mxu0 %v1877
        %1955 = vmatprep.subr.mxu0 0.0
        %1956 = vmatpush1.msra.mxu0 %v1878
        %1957 = vmatprep.subr.mxu0 0.0
        %1958 = vmatpush1.msra.mxu0 %v1879
        %1959 = vmatprep.subr.mxu0 0.0
        %1960 = vmatpush1.msra.mxu0 %v1880
        %1961 = vmatprep.subr.mxu0 0.0
        %1962 = vmatpush1.msra.mxu0 %v1881
        %1963 = vmatprep.subr.mxu0 0.0
        %1964 = vmatpush1.msra.mxu0 %v1882
        %1965 = vmatprep.subr.mxu0 0.0
        %1966 = vmatpush1.msra.mxu0 %v1883
        %1967 = vmatprep.subr.mxu0 0.0
        %1968 = vmatpush1.msra.mxu0 %v1884
        %1969 = vmatprep.subr.mxu0 0.0
        %1970 = vmatpush1.msra.mxu0 %v1885
        %1971 = vmatprep.subr.mxu0 0.0
        %1972 = vmatpush1.msra.mxu0 %v1886
        %1973 = vmatprep.subr.mxu0 0.0
        %1974 = vmatpush1.msra.mxu0 %v1887
        %1975 = vmatprep.mubr.f32.mxu0 %v1840
        %1976 = vmatmul.mubr.f32.gmra.mrb[0].mxu0 %v1832
        %v1977 = vpop.f32.mrb[0].mxu0
        %v1978 = vadd.f32 %v1909, %v1977
        %v1979 = vpop.f32.mrb[0].mxu0
        %1980 = vmatprep.mubr.f32.mxu0 %v1841
        %1981 = vmatmul.mubr.f32.gmra.mrb[0].mxu0 %v1833
        %v1982 = vpop.f32.mrb[0].mxu0
        %v1983 = vadd.f32 %v1909, %v1982
        %v1984 = vpop.f32.mrb[0].mxu0
        %1985 = vmatprep.mubr.f32.mxu0 %v1842
        %1986 = vmatmul.mubr.f32.gmra.mrb[0].mxu0 %v1834
        %v1987 = vpop.f32.mrb[0].mxu0
        %v1988 = vadd.f32 %v1909, %v1987
        %v1989 = vpop.f32.mrb[0].mxu0
        %1990 = vmatprep.mubr.f32.mxu0 %v1843
        %1991 = vmatmul.mubr.f32.gmra.mrb[0].mxu0 %v1835
        %v1992 = vpop.f32.mrb[0].mxu0
        %v1993 = vadd.f32 %v1909, %v1992
        %v1994 = vpop.f32.mrb[0].mxu0
        %1995 = vmatprep.mubr.f32.mxu0 %v1844
        %1996 = vmatmul.mubr.f32.gmra.mrb[0].mxu0 %v1836
        %v1997 = vpop.f32.mrb[0].mxu0
        %v1998 = vadd.f32 %v1909, %v1997
        %v1999 = vpop.f32.mrb[0].mxu0
        %2000 = vmatprep.mubr.f32.mxu0 %v1845
        %2001 = vmatmul.mubr.f32.gmra.mrb[0].mxu0 %v1837
        %v2002 = vpop.f32.mrb[0].mxu0
        %v2003 = vadd.f32 %v1909, %v2002
        %v2004 = vpop.f32.mrb[0].mxu0
        %2005 = vmatprep.mubr.f32.mxu0 %v1846
        %2006 = vmatmul.mubr.f32.gmra.mrb[0].mxu0 %v1838
        %v2007 = vpop.f32.mrb[0].mxu0
        %v2008 = vadd.f32 %v1909, %v2007
        %v2009 = vpop.f32.mrb[0].mxu0
        %2010 = vmatprep.mubr.f32.mxu0 %v1847
        %2011 = vmatmul.mubr.f32.gmra.mrb[0].mxu0 %v1839
        %v2012 = vpop.f32.mrb[0].mxu0
        %v2013 = vadd.f32 %v1909, %v2012
        %v2014 = vpop.f32.mrb[0].mxu0
        %2015 = vdwg.mxu0
        %2016 = vmatprep.subr.mxu0 0.0
        %2017 = vmatpush1.msra.mxu0 %v1888
        %2018 = vmatprep.subr.mxu0 0.0
        %2019 = vmatpush1.msra.mxu0 %v1889
        %2020 = vmatprep.subr.mxu0 0.0
        %2021 = vmatpush1.msra.mxu0 %v1890
        %2022 = vmatprep.subr.mxu0 0.0
        %2023 = vmatpush1.msra.mxu0 %v1891
        %2024 = vmatprep.subr.mxu0 0.0
        %2025 = vmatpush1.msra.mxu0 %v1892
        %2026 = vmatprep.subr.mxu0 0.0
        %2027 = vmatpush1.msra.mxu0 %v1893
        %2028 = vmatprep.subr.mxu0 0.0
        %2029 = vmatpush1.msra.mxu0 %v1894
        %2030 = vmatprep.subr.mxu0 0.0
        %2031 = vmatpush1.msra.mxu0 %v1895
        %2032 = vmatprep.subr.mxu0 0.0
        %2033 = vmatpush1.msra.mxu0 %v1896
        %2034 = vmatprep.subr.mxu0 0.0
        %2035 = vmatpush1.msra.mxu0 %v1897
        %2036 = vmatprep.subr.mxu0 0.0
        %2037 = vmatpush1.msra.mxu0 %v1898
        %2038 = vmatprep.subr.mxu0 0.0
        %2039 = vmatpush1.msra.mxu0 %v1899
        %2040 = vmatprep.subr.mxu0 0.0
        %2041 = vmatpush1.msra.mxu0 %v1900
        %2042 = vmatprep.subr.mxu0 0.0
        %2043 = vmatpush1.msra.mxu0 %v1901
        %2044 = vmatprep.subr.mxu0 0.0
        %2045 = vmatpush1.msra.mxu0 %v1902
        %2046 = vmatprep.subr.mxu0 0.0
        %2047 = vmatpush1.msra.mxu0 %v1903
        %2048 = vmatprep.subr.mxu0 0.0
        %2049 = vmatpush1.msra.mxu0 0.0
        %2050 = vmatprep.subr.mxu0 0.0
        %2051 = vmatpush1.msra.mxu0 0.0
        %2052 = vmatprep.subr.mxu0 0.0
        %2053 = vmatpush1.msra.mxu0 0.0
        %2054 = vmatprep.subr.mxu0 0.0
        %2055 = vmatpush1.msra.mxu0 0.0
        %2056 = vmatprep.subr.mxu0 0.0
        %2057 = vmatpush1.msra.mxu0 0.0
        %2058 = vmatprep.subr.mxu0 0.0
        %2059 = vmatpush1.msra.mxu0 0.0
        %2060 = vmatprep.subr.mxu0 0.0
        %2061 = vmatpush1.msra.mxu0 0.0
        %2062 = vmatprep.subr.mxu0 0.0
        %2063 = vmatpush1.msra.mxu0 0.0
        %2064 = vmatprep.subr.mxu0 0.0
        %2065 = vmatpush1.msra.mxu0 0.0
        %2066 = vmatprep.subr.mxu0 0.0
        %2067 = vmatpush1.msra.mxu0 0.0
        %2068 = vmatprep.subr.mxu0 0.0
        %2069 = vmatpush1.msra.mxu0 0.0
        %2070 = vmatprep.subr.mxu0 0.0
        %2071 = vmatpush1.msra.mxu0 0.0
        %2072 = vmatprep.subr.mxu0 0.0
        %2073 = vmatpush1.msra.mxu0 0.0
        %2074 = vmatprep.subr.mxu0 0.0
        %2075 = vmatpush1.msra.mxu0 0.0
        %2076 = vmatprep.subr.mxu0 0.0
        %2077 = vmatpush1.msra.mxu0 0.0
        %2078 = vmatprep.subr.mxu0 0.0
        %2079 = vmatpush1.msra.mxu0 0.0
        %2080 = vmatprep.mubr.f32.mxu0 0.0
        %2081 = vmatmul.mubr.f32.gmra.mrb[0].mxu0 %v1848
        %v2082 = vpop.f32.mrb[0].mxu0
        %v2083 = vadd.f32 %v1978, %v2082
        %v2084 = vpop.f32.mrb[0].mxu0
        %2085 = vmatprep.mubr.f32.mxu0 0.0
        %2086 = vmatmul.mubr.f32.gmra.mrb[0].mxu0 %v1849
        %v2087 = vpop.f32.mrb[0].mxu0
        %v2088 = vadd.f32 %v1983, %v2087
        %v2089 = vpop.f32.mrb[0].mxu0
        %2090 = vmatprep.mubr.f32.mxu0 0.0
        %2091 = vmatmul.mubr.f32.gmra.mrb[0].mxu0 %v1850
        %v2092 = vpop.f32.mrb[0].mxu0
        %v2093 = vadd.f32 %v1988, %v2092
        %v2094 = vpop.f32.mrb[0].mxu0
        %2095 = vmatprep.mubr.f32.mxu0 0.0
        %2096 = vmatmul.mubr.f32.gmra.mrb[0].mxu0 %v1851
        %v2097 = vpop.f32.mrb[0].mxu0
        %v2098 = vadd.f32 %v1993, %v2097
        %v2099 = vpop.f32.mrb[0].mxu0
        %2100 = vmatprep.mubr.f32.mxu0 0.0
        %2101 = vmatmul.mubr.f32.gmra.mrb[0].mxu0 %v1852
        %v2102 = vpop.f32.mrb[0].mxu0
        %v2103 = vadd.f32 %v1998, %v2102
        %v2104 = vpop.f32.mrb[0].mxu0
        %2105 = vmatprep.mubr.f32.mxu0 0.0
        %2106 = vmatmul.mubr.f32.gmra.mrb[0].mxu0 %v1853
        %v2107 = vpop.f32.mrb[0].mxu0
        %v2108 = vadd.f32 %v2003, %v2107
        %v2109 = vpop.f32.mrb[0].mxu0
        %2110 = vmatprep.mubr.f32.mxu0 0.0
        %2111 = vmatmul.mubr.f32.gmra.mrb[0].mxu0 %v1854
        %v2112 = vpop.f32.mrb[0].mxu0
        %v2113 = vadd.f32 %v2008, %v2112
        %v2114 = vpop.f32.mrb[0].mxu0
        %2115 = vmatprep.mubr.f32.mxu0 0.0
        %2116 = vmatmul.mubr.f32.gmra.mrb[0].mxu0 %v1855
        %v2117 = vpop.f32.mrb[0].mxu0
        %v2118 = vadd.f32 %v2013, %v2117
        %v2119 = vpop.f32.mrb[0].mxu0
        %2120 = vdwg.mxu0
        %v2121 = vmax.f32 %v2083, 0.0
        %v2122 = vmax.f32 %v2088, 0.0
        %v2123 = vmax.f32 %v2093, 0.0
        %v2124 = vmax.f32 %v2098, 0.0
        %v2125 = vmax.f32 %v2103, 0.0
        %v2126 = vmax.f32 %v2108, 0.0
        %v2127 = vmax.f32 %v2113, 0.0
        %v2128 = vmax.f32 %v2118, 0.0
        %v2129 = vld [vmem:[#allocation2 + $0x8] sm:$0xff]
        %v2130 = vld [vmem:[#allocation2 + $0x18] sm:$0xff]
        %v2131 = vld [vmem:[#allocation2 + $0x28] sm:$0xff]
        %v2132 = vld [vmem:[#allocation2 + $0x38] sm:$0xff]
        %v2133 = vld [vmem:[#allocation2 + $0x48] sm:$0xff]
        %v2134 = vld [vmem:[#allocation2 + $0x58] sm:$0xff]
        %v2135 = vld [vmem:[#allocation2 + $0x68] sm:$0xff]
        %v2136 = vld [vmem:[#allocation2 + $0x78] sm:$0xff]
        %v2137 = vadd.f32 %v2121, %v2129
        %v2138 = vadd.f32 %v2122, %v2130
        %v2139 = vadd.f32 %v2123, %v2131
        %v2140 = vadd.f32 %v2124, %v2132
        %v2141 = vadd.f32 %v2125, %v2133
        %v2142 = vadd.f32 %v2126, %v2134
        %v2143 = vadd.f32 %v2127, %v2135
        %v2144 = vadd.f32 %v2128, %v2136
        %v2145 = vmax.f32 %v2137, 0.0
        %v2146 = vmax.f32 %v2138, 0.0
        %v2147 = vmax.f32 %v2139, 0.0
        %v2148 = vmax.f32 %v2140, 0.0
        %v2149 = vmax.f32 %v2141, 0.0
        %v2150 = vmax.f32 %v2142, 0.0
        %v2151 = vmax.f32 %v2143, 0.0
        %v2152 = vmax.f32 %v2144, 0.0
        %2153 = vadd.xlane.f32.xlu0 %v2145
        %v2154 = vpop.xlane.xlu0 %2153
        %2155 = vadd.xlane.f32.xlu0 %v2146
        %v2156 = vpop.xlane.xlu0 %2155
        %2157 = vadd.xlane.f32.xlu0 %v2147
        %v2158 = vpop.xlane.xlu0 %2157
        %2159 = vadd.xlane.f32.xlu0 %v2148
        %v2160 = vpop.xlane.xlu0 %2159
        %2161 = vadd.xlane.f32.xlu0 %v2149
        %v2162 = vpop.xlane.xlu0 %2161
        %2163 = vadd.xlane.f32.xlu0 %v2150
        %v2164 = vpop.xlane.xlu0 %2163
        %2165 = vadd.xlane.f32.xlu0 %v2151
        %v2166 = vpop.xlane.xlu0 %2165
        %2167 = vadd.xlane.f32.xlu0 %v2152
        %v2168 = vpop.xlane.xlu0 %2167
        %v2169 = vmul.f32 %v2145, %v2145
        %v2170 = vmul.f32 %v2146, %v2146
        %v2171 = vmul.f32 %v2147, %v2147
        %v2172 = vmul.f32 %v2148, %v2148
        %v2173 = vmul.f32 %v2149, %v2149
        %v2174 = vmul.f32 %v2150, %v2150
        %v2175 = vmul.f32 %v2151, %v2151
        %v2176 = vmul.f32 %v2152, %v2152
        %2177 = vadd.xlane.f32.xlu0 %v2169
        %v2178 = vpop.xlane.xlu0 %2177
        %2179 = vadd.xlane.f32.xlu0 %v2170
        %v2180 = vpop.xlane.xlu0 %2179
        %2181 = vadd.xlane.f32.xlu0 %v2171
        %v2182 = vpop.xlane.xlu0 %2181
        %2183 = vadd.xlane.f32.xlu0 %v2172
        %v2184 = vpop.xlane.xlu0 %2183
        %2185 = vadd.xlane.f32.xlu0 %v2173
        %v2186 = vpop.xlane.xlu0 %2185
        %2187 = vadd.xlane.f32.xlu0 %v2174
        %v2188 = vpop.xlane.xlu0 %2187
        %2189 = vadd.xlane.f32.xlu0 %v2175
        %v2190 = vpop.xlane.xlu0 %2189
        %2191 = vadd.xlane.f32.xlu0 %v2176
        %v2192 = vpop.xlane.xlu0 %2191
        %v2193 = vmul.f32 %v2154, 0.03125
        %v2194 = vmul.f32 %v2156, 0.03125
        %v2195 = vmul.f32 %v2158, 0.03125
        %v2196 = vmul.f32 %v2160, 0.03125
        %v2197 = vmul.f32 %v2162, 0.03125
        %v2198 = vmul.f32 %v2164, 0.03125
        %v2199 = vmul.f32 %v2166, 0.03125
        %v2200 = vmul.f32 %v2168, 0.03125
        %v2201 = vmul.f32 %v2178, 0.03125
        %v2202 = vmul.f32 %v2180, 0.03125
        %v2203 = vmul.f32 %v2182, 0.03125
        %v2204 = vmul.f32 %v2184, 0.03125
        %v2205 = vmul.f32 %v2186, 0.03125
        %v2206 = vmul.f32 %v2188, 0.03125
        %v2207 = vmul.f32 %v2190, 0.03125
        %v2208 = vmul.f32 %v2192, 0.03125
        %v2209 = vmul.f32 %v2193, %v2193
        %v2210 = vmul.f32 %v2194, %v2194
        %v2211 = vmul.f32 %v2195, %v2195
        %v2212 = vmul.f32 %v2196, %v2196
        %v2213 = vmul.f32 %v2197, %v2197
        %v2214 = vmul.f32 %v2198, %v2198
        %v2215 = vmul.f32 %v2199, %v2199
        %v2216 = vmul.f32 %v2200, %v2200
        %v2217 = vsub.f32 %v2201, %v2209
        %v2218 = vsub.f32 %v2202, %v2210
        %v2219 = vsub.f32 %v2203, %v2211
        %v2220 = vsub.f32 %v2204, %v2212
        %v2221 = vsub.f32 %v2205, %v2213
        %v2222 = vsub.f32 %v2206, %v2214
        %v2223 = vsub.f32 %v2207, %v2215
        %v2224 = vsub.f32 %v2208, %v2216
        %v2225 = vmax.f32 %v2217, 0.0
        %v2226 = vmax.f32 %v2218, 0.0
        %v2227 = vmax.f32 %v2219, 0.0
        %v2228 = vmax.f32 %v2220, 0.0
        %v2229 = vmax.f32 %v2221, 0.0
        %v2230 = vmax.f32 %v2222, 0.0
        %v2231 = vmax.f32 %v2223, 0.0
        %v2232 = vmax.f32 %v2224, 0.0
        %v2233 = vsub.f32 %v2145, %v2193
        %v2234 = vsub.f32 %v2146, %v2194
        %v2235 = vsub.f32 %v2147, %v2195
        %v2236 = vsub.f32 %v2148, %v2196
        %v2237 = vsub.f32 %v2149, %v2197
        %v2238 = vsub.f32 %v2150, %v2198
        %v2239 = vsub.f32 %v2151, %v2199
        %v2240 = vsub.f32 %v2152, %v2200
        %v2241 = vadd.f32 %v2225, 1e-05
        %v2242 = vadd.f32 %v2226, 1e-05
        %v2243 = vadd.f32 %v2227, 1e-05
        %v2244 = vadd.f32 %v2228, 1e-05
        %v2245 = vadd.f32 %v2229, 1e-05
        %v2246 = vadd.f32 %v2230, 1e-05
        %v2247 = vadd.f32 %v2231, 1e-05
        %v2248 = vadd.f32 %v2232, 1e-05
        %v2249 = vrsqrt.pop %v2241
        %v2250 = vrsqrt.pop %v2242
        %v2251 = vrsqrt.pop %v2243
        %v2252 = vrsqrt.pop %v2244
        %v2253 = vrsqrt.pop %v2245
        %v2254 = vrsqrt.pop %v2246
        %v2255 = vrsqrt.pop %v2247
        %v2256 = vrsqrt.pop %v2248
        %v2257 = vmul.f32 %v2233, %v2249
        %v2258 = vmul.f32 %v2234, %v2250
        %v2259 = vmul.f32 %v2235, %v2251
        %v2260 = vmul.f32 %v2236, %v2252
        %v2261 = vmul.f32 %v2237, %v2253
        %v2262 = vmul.f32 %v2238, %v2254
        %v2263 = vmul.f32 %v2239, %v2255
        %v2264 = vmul.f32 %v2240, %v2256
        %v2265 = vld [vmem:[%s14] sm:$0x1]
        %v2267 = vlaneseq
        %v2268 = vshrl.u32 %v2267, 7
        %v2269 = vsub.s32 0, %v2268
        %v2270 = vrot.slane %v2265, %v2269
        %v2272 = vmul.f32 %v2257, %v2270
        %v2273 = vmul.f32 %v2258, %v2270
        %v2274 = vmul.f32 %v2259, %v2270
        %v2275 = vmul.f32 %v2260, %v2270
        %v2276 = vmul.f32 %v2261, %v2270
        %v2277 = vmul.f32 %v2262, %v2270
        %v2278 = vmul.f32 %v2263, %v2270
        %v2279 = vmul.f32 %v2264, %v2270
        %v2280 = vld [vmem:[%s15] sm:$0x1]
        %v2282 = vlaneseq
        %v2283 = vshrl.u32 %v2282, 7
        %v2284 = vsub.s32 0, %v2283
        %v2285 = vrot.slane %v2280, %v2284
        %v2287 = vadd.f32 %v2272, %v2285
        %v2288 = vadd.f32 %v2273, %v2285
        %v2289 = vadd.f32 %v2274, %v2285
        %v2290 = vadd.f32 %v2275, %v2285
        %v2291 = vadd.f32 %v2276, %v2285
        %v2292 = vadd.f32 %v2277, %v2285
        %v2293 = vadd.f32 %v2278, %v2285
        %v2294 = vadd.f32 %v2279, %v2285
        %2295 = vst [vmem:[%s574] sm:$0xff] %v2287
        %2296 = vst [vmem:[%s574 + $0x8] sm:$0xff] %v2288
        %2297 = vst [vmem:[%s574 + $0x10] sm:$0xff] %v2289
        %2298 = vst [vmem:[%s574 + $0x18] sm:$0xff] %v2290
        %2299 = vst [vmem:[%s574 + $0x20] sm:$0xff] %v2291
        %2300 = vst [vmem:[%s574 + $0x28] sm:$0xff] %v2292
        %2301 = vst [vmem:[%s574 + $0x30] sm:$0xff] %v2293
        %2302 = vst [vmem:[%s574 + $0x38] sm:$0xff] %v2294
        %s2303 = sand.u32 %s382, 1
        %s2304 = scalar_lea.sflag [#allocation6], %s2303
        %s2305 = sand.u32 %s382, 1
        %s2306 = smul.addr %s2305, 64
        %s2307 = scalar_lea.vmem [#allocation12], %s2306
        // Predicated region
        $region101: #{per_sensor_encoder_tcn_forward.1} parent=83 // pred_check
          %p2308 = pneg %p392
        $region102: #{per_sensor_encoder_tcn_forward.1} parent=83 // pred_check_branch
          %2310 = sbr.rel (%p2308) target = $region104
        $region103: #{per_sensor_encoder_tcn_forward.1} parent=83 // pred_region
          %s2311 = smul.u32 8, %s33
          %s2313 = ssub.s32 1024, 1024
          %2314 = vsyncadd %s2304, %s2313
          %s2315 = smul.addr %s2311, 128
          %s2316 = scalar_lea.hbm %s16, %s2315
          %s2317 = sshll.u32 %s2307, 4
          %s2318 = int_to_ptr.vmem [resolvable:$true] %s2317
          %2323 = dma.vmem_to_hbm [thread:$0]  %s2318, 1024, %s2316, %s2304, 128, 128, 8
        $region104: #{per_sensor_encoder_tcn_forward.1} parent=83 // pred_fallthru
          _
      $region84: #{per_sensor_encoder_tcn_forward.1} parent=5 // pred_fallthru
        _
      %p2324 = scmp.le.s32.totalorder 2, %s28
      // Predicated region
      $region105: #{per_sensor_encoder_tcn_forward.1} parent=5 // pred_check
        %p2325 = pneg %p2324
      $region106: #{per_sensor_encoder_tcn_forward.1} parent=5 // pred_check_branch
        %2327 = sbr.rel (%p2325) target = $region108
      $region107: #{per_sensor_encoder_tcn_forward.1} parent=5 // pred_region
        %s2328 = ssub.s32 %s28, 2
        // Predicated region
        $region109: #{per_sensor_encoder_tcn_forward.1} parent=107 // pred_check
          %p2329 = pneg %p398
        $region110: #{per_sensor_encoder_tcn_forward.1} parent=107 // pred_check_branch
          %2331 = sbr.rel (%p2329) target = $region112
        $region111: #{per_sensor_encoder_tcn_forward.1} parent=107 // pred_region
          %s2332 = sand.u32 %s383, 1
          %s2333 = scalar_lea.sflag [#allocation6], %s2332
          %s2334 = sand.u32 %s383, 1
          %s2335 = smul.addr %s2334, 64
          %s2336 = scalar_lea.vmem [#allocation12], %s2335
          %2337 = dma.done %s2333, 1024
        $region112: #{per_sensor_encoder_tcn_forward.1} parent=107 // pred_fallthru
          _
      $region108: #{per_sensor_encoder_tcn_forward.1} parent=5 // pred_fallthru
        _
    $region6: #{per_sensor_encoder_tcn_forward.1} parent=1 // loop_footer
      %s32 = sadd.s32 1, %s28
    $region7: #{per_sensor_encoder_tcn_forward.1} parent=1 // loop_footer_branch
      %27 = sbr.rel target = $region3
    $region8: #{per_sensor_encoder_tcn_forward.1} parent=1 // loop_exit
      _
    %2338 = vsyncpa [#allocation5], 1
    %s2339 = scalar_lea.sflag [#allocation5], 1
    %2340 = vsyncpa %s2339, 1
    %2341 = vsyncpa [#allocation8], 1
    %2342 = vsyncpa [#allocation11], 1
    %2343 = vsyncpa [#allocation6], 1
    %s2344 = scalar_lea.sflag [#allocation6], 1
    %2345 = vsyncpa %s2344, 1

</llo_original>
